<compile_context>
chip_gen: v6e
topology: v6e:2x2x1
jax: 0.10.0
libtpu: 0.0.40
codegen_flags: <defaults>
</compile_context>

<pallas_src>
import numpy as np
import jax
import jax.numpy as jnp
from jax.experimental import pallas as pl
from jax.experimental.pallas import tpu as pltpu

# ---- model hyper-parameters (small, consistent with the module) ----
D_MODEL = 32
NUM_HEADS = 4
LATENT_DIM = 16
D_FF = 512            # FeedForward default d_ff
SEQ = 8
BATCH = 2
LN_EPS = 1e-5
D_HEAD = D_MODEL // NUM_HEADS
LANE = 128                      # one head per 128-lane block
HP = NUM_HEADS * LANE           # 512 = padded "model" width in head-block layout
BS = BATCH * SEQ                # 16 rows, batch folded into sublanes


# ---------------- erf / GELU (kernel-safe, exact to ~1.5e-7) ----------------
_ERF_P = 0.3275911
_ERF_A1 = 0.254829592
_ERF_A2 = -0.284496736
_ERF_A3 = 1.421413741
_ERF_A4 = -1.453152027
_ERF_A5 = 1.061405429


def _erf_approx(x):
    # Abramowitz & Stegun 7.1.26, max abs error ~1.5e-7 (uses only exp/mul/add/div).
    ax = jnp.abs(x)
    t = 1.0 / (1.0 + _ERF_P * ax)
    poly = t * (_ERF_A1 + t * (_ERF_A2 + t * (_ERF_A3 + t * (_ERF_A4 + t * _ERF_A5))))
    y = 1.0 - poly * jnp.exp(-ax * ax)
    return jnp.where(x >= 0.0, y, -y)


def _gelu_kernel(x):
    # exact (erf-based) GELU, matching F.gelu default
    return 0.5 * x * (1.0 + _erf_approx(x * 0.7071067811865476))


def _gelu_ref(x):
    return 0.5 * x * (1.0 + jax.lax.erf(x / jnp.sqrt(jnp.float32(2.0))))


def _layernorm(x, gamma, beta):
    mu = jnp.mean(x, axis=-1, keepdims=True)
    xc = x - mu
    var = jnp.mean(xc * xc, axis=-1, keepdims=True)
    return xc / jnp.sqrt(var + LN_EPS) * gamma + beta


# ----------------------------- Pallas kernel -----------------------------
def encoder_layer_kernel(
    x_ref,                    # (BS, D)
    bias_ref,                 # (BS, BS)  block-diagonal attention bias (0 / -1e30)
    w_qkvg_ref, b_qkvg_ref,   # (D, 3*HP + 128), (1, 3*HP + 128)   head-blocked q|k|v|latent
    w_mod_ref, b_mod_ref,     # (L, 2*HP), (1, 2*HP)               head-blocked mod_q|mod_k
    wo_ref, bo_ref,           # (HP, D), (1, D)                    zero-row-padded W_o
    w1_ref, b1_ref,           # (D, F), (1, F)
    w2_ref, b2_ref,           # (F, D), (1, D)
    g1_ref, be1_ref, g2_ref, be2_ref,   # (1, D) each
    out_ref,                  # (BS, D)
):
    x = x_ref[...].astype(jnp.float32)                                     # (BS, D)

    # --- MultiHeadLatentAttention: one fused, lane-padded projection matmul ---
    # columns = [ q (4x128) | k (4x128) | v (4x128) | latent_pre (128, first 16 real) ]
    proj = jnp.dot(x, w_qkvg_ref[...], preferred_element_type=jnp.float32) + b_qkvg_ref[...]
    q = proj[:, 0:HP]                       # 128-aligned whole-vreg slices
    k = proj[:, HP:2 * HP]
    v = proj[:, 2 * HP:3 * HP]
    latent = jnp.maximum(proj[:, 3 * HP:3 * HP + LATENT_DIM], 0.0)         # ReLU, (BS, L)

    # fused latent modulations: columns = [ mod_q (4x128) | mod_k (4x128) ]
    z = jnp.dot(latent, w_mod_ref[...], preferred_element_type=jnp.float32) + b_mod_ref[...]
    mod = 1.0 / (1.0 + jnp.exp(-z))          # sigmoid (padded lanes -> 0.5 * q==0 -> 0)
    scale = 1.0 / jnp.sqrt(jnp.float32(D_HEAD))
    q = q * mod[:, 0:HP] * scale
    k = k * mod[:, HP:2 * HP]

    nt = (((1,), (1,)), ((), ()))            # contract last dims: qh @ kh^T without .T
    bias = bias_ref[...]                     # keeps the two batches independent

    # per-head attention, batched over the batch dim via block-diagonal bias.
    head_outs = []
    for h in range(NUM_HEADS):
        c0 = h * LANE
        qh = q[:, c0:c0 + LANE]              # (BS, 128) — whole-vreg, zeros beyond D_HEAD
        kh = k[:, c0:c0 + LANE]
        vh = v[:, c0:c0 + LANE]
        s = jax.lax.dot_general(qh, kh, nt, preferred_element_type=jnp.float32) + bias
        s = s - jnp.max(s, axis=-1, keepdims=True)
        p = jnp.exp(s)
        p = p / jnp.sum(p, axis=-1, keepdims=True)
        head_outs.append(jnp.dot(p, vh, preferred_element_type=jnp.float32))   # (BS, 128)
    attn = jnp.concatenate(head_outs, axis=-1)        # (BS, HP): 128-aligned block placement

    attn_out = jnp.dot(attn, wo_ref[...],
                       preferred_element_type=jnp.float32) + bo_ref[...]       # (BS, D)

    # --- residual + LayerNorm1 (dropout1 == identity in eval mode) ---
    x1 = _layernorm(x + attn_out, g1_ref[...], be1_ref[...])

    # --- FeedForward: gelu(x1 @ W1 + b1) @ W2 + b2 ---
    hff = jnp.dot(x1, w1_ref[...], preferred_element_type=jnp.float32) + b1_ref[...]
    hff = _gelu_kernel(hff)
    ffn = jnp.dot(hff, w2_ref[...], preferred_element_type=jnp.float32) + b2_ref[...]

    # --- residual + LayerNorm2 (dropout2 == identity) ---
    out = _layernorm(x1 + ffn, g2_ref[...], be2_ref[...])
    out_ref[...] = out.astype(out_ref.dtype)


# ----------------------------- wrapper -----------------------------
def _head_block_cols(w):
    """(din, D_MODEL) -> (din, NUM_HEADS*LANE): head h's D_HEAD cols at lanes [h*128, h*128+8)."""
    din = w.shape[0]
    pad = jnp.zeros((din, LANE - D_HEAD), w.dtype)
    blocks = []
    for h in range(NUM_HEADS):
        blocks.append(w[:, h * D_HEAD:(h + 1) * D_HEAD])
        blocks.append(pad)
    return jnp.concatenate(blocks, axis=1)


def _head_block_rows(w):
    """(D_MODEL, dout) -> (NUM_HEADS*LANE, dout): head h's D_HEAD rows at rows [h*128, h*128+8)."""
    dout = w.shape[1]
    pad = jnp.zeros((LANE - D_HEAD, dout), w.dtype)
    blocks = []
    for h in range(NUM_HEADS):
        blocks.append(w[h * D_HEAD:(h + 1) * D_HEAD, :])
        blocks.append(pad)
    return jnp.concatenate(blocks, axis=0)


def _pad_cols(w, width):
    return jnp.concatenate(
        [w, jnp.zeros((w.shape[0], width - w.shape[1]), w.dtype)], axis=1)


def transformer_encoder_layer(x, params):
    B, S, D = x.shape
    assert (B, S, D) == (BATCH, SEQ, D_MODEL)

    # Fuse + lane-pad the projections once in the wrapper (exact: padding is zeros).
    w_qkvg = jnp.concatenate(
        [_head_block_cols(params["wq"]), _head_block_cols(params["wk"]),
         _head_block_cols(params["wv"]), _pad_cols(params["wg"], LANE)], axis=1)  # (D, 3*HP+128)
    b_qkvg = jnp.concatenate(
        [_head_block_cols(params["bq"]), _head_block_cols(params["bk"]),
         _head_block_cols(params["bv"]), _pad_cols(params["bg"], LANE)], axis=1)  # (1, 3*HP+128)
    w_mod = jnp.concatenate(
        [_head_block_cols(params["wmq"]), _head_block_cols(params["wmk"])], axis=1)  # (L, 2*HP)
    b_mod = jnp.concatenate(
        [_head_block_cols(params["bmq"]), _head_block_cols(params["bmk"])], axis=1)  # (1, 2*HP)
    wo_blk = _head_block_rows(params["wo"])                                          # (HP, D)

    # Constant block-diagonal additive mask keeping the folded batches independent.
    rows = np.arange(BS) // SEQ
    attn_bias = jnp.asarray(
        np.where(rows[:, None] == rows[None, :], 0.0, -1e30).astype(np.float32))     # (BS, BS)

    operands = [
        x.reshape(B * S, D),      # fold batch: all dense ops run on 16 sublanes
        attn_bias,
        w_qkvg, b_qkvg, w_mod, b_mod,
        wo_blk, params["bo"],
        params["w1"], params["b1"], params["w2"], params["b2"],
        params["g1"], params["be1"], params["g2"], params["be2"],
    ]

    def full2d(arr):
        return pl.BlockSpec(arr.shape, lambda i: (0, 0))

    out2d = pl.pallas_call(
        encoder_layer_kernel,
        out_shape=jax.ShapeDtypeStruct((B * S, D), x.dtype),
        grid_spec=pltpu.PrefetchScalarGridSpec(
            num_scalar_prefetch=0,
            grid=(1,),   # single grid step: whole layer resident in VMEM (~0.5 MiB)
            in_specs=[full2d(a) for a in operands],
            out_specs=pl.BlockSpec((B * S, D), lambda i: (0, 0)),
        ),
        compiler_params=pltpu.CompilerParams(
            dimension_semantics=("arbitrary",)),
    )(*operands)

    return out2d.reshape(B, S, D)


# ----------------------------- params / reference -----------------------------
def init_params(key):
    keys = iter(jax.random.split(key, 64))

    def lin(din, dout):
        w = jax.random.normal(next(keys), (din, dout), jnp.float32) * 0.05
        b = jax.random.normal(next(keys), (1, dout), jnp.float32) * 0.05
        return w, b

    p = {}
    p["wq"], p["bq"] = lin(D_MODEL, D_MODEL)
    p["wk"], p["bk"] = lin(D_MODEL, D_MODEL)
    p["wv"], p["bv"] = lin(D_MODEL, D_MODEL)
    p["wo"], p["bo"] = lin(D_MODEL, D_MODEL)
    p["wg"], p["bg"] = lin(D_MODEL, LATENT_DIM)       # latent_generator Linear
    p["wmq"], p["bmq"] = lin(LATENT_DIM, D_MODEL)
    p["wmk"], p["bmk"] = lin(LATENT_DIM, D_MODEL)
    p["w1"], p["b1"] = lin(D_MODEL, D_FF)
    p["w2"], p["b2"] = lin(D_FF, D_MODEL)
    p["g1"] = 1.0 + 0.05 * jax.random.normal(next(keys), (1, D_MODEL), jnp.float32)
    p["be1"] = 0.05 * jax.random.normal(next(keys), (1, D_MODEL), jnp.float32)
    p["g2"] = 1.0 + 0.05 * jax.random.normal(next(keys), (1, D_MODEL), jnp.float32)
    p["be2"] = 0.05 * jax.random.normal(next(keys), (1, D_MODEL), jnp.float32)
    return p


def reference(x, p):
    def linear(t, w, b):
        return t @ w + b

    def ln(t, g, b):
        mu = t.mean(-1, keepdims=True)
        var = ((t - mu) ** 2).mean(-1, keepdims=True)
        return (t - mu) / jnp.sqrt(var + LN_EPS) * g + b

    latent = jax.nn.relu(linear(x, p["wg"], p["bg"]))
    mod_q = jax.nn.sigmoid(linear(latent, p["wmq"], p["bmq"]))
    mod_k = jax.nn.sigmoid(linear(latent, p["wmk"], p["bmk"]))
    q = linear(x, p["wq"], p["bq"]) * mod_q
    k = linear(x, p["wk"], p["bk"]) * mod_k
    v = linear(x, p["wv"], p["bv"])
    B, S, D = x.shape
    H, Dh = NUM_HEADS, D_MODEL // NUM_HEADS
    qh = q.reshape(B, S, H, Dh).transpose(0, 2, 1, 3)
    kh = k.reshape(B, S, H, Dh).transpose(0, 2, 1, 3)
    vh = v.reshape(B, S, H, Dh).transpose(0, 2, 1, 3)
    scores = qh @ kh.transpose(0, 1, 3, 2) / jnp.sqrt(jnp.float32(Dh))
    attnw = jax.nn.softmax(scores, axis=-1)
    a = (attnw @ vh).transpose(0, 2, 1, 3).reshape(B, S, D)
    attn_out = linear(a, p["wo"], p["bo"])
    x1 = ln(x + attn_out, p["g1"], p["be1"])
    hff = _gelu_ref(linear(x1, p["w1"], p["b1"]))
    ffn = linear(hff, p["w2"], p["b2"])
    return ln(x1 + ffn, p["g2"], p["be2"])


if __name__ == "__main__":
    key = jax.random.PRNGKey(0)
    kx, kp = jax.random.split(key)
    x = jax.random.normal(kx, (BATCH, SEQ, D_MODEL), jnp.float32)
    params = init_params(kp)

    out = jax.block_until_ready(transformer_encoder_layer(x, params))

    ref = jax.block_until_ready(reference(x, params))
    np.testing.assert_allclose(np.asarray(out), np.asarray(ref), rtol=1e-4, atol=1e-4)

    print("KERNEL_OK")
</pallas_src>

<mosaic_0001>
module attributes {stable_mosaic.version = 11 : i64} {
  func.func @encoder_layer_kernel(%arg0: i32, %arg1: memref<16x32xf32, #tpu.memory_space<vmem>>, %arg2: memref<16x16xf32, #tpu.memory_space<vmem>>, %arg3: memref<32x1664xf32, #tpu.memory_space<vmem>>, %arg4: memref<1x1664xf32, #tpu.memory_space<vmem>>, %arg5: memref<16x1024xf32, #tpu.memory_space<vmem>>, %arg6: memref<1x1024xf32, #tpu.memory_space<vmem>>, %arg7: memref<512x32xf32, #tpu.memory_space<vmem>>, %arg8: memref<1x32xf32, #tpu.memory_space<vmem>>, %arg9: memref<32x512xf32, #tpu.memory_space<vmem>>, %arg10: memref<1x512xf32, #tpu.memory_space<vmem>>, %arg11: memref<512x32xf32, #tpu.memory_space<vmem>>, %arg12: memref<1x32xf32, #tpu.memory_space<vmem>>, %arg13: memref<1x32xf32, #tpu.memory_space<vmem>>, %arg14: memref<1x32xf32, #tpu.memory_space<vmem>>, %arg15: memref<1x32xf32, #tpu.memory_space<vmem>>, %arg16: memref<1x32xf32, #tpu.memory_space<vmem>>, %arg17: memref<16x32xf32, #tpu.memory_space<vmem>>) attributes {dimension_semantics = [#tpu.dimension_semantics<arbitrary>], iteration_bounds = array<i64: 1>, scalar_prefetch = 0 : i64, scratch_operands = 0 : i64, tpu.core_type = #tpu.core_type<tc>, window_params = [{pipeline_mode = #tpu.pipeline_mode<synchronous>, transform_indices = @transform_0, window_bounds = array<i64: 16, 32>}, {pipeline_mode = #tpu.pipeline_mode<synchronous>, transform_indices = @transform_1, window_bounds = array<i64: 16, 16>}, {pipeline_mode = #tpu.pipeline_mode<synchronous>, transform_indices = @transform_2, window_bounds = array<i64: 32, 1664>}, {pipeline_mode = #tpu.pipeline_mode<synchronous>, transform_indices = @transform_3, window_bounds = array<i64: 1, 1664>}, {pipeline_mode = #tpu.pipeline_mode<synchronous>, transform_indices = @transform_4, window_bounds = array<i64: 16, 1024>}, {pipeline_mode = #tpu.pipeline_mode<synchronous>, transform_indices = @transform_5, window_bounds = array<i64: 1, 1024>}, {pipeline_mode = #tpu.pipeline_mode<synchronous>, transform_indices = @transform_6, window_bounds = array<i64: 512, 32>}, {pipeline_mode = #tpu.pipeline_mode<synchronous>, transform_indices = @transform_7, window_bounds = array<i64: 1, 32>}, {pipeline_mode = #tpu.pipeline_mode<synchronous>, transform_indices = @transform_8, window_bounds = array<i64: 32, 512>}, {pipeline_mode = #tpu.pipeline_mode<synchronous>, transform_indices = @transform_9, window_bounds = array<i64: 1, 512>}, {pipeline_mode = #tpu.pipeline_mode<synchronous>, transform_indices = @transform_10, window_bounds = array<i64: 512, 32>}, {pipeline_mode = #tpu.pipeline_mode<synchronous>, transform_indices = @transform_11, window_bounds = array<i64: 1, 32>}, {pipeline_mode = #tpu.pipeline_mode<synchronous>, transform_indices = @transform_12, window_bounds = array<i64: 1, 32>}, {pipeline_mode = #tpu.pipeline_mode<synchronous>, transform_indices = @transform_13, window_bounds = array<i64: 1, 32>}, {pipeline_mode = #tpu.pipeline_mode<synchronous>, transform_indices = @transform_14, window_bounds = array<i64: 1, 32>}, {pipeline_mode = #tpu.pipeline_mode<synchronous>, transform_indices = @transform_15, window_bounds = array<i64: 1, 32>}, {pipeline_mode = #tpu.pipeline_mode<synchronous>, transform_indices = @transform_16, window_bounds = array<i64: 16, 32>}]} {
    %c0 = arith.constant 0 : index
    %c0_0 = arith.constant 0 : index
    %0 = vector.load %arg1[%c0, %c0_0] : memref<16x32xf32, #tpu.memory_space<vmem>>, vector<16x32xf32>
    %c0_1 = arith.constant 0 : index
    %c0_2 = arith.constant 0 : index
    %1 = vector.load %arg3[%c0_1, %c0_2] : memref<32x1664xf32, #tpu.memory_space<vmem>>, vector<32x1664xf32>
    %cst = arith.constant dense<0.000000e+00> : vector<16x1664xf32>
    %2 = tpu.matmul %0, %1, %cst {dimension_numbers = #tpu.dot_dimension_numbers<[1], [0], [0], [1], [0, 0, 1, 1], [], []>} : vector<16x32xf32>, vector<32x1664xf32>, vector<16x1664xf32> -> vector<16x1664xf32>
    %c0_3 = arith.constant 0 : index
    %c0_4 = arith.constant 0 : index
    %3 = vector.load %arg4[%c0_3, %c0_4] : memref<1x1664xf32, #tpu.memory_space<vmem>>, vector<1x1664xf32>
    %4 = vector.broadcast %3 : vector<1x1664xf32> to vector<16x1664xf32>
    %5 = arith.addf %2, %4 : vector<16x1664xf32>
    %6 = vector.extract_strided_slice %5 {offsets = [0, 0], sizes = [16, 512], strides = [1, 1]} : vector<16x1664xf32> to vector<16x512xf32>
    %7 = vector.extract_strided_slice %5 {offsets = [0, 512], sizes = [16, 512], strides = [1, 1]} : vector<16x1664xf32> to vector<16x512xf32>
    %8 = vector.extract_strided_slice %5 {offsets = [0, 1024], sizes = [16, 512], strides = [1, 1]} : vector<16x1664xf32> to vector<16x512xf32>
    %9 = vector.extract_strided_slice %5 {offsets = [0, 1536], sizes = [16, 16], strides = [1, 1]} : vector<16x1664xf32> to vector<16x16xf32>
    %cst_5 = arith.constant 0.000000e+00 : f32
    %10 = vector.broadcast %cst_5 : f32 to vector<16x16xf32>
    %11 = arith.maximumf %9, %10 : vector<16x16xf32>
    %c0_6 = arith.constant 0 : index
    %c0_7 = arith.constant 0 : index
    %12 = vector.load %arg5[%c0_6, %c0_7] : memref<16x1024xf32, #tpu.memory_space<vmem>>, vector<16x1024xf32>
    %cst_8 = arith.constant dense<0.000000e+00> : vector<16x1024xf32>
    %13 = tpu.matmul %11, %12, %cst_8 {dimension_numbers = #tpu.dot_dimension_numbers<[1], [0], [0], [1], [0, 0, 1, 1], [], []>} : vector<16x16xf32>, vector<16x1024xf32>, vector<16x1024xf32> -> vector<16x1024xf32>
    %c0_9 = arith.constant 0 : index
    %c0_10 = arith.constant 0 : index
    %14 = vector.load %arg6[%c0_9, %c0_10] : memref<1x1024xf32, #tpu.memory_space<vmem>>, vector<1x1024xf32>
    %15 = vector.broadcast %14 : vector<1x1024xf32> to vector<16x1024xf32>
    %16 = arith.addf %13, %15 : vector<16x1024xf32>
    %cst_11 = arith.constant 0.000000e+00 : f32
    %17 = vector.broadcast %cst_11 : f32 to vector<16x1024xf32>
    %18 = arith.subf %17, %16 : vector<16x1024xf32>
    %19 = math.exp %18 : vector<16x1024xf32>
    %cst_12 = arith.constant 1.000000e+00 : f32
    %20 = vector.broadcast %cst_12 : f32 to vector<16x1024xf32>
    %21 = arith.addf %20, %19 : vector<16x1024xf32>
    %cst_13 = arith.constant 1.000000e+00 : f32
    %22 = vector.broadcast %cst_13 : f32 to vector<16x1024xf32>
    %23 = arith.divf %22, %21 : vector<16x1024xf32>
    %cst_14 = arith.constant 8.000000e+00 : f32
    %24 = math.sqrt %cst_14 : f32
    %cst_15 = arith.constant 1.000000e+00 : f32
    %25 = arith.divf %cst_15, %24 : f32
    %26 = vector.extract_strided_slice %23 {offsets = [0, 0], sizes = [16, 512], strides = [1, 1]} : vector<16x1024xf32> to vector<16x512xf32>
    %27 = arith.mulf %6, %26 : vector<16x512xf32>
    %28 = vector.broadcast %25 : f32 to vector<16x512xf32>
    %29 = arith.mulf %27, %28 : vector<16x512xf32>
    %30 = vector.extract_strided_slice %23 {offsets = [0, 512], sizes = [16, 512], strides = [1, 1]} : vector<16x1024xf32> to vector<16x512xf32>
    %31 = arith.mulf %7, %30 : vector<16x512xf32>
    %c0_16 = arith.constant 0 : index
    %c0_17 = arith.constant 0 : index
    %32 = vector.load %arg2[%c0_16, %c0_17] : memref<16x16xf32, #tpu.memory_space<vmem>>, vector<16x16xf32>
    %33 = vector.extract_strided_slice %29 {offsets = [0, 0], sizes = [16, 128], strides = [1, 1]} : vector<16x512xf32> to vector<16x128xf32>
    %34 = vector.extract_strided_slice %31 {offsets = [0, 0], sizes = [16, 128], strides = [1, 1]} : vector<16x512xf32> to vector<16x128xf32>
    %35 = vector.extract_strided_slice %8 {offsets = [0, 0], sizes = [16, 128], strides = [1, 1]} : vector<16x512xf32> to vector<16x128xf32>
    %cst_18 = arith.constant dense<0.000000e+00> : vector<16x16xf32>
    %36 = tpu.matmul %33, %34, %cst_18 {dimension_numbers = #tpu.dot_dimension_numbers<[1], [1], [0], [0], [0, 0, 1, 0], [], []>} : vector<16x128xf32>, vector<16x128xf32>, vector<16x16xf32> -> vector<16x16xf32>
    %37 = arith.addf %36, %32 : vector<16x16xf32>
    %cst_19 = arith.constant dense<0xFF800000> : vector<16xf32>
    %38 = vector.multi_reduction <maximumf>, %37, %cst_19 [1] : vector<16x16xf32> to vector<16xf32>
    %39 = vector.shape_cast %38 : vector<16xf32> to vector<16x1xf32>
    %40 = vector.broadcast %39 : vector<16x1xf32> to vector<16x16xf32>
    %41 = arith.subf %37, %40 : vector<16x16xf32>
    %42 = math.exp %41 : vector<16x16xf32>
    %cst_20 = arith.constant dense<0.000000e+00> : vector<16xf32>
    %43 = vector.multi_reduction <add>, %42, %cst_20 [1] : vector<16x16xf32> to vector<16xf32>
    %44 = vector.shape_cast %43 : vector<16xf32> to vector<16x1xf32>
    %45 = vector.broadcast %44 : vector<16x1xf32> to vector<16x16xf32>
    %46 = arith.divf %42, %45 : vector<16x16xf32>
    %cst_21 = arith.constant dense<0.000000e+00> : vector<16x128xf32>
    %47 = tpu.matmul %46, %35, %cst_21 {dimension_numbers = #tpu.dot_dimension_numbers<[1], [0], [0], [1], [0, 0, 1, 1], [], []>} : vector<16x16xf32>, vector<16x128xf32>, vector<16x128xf32> -> vector<16x128xf32>
    %48 = vector.extract_strided_slice %29 {offsets = [0, 128], sizes = [16, 128], strides = [1, 1]} : vector<16x512xf32> to vector<16x128xf32>
    %49 = vector.extract_strided_slice %31 {offsets = [0, 128], sizes = [16, 128], strides = [1, 1]} : vector<16x512xf32> to vector<16x128xf32>
    %50 = vector.extract_strided_slice %8 {offsets = [0, 128], sizes = [16, 128], strides = [1, 1]} : vector<16x512xf32> to vector<16x128xf32>
    %cst_22 = arith.constant dense<0.000000e+00> : vector<16x16xf32>
    %51 = tpu.matmul %48, %49, %cst_22 {dimension_numbers = #tpu.dot_dimension_numbers<[1], [1], [0], [0], [0, 0, 1, 0], [], []>} : vector<16x128xf32>, vector<16x128xf32>, vector<16x16xf32> -> vector<16x16xf32>
    %52 = arith.addf %51, %32 : vector<16x16xf32>
    %cst_23 = arith.constant dense<0xFF800000> : vector<16xf32>
    %53 = vector.multi_reduction <maximumf>, %52, %cst_23 [1] : vector<16x16xf32> to vector<16xf32>
    %54 = vector.shape_cast %53 : vector<16xf32> to vector<16x1xf32>
    %55 = vector.broadcast %54 : vector<16x1xf32> to vector<16x16xf32>
    %56 = arith.subf %52, %55 : vector<16x16xf32>
    %57 = math.exp %56 : vector<16x16xf32>
    %cst_24 = arith.constant dense<0.000000e+00> : vector<16xf32>
    %58 = vector.multi_reduction <add>, %57, %cst_24 [1] : vector<16x16xf32> to vector<16xf32>
    %59 = vector.shape_cast %58 : vector<16xf32> to vector<16x1xf32>
    %60 = vector.broadcast %59 : vector<16x1xf32> to vector<16x16xf32>
    %61 = arith.divf %57, %60 : vector<16x16xf32>
    %cst_25 = arith.constant dense<0.000000e+00> : vector<16x128xf32>
    %62 = tpu.matmul %61, %50, %cst_25 {dimension_numbers = #tpu.dot_dimension_numbers<[1], [0], [0], [1], [0, 0, 1, 1], [], []>} : vector<16x16xf32>, vector<16x128xf32>, vector<16x128xf32> -> vector<16x128xf32>
    %63 = vector.extract_strided_slice %29 {offsets = [0, 256], sizes = [16, 128], strides = [1, 1]} : vector<16x512xf32> to vector<16x128xf32>
    %64 = vector.extract_strided_slice %31 {offsets = [0, 256], sizes = [16, 128], strides = [1, 1]} : vector<16x512xf32> to vector<16x128xf32>
    %65 = vector.extract_strided_slice %8 {offsets = [0, 256], sizes = [16, 128], strides = [1, 1]} : vector<16x512xf32> to vector<16x128xf32>
    %cst_26 = arith.constant dense<0.000000e+00> : vector<16x16xf32>
    %66 = tpu.matmul %63, %64, %cst_26 {dimension_numbers = #tpu.dot_dimension_numbers<[1], [1], [0], [0], [0, 0, 1, 0], [], []>} : vector<16x128xf32>, vector<16x128xf32>, vector<16x16xf32> -> vector<16x16xf32>
    %67 = arith.addf %66, %32 : vector<16x16xf32>
    %cst_27 = arith.constant dense<0xFF800000> : vector<16xf32>
    %68 = vector.multi_reduction <maximumf>, %67, %cst_27 [1] : vector<16x16xf32> to vector<16xf32>
    %69 = vector.shape_cast %68 : vector<16xf32> to vector<16x1xf32>
    %70 = vector.broadcast %69 : vector<16x1xf32> to vector<16x16xf32>
    %71 = arith.subf %67, %70 : vector<16x16xf32>
    %72 = math.exp %71 : vector<16x16xf32>
    %cst_28 = arith.constant dense<0.000000e+00> : vector<16xf32>
    %73 = vector.multi_reduction <add>, %72, %cst_28 [1] : vector<16x16xf32> to vector<16xf32>
    %74 = vector.shape_cast %73 : vector<16xf32> to vector<16x1xf32>
    %75 = vector.broadcast %74 : vector<16x1xf32> to vector<16x16xf32>
    %76 = arith.divf %72, %75 : vector<16x16xf32>
    %cst_29 = arith.constant dense<0.000000e+00> : vector<16x128xf32>
    %77 = tpu.matmul %76, %65, %cst_29 {dimension_numbers = #tpu.dot_dimension_numbers<[1], [0], [0], [1], [0, 0, 1, 1], [], []>} : vector<16x16xf32>, vector<16x128xf32>, vector<16x128xf32> -> vector<16x128xf32>
    %78 = vector.extract_strided_slice %29 {offsets = [0, 384], sizes = [16, 128], strides = [1, 1]} : vector<16x512xf32> to vector<16x128xf32>
    %79 = vector.extract_strided_slice %31 {offsets = [0, 384], sizes = [16, 128], strides = [1, 1]} : vector<16x512xf32> to vector<16x128xf32>
    %80 = vector.extract_strided_slice %8 {offsets = [0, 384], sizes = [16, 128], strides = [1, 1]} : vector<16x512xf32> to vector<16x128xf32>
    %cst_30 = arith.constant dense<0.000000e+00> : vector<16x16xf32>
    %81 = tpu.matmul %78, %79, %cst_30 {dimension_numbers = #tpu.dot_dimension_numbers<[1], [1], [0], [0], [0, 0, 1, 0], [], []>} : vector<16x128xf32>, vector<16x128xf32>, vector<16x16xf32> -> vector<16x16xf32>
    %82 = arith.addf %81, %32 : vector<16x16xf32>
    %cst_31 = arith.constant dense<0xFF800000> : vector<16xf32>
    %83 = vector.multi_reduction <maximumf>, %82, %cst_31 [1] : vector<16x16xf32> to vector<16xf32>
    %84 = vector.shape_cast %83 : vector<16xf32> to vector<16x1xf32>
    %85 = vector.broadcast %84 : vector<16x1xf32> to vector<16x16xf32>
    %86 = arith.subf %82, %85 : vector<16x16xf32>
    %87 = math.exp %86 : vector<16x16xf32>
    %cst_32 = arith.constant dense<0.000000e+00> : vector<16xf32>
    %88 = vector.multi_reduction <add>, %87, %cst_32 [1] : vector<16x16xf32> to vector<16xf32>
    %89 = vector.shape_cast %88 : vector<16xf32> to vector<16x1xf32>
    %90 = vector.broadcast %89 : vector<16x1xf32> to vector<16x16xf32>
    %91 = arith.divf %87, %90 : vector<16x16xf32>
    %cst_33 = arith.constant dense<0.000000e+00> : vector<16x128xf32>
    %92 = tpu.matmul %91, %80, %cst_33 {dimension_numbers = #tpu.dot_dimension_numbers<[1], [0], [0], [1], [0, 0, 1, 1], [], []>} : vector<16x16xf32>, vector<16x128xf32>, vector<16x128xf32> -> vector<16x128xf32>
    %93 = tpu.concatenate %47, %62, %77, %92 in 1 : vector<16x128xf32>, vector<16x128xf32>, vector<16x128xf32>, vector<16x128xf32> -> vector<16x512xf32>
    %c0_34 = arith.constant 0 : index
    %c0_35 = arith.constant 0 : index
    %94 = vector.load %arg7[%c0_34, %c0_35] : memref<512x32xf32, #tpu.memory_space<vmem>>, vector<512x32xf32>
    %cst_36 = arith.constant dense<0.000000e+00> : vector<16x32xf32>
    %95 = tpu.matmul %93, %94, %cst_36 {dimension_numbers = #tpu.dot_dimension_numbers<[1], [0], [0], [1], [0, 0, 1, 1], [], []>} : vector<16x512xf32>, vector<512x32xf32>, vector<16x32xf32> -> vector<16x32xf32>
    %c0_37 = arith.constant 0 : index
    %c0_38 = arith.constant 0 : index
    %96 = vector.load %arg8[%c0_37, %c0_38] : memref<1x32xf32, #tpu.memory_space<vmem>>, vector<1x32xf32>
    %97 = vector.broadcast %96 : vector<1x32xf32> to vector<16x32xf32>
    %98 = arith.addf %95, %97 : vector<16x32xf32>
    %99 = arith.addf %0, %98 : vector<16x32xf32>
    %c0_39 = arith.constant 0 : index
    %c0_40 = arith.constant 0 : index
    %100 = vector.load %arg13[%c0_39, %c0_40] : memref<1x32xf32, #tpu.memory_space<vmem>>, vector<1x32xf32>
    %c0_41 = arith.constant 0 : index
    %c0_42 = arith.constant 0 : index
    %101 = vector.load %arg14[%c0_41, %c0_42] : memref<1x32xf32, #tpu.memory_space<vmem>>, vector<1x32xf32>
    %cst_43 = arith.constant dense<0.000000e+00> : vector<16xf32>
    %102 = vector.multi_reduction <add>, %99, %cst_43 [1] : vector<16x32xf32> to vector<16xf32>
    %103 = vector.shape_cast %102 : vector<16xf32> to vector<16x1xf32>
    %cst_44 = arith.constant 3.200000e+01 : f32
    %104 = vector.broadcast %cst_44 : f32 to vector<16x1xf32>
    %105 = arith.divf %103, %104 : vector<16x1xf32>
    %106 = vector.broadcast %105 : vector<16x1xf32> to vector<16x32xf32>
    %107 = arith.subf %99, %106 : vector<16x32xf32>
    %108 = arith.mulf %107, %107 : vector<16x32xf32>
    %cst_45 = arith.constant dense<0.000000e+00> : vector<16xf32>
    %109 = vector.multi_reduction <add>, %108, %cst_45 [1] : vector<16x32xf32> to vector<16xf32>
    %110 = vector.shape_cast %109 : vector<16xf32> to vector<16x1xf32>
    %cst_46 = arith.constant 3.200000e+01 : f32
    %111 = vector.broadcast %cst_46 : f32 to vector<16x1xf32>
    %112 = arith.divf %110, %111 : vector<16x1xf32>
    %cst_47 = arith.constant 9.99999974E-6 : f32
    %113 = vector.broadcast %cst_47 : f32 to vector<16x1xf32>
    %114 = arith.addf %112, %113 : vector<16x1xf32>
    %115 = math.sqrt %114 : vector<16x1xf32>
    %116 = vector.broadcast %115 : vector<16x1xf32> to vector<16x32xf32>
    %117 = arith.divf %107, %116 : vector<16x32xf32>
    %118 = vector.broadcast %100 : vector<1x32xf32> to vector<16x32xf32>
    %119 = arith.mulf %117, %118 : vector<16x32xf32>
    %120 = vector.broadcast %101 : vector<1x32xf32> to vector<16x32xf32>
    %121 = arith.addf %119, %120 : vector<16x32xf32>
    %c0_48 = arith.constant 0 : index
    %c0_49 = arith.constant 0 : index
    %122 = vector.load %arg9[%c0_48, %c0_49] : memref<32x512xf32, #tpu.memory_space<vmem>>, vector<32x512xf32>
    %cst_50 = arith.constant dense<0.000000e+00> : vector<16x512xf32>
    %123 = tpu.matmul %121, %122, %cst_50 {dimension_numbers = #tpu.dot_dimension_numbers<[1], [0], [0], [1], [0, 0, 1, 1], [], []>} : vector<16x32xf32>, vector<32x512xf32>, vector<16x512xf32> -> vector<16x512xf32>
    %c0_51 = arith.constant 0 : index
    %c0_52 = arith.constant 0 : index
    %124 = vector.load %arg10[%c0_51, %c0_52] : memref<1x512xf32, #tpu.memory_space<vmem>>, vector<1x512xf32>
    %125 = vector.broadcast %124 : vector<1x512xf32> to vector<16x512xf32>
    %126 = arith.addf %123, %125 : vector<16x512xf32>
    %cst_53 = arith.constant 5.000000e-01 : f32
    %127 = vector.broadcast %cst_53 : f32 to vector<16x512xf32>
    %128 = arith.mulf %127, %126 : vector<16x512xf32>
    %cst_54 = arith.constant 0.707106769 : f32
    %129 = vector.broadcast %cst_54 : f32 to vector<16x512xf32>
    %130 = arith.mulf %126, %129 : vector<16x512xf32>
    %131 = math.absf %130 : vector<16x512xf32>
    %cst_55 = arith.constant 0.327591091 : f32
    %132 = vector.broadcast %cst_55 : f32 to vector<16x512xf32>
    %133 = arith.mulf %132, %131 : vector<16x512xf32>
    %cst_56 = arith.constant 1.000000e+00 : f32
    %134 = vector.broadcast %cst_56 : f32 to vector<16x512xf32>
    %135 = arith.addf %134, %133 : vector<16x512xf32>
    %cst_57 = arith.constant 1.000000e+00 : f32
    %136 = vector.broadcast %cst_57 : f32 to vector<16x512xf32>
    %137 = arith.divf %136, %135 : vector<16x512xf32>
    %cst_58 = arith.constant 1.06140542 : f32
    %138 = vector.broadcast %cst_58 : f32 to vector<16x512xf32>
    %139 = arith.mulf %137, %138 : vector<16x512xf32>
    %cst_59 = arith.constant -1.45315206 : f32
    %140 = vector.broadcast %cst_59 : f32 to vector<16x512xf32>
    %141 = arith.addf %140, %139 : vector<16x512xf32>
    %142 = arith.mulf %137, %141 : vector<16x512xf32>
    %cst_60 = arith.constant 1.42141378 : f32
    %143 = vector.broadcast %cst_60 : f32 to vector<16x512xf32>
    %144 = arith.addf %143, %142 : vector<16x512xf32>
    %145 = arith.mulf %137, %144 : vector<16x512xf32>
    %cst_61 = arith.constant -0.284496725 : f32
    %146 = vector.broadcast %cst_61 : f32 to vector<16x512xf32>
    %147 = arith.addf %146, %145 : vector<16x512xf32>
    %148 = arith.mulf %137, %147 : vector<16x512xf32>
    %cst_62 = arith.constant 0.254829586 : f32
    %149 = vector.broadcast %cst_62 : f32 to vector<16x512xf32>
    %150 = arith.addf %149, %148 : vector<16x512xf32>
    %151 = arith.mulf %137, %150 : vector<16x512xf32>
    %cst_63 = arith.constant 0.000000e+00 : f32
    %152 = vector.broadcast %cst_63 : f32 to vector<16x512xf32>
    %153 = arith.subf %152, %131 : vector<16x512xf32>
    %154 = arith.mulf %153, %131 : vector<16x512xf32>
    %155 = math.exp %154 : vector<16x512xf32>
    %156 = arith.mulf %151, %155 : vector<16x512xf32>
    %cst_64 = arith.constant 1.000000e+00 : f32
    %157 = vector.broadcast %cst_64 : f32 to vector<16x512xf32>
    %158 = arith.subf %157, %156 : vector<16x512xf32>
    %cst_65 = arith.constant 0.000000e+00 : f32
    %159 = vector.broadcast %cst_65 : f32 to vector<16x512xf32>
    %160 = arith.cmpf oge, %130, %159 : vector<16x512xf32>
    %cst_66 = arith.constant 0.000000e+00 : f32
    %161 = vector.broadcast %cst_66 : f32 to vector<16x512xf32>
    %162 = arith.subf %161, %158 : vector<16x512xf32>
    %163 = arith.select %160, %158, %162 : vector<16x512xi1>, vector<16x512xf32>
    %cst_67 = arith.constant 1.000000e+00 : f32
    %164 = vector.broadcast %cst_67 : f32 to vector<16x512xf32>
    %165 = arith.addf %164, %163 : vector<16x512xf32>
    %166 = arith.mulf %128, %165 : vector<16x512xf32>
    %c0_68 = arith.constant 0 : index
    %c0_69 = arith.constant 0 : index
    %167 = vector.load %arg11[%c0_68, %c0_69] : memref<512x32xf32, #tpu.memory_space<vmem>>, vector<512x32xf32>
    %cst_70 = arith.constant dense<0.000000e+00> : vector<16x32xf32>
    %168 = tpu.matmul %166, %167, %cst_70 {dimension_numbers = #tpu.dot_dimension_numbers<[1], [0], [0], [1], [0, 0, 1, 1], [], []>} : vector<16x512xf32>, vector<512x32xf32>, vector<16x32xf32> -> vector<16x32xf32>
    %c0_71 = arith.constant 0 : index
    %c0_72 = arith.constant 0 : index
    %169 = vector.load %arg12[%c0_71, %c0_72] : memref<1x32xf32, #tpu.memory_space<vmem>>, vector<1x32xf32>
    %170 = vector.broadcast %169 : vector<1x32xf32> to vector<16x32xf32>
    %171 = arith.addf %168, %170 : vector<16x32xf32>
    %172 = arith.addf %121, %171 : vector<16x32xf32>
    %c0_73 = arith.constant 0 : index
    %c0_74 = arith.constant 0 : index
    %173 = vector.load %arg15[%c0_73, %c0_74] : memref<1x32xf32, #tpu.memory_space<vmem>>, vector<1x32xf32>
    %c0_75 = arith.constant 0 : index
    %c0_76 = arith.constant 0 : index
    %174 = vector.load %arg16[%c0_75, %c0_76] : memref<1x32xf32, #tpu.memory_space<vmem>>, vector<1x32xf32>
    %cst_77 = arith.constant dense<0.000000e+00> : vector<16xf32>
    %175 = vector.multi_reduction <add>, %172, %cst_77 [1] : vector<16x32xf32> to vector<16xf32>
    %176 = vector.shape_cast %175 : vector<16xf32> to vector<16x1xf32>
    %cst_78 = arith.constant 3.200000e+01 : f32
    %177 = vector.broadcast %cst_78 : f32 to vector<16x1xf32>
    %178 = arith.divf %176, %177 : vector<16x1xf32>
    %179 = vector.broadcast %178 : vector<16x1xf32> to vector<16x32xf32>
    %180 = arith.subf %172, %179 : vector<16x32xf32>
    %181 = arith.mulf %180, %180 : vector<16x32xf32>
    %cst_79 = arith.constant dense<0.000000e+00> : vector<16xf32>
    %182 = vector.multi_reduction <add>, %181, %cst_79 [1] : vector<16x32xf32> to vector<16xf32>
    %183 = vector.shape_cast %182 : vector<16xf32> to vector<16x1xf32>
    %cst_80 = arith.constant 3.200000e+01 : f32
    %184 = vector.broadcast %cst_80 : f32 to vector<16x1xf32>
    %185 = arith.divf %183, %184 : vector<16x1xf32>
    %cst_81 = arith.constant 9.99999974E-6 : f32
    %186 = vector.broadcast %cst_81 : f32 to vector<16x1xf32>
    %187 = arith.addf %185, %186 : vector<16x1xf32>
    %188 = math.sqrt %187 : vector<16x1xf32>
    %189 = vector.broadcast %188 : vector<16x1xf32> to vector<16x32xf32>
    %190 = arith.divf %180, %189 : vector<16x32xf32>
    %191 = vector.broadcast %173 : vector<1x32xf32> to vector<16x32xf32>
    %192 = arith.mulf %190, %191 : vector<16x32xf32>
    %193 = vector.broadcast %174 : vector<1x32xf32> to vector<16x32xf32>
    %194 = arith.addf %192, %193 : vector<16x32xf32>
    %c0_82 = arith.constant 0 : index
    %c0_83 = arith.constant 0 : index
    %195 = vector.load %arg17[%c0_82, %c0_83] : memref<16x32xf32, #tpu.memory_space<vmem>>, vector<16x32xf32>
    tpu.vector_store %arg17[%c0_82, %c0_83], %194 {strides = array<i32>} : memref<16x32xf32, #tpu.memory_space<vmem>>, vector<16x32xf32>,
    return
  }
  func.func @transform_0(%arg0: i32) -> (i32, i32) {
    %c0_i32 = arith.constant 0 : i32
    %c0_i32_0 = arith.constant 0 : i32
    %c0_i32_1 = arith.constant 0 : i32
    return %c0_i32, %c0_i32_0 : i32, i32
  }
  func.func @transform_1(%arg0: i32) -> (i32, i32) {
    %c0_i32 = arith.constant 0 : i32
    %c0_i32_0 = arith.constant 0 : i32
    %c0_i32_1 = arith.constant 0 : i32
    return %c0_i32, %c0_i32_0 : i32, i32
  }
  func.func @transform_2(%arg0: i32) -> (i32, i32) {
    %c0_i32 = arith.constant 0 : i32
    %c0_i32_0 = arith.constant 0 : i32
    %c0_i32_1 = arith.constant 0 : i32
    return %c0_i32, %c0_i32_0 : i32, i32
  }
  func.func @transform_3(%arg0: i32) -> (i32, i32) {
    %c0_i32 = arith.constant 0 : i32
    %c0_i32_0 = arith.constant 0 : i32
    %c0_i32_1 = arith.constant 0 : i32
    return %c0_i32, %c0_i32_0 : i32, i32
  }
  func.func @transform_4(%arg0: i32) -> (i32, i32) {
    %c0_i32 = arith.constant 0 : i32
    %c0_i32_0 = arith.constant 0 : i32
    %c0_i32_1 = arith.constant 0 : i32
    return %c0_i32, %c0_i32_0 : i32, i32
  }
  func.func @transform_5(%arg0: i32) -> (i32, i32) {
    %c0_i32 = arith.constant 0 : i32
    %c0_i32_0 = arith.constant 0 : i32
    %c0_i32_1 = arith.constant 0 : i32
    return %c0_i32, %c0_i32_0 : i32, i32
  }
  func.func @transform_6(%arg0: i32) -> (i32, i32) {
    %c0_i32 = arith.constant 0 : i32
    %c0_i32_0 = arith.constant 0 : i32
    %c0_i32_1 = arith.constant 0 : i32
    return %c0_i32, %c0_i32_0 : i32, i32
  }
  func.func @transform_7(%arg0: i32) -> (i32, i32) {
    %c0_i32 = arith.constant 0 : i32
    %c0_i32_0 = arith.constant 0 : i32
    %c0_i32_1 = arith.constant 0 : i32
    return %c0_i32, %c0_i32_0 : i32, i32
  }
  func.func @transform_8(%arg0: i32) -> (i32, i32) {
    %c0_i32 = arith.constant 0 : i32
    %c0_i32_0 = arith.constant 0 : i32
    %c0_i32_1 = arith.constant 0 : i32
    return %c0_i32, %c0_i32_0 : i32, i32
  }
  func.func @transform_9(%arg0: i32) -> (i32, i32) {
    %c0_i32 = arith.constant 0 : i32
    %c0_i32_0 = arith.constant 0 : i32
    %c0_i32_1 = arith.constant 0 : i32
    return %c0_i32, %c0_i32_0 : i32, i32
  }
  func.func @transform_10(%arg0: i32) -> (i32, i32) {
    %c0_i32 = arith.constant 0 : i32
    %c0_i32_0 = arith.constant 0 : i32
    %c0_i32_1 = arith.constant 0 : i32
    return %c0_i32, %c0_i32_0 : i32, i32
  }
  func.func @transform_11(%arg0: i32) -> (i32, i32) {
    %c0_i32 = arith.constant 0 : i32
    %c0_i32_0 = arith.constant 0 : i32
    %c0_i32_1 = arith.constant 0 : i32
    return %c0_i32, %c0_i32_0 : i32, i32
  }
  func.func @transform_12(%arg0: i32) -> (i32, i32) {
    %c0_i32 = arith.constant 0 : i32
    %c0_i32_0 = arith.constant 0 : i32
    %c0_i32_1 = arith.constant 0 : i32
    return %c0_i32, %c0_i32_0 : i32, i32
  }
  func.func @transform_13(%arg0: i32) -> (i32, i32) {
    %c0_i32 = arith.constant 0 : i32
    %c0_i32_0 = arith.constant 0 : i32
    %c0_i32_1 = arith.constant 0 : i32
    return %c0_i32, %c0_i32_0 : i32, i32
  }
  func.func @transform_14(%arg0: i32) -> (i32, i32) {
    %c0_i32 = arith.constant 0 : i32
    %c0_i32_0 = arith.constant 0 : i32
    %c0_i32_1 = arith.constant 0 : i32
    return %c0_i32, %c0_i32_0 : i32, i32
  }
  func.func @transform_15(%arg0: i32) -> (i32, i32) {
    %c0_i32 = arith.constant 0 : i32
    %c0_i32_0 = arith.constant 0 : i32
    %c0_i32_1 = arith.constant 0 : i32
    return %c0_i32, %c0_i32_0 : i32, i32
  }
  func.func @transform_16(%arg0: i32) -> (i32, i32) {
    %c0_i32 = arith.constant 0 : i32
    %c0_i32_0 = arith.constant 0 : i32
    %c0_i32_1 = arith.constant 0 : i32
    return %c0_i32, %c0_i32_0 : i32, i32
  }
}

</mosaic_0001>

<llo_original>
// kernel: tpu_custom_call.1
$region0: #{tpu_custom_call.1}
  #allocation0 [shape = 'u32[]', space=smem, size = 0x4, offset = 0x4, fixed_abs, tag = 'smem constant byte address 0x4 - core index']
  #allocation1 [shape = 'u32[144,128]{1,0:T(1,128)}', space=vmem, size = 0x12000, scoped, tag = 'internal scratch']
  %s0 = inlined_call_operand.vmem [shape: f32[16,32], index: 0, kind: input, shape index: {}]
  %s1 = inlined_call_operand.vmem [shape: f32[16,16], index: 1, kind: input, shape index: {}]
  %s2 = inlined_call_operand.vmem [shape: f32[32,1664], index: 2, kind: input, shape index: {}]
  %s3 = inlined_call_operand.vmem [shape: f32[1,1664], index: 3, kind: input, shape index: {}]
  %s4 = inlined_call_operand.vmem [shape: f32[16,1024], index: 4, kind: input, shape index: {}]
  %s5 = inlined_call_operand.vmem [shape: f32[1,1024], index: 5, kind: input, shape index: {}]
  %s6 = inlined_call_operand.vmem [shape: f32[512,32], index: 6, kind: input, shape index: {}]
  %s7 = inlined_call_operand.vmem [shape: f32[1,32], index: 7, kind: input, shape index: {}]
  %s8 = inlined_call_operand.vmem [shape: f32[32,512], index: 8, kind: input, shape index: {}]
  %s9 = inlined_call_operand.vmem [shape: f32[1,512], index: 9, kind: input, shape index: {}]
  %s10 = inlined_call_operand.vmem [shape: f32[512,32], index: 10, kind: input, shape index: {}]
  %s11 = inlined_call_operand.vmem [shape: f32[1,32], index: 11, kind: input, shape index: {}]
  %s12 = inlined_call_operand.vmem [shape: f32[1,32], index: 12, kind: input, shape index: {}]
  %s13 = inlined_call_operand.vmem [shape: f32[1,32], index: 13, kind: input, shape index: {}]
  %s14 = inlined_call_operand.vmem [shape: f32[1,32], index: 14, kind: input, shape index: {}]
  %s15 = inlined_call_operand.vmem [shape: f32[1,32], index: 15, kind: input, shape index: {}]
  %s16 = inlined_call_operand.hbm [shape: f32[16,32], index: 16, kind: output, shape index: {}]
  %s17 = sld [smem:[#allocation0]]
  $region74: #{tpu_custom_call.1} parent=0
    _
  %s19 = ssub.s32 1, %s17
  %s20 = scalar_select 0, %s19, %s17
  $region1: #{tpu_custom_call.1} parent=0
    #allocation2 [shape = 'u8[8192]{0}', space=vmem, size = 0x2000, scoped, tag = 'output window, operand 0, single buffered']
    #allocation3 [shape = 's32[1]{0}', space=sflag, size = 0x4, scoped, tag = 'scoped memory for tpu_custom_call.1']
    %21 = vsyncpa [#allocation3], 0
    // Predicated region
    $region2: #{tpu_custom_call.1} parent=1 // pred_check
      _
    $region3: #{tpu_custom_call.1} parent=1 // pred_check_branch
      %23 = sbr.rel (0) target = $region5
    $region4: #{tpu_custom_call.1} parent=1 // pred_region
      _
    $region5: #{tpu_custom_call.1} parent=1 // pred_fallthru
      _
    // Predicated region
    $region6: #{tpu_custom_call.1} parent=1 // pred_check
      _
    $region7: #{tpu_custom_call.1} parent=1 // pred_check_branch
      %25 = sbr.rel (0) target = $region9
    $region8: #{tpu_custom_call.1} parent=1 // pred_region
      _
    $region9: #{tpu_custom_call.1} parent=1 // pred_fallthru
      _
    // Predicated region
    $region10: #{tpu_custom_call.1} parent=1 // pred_check
      _
    $region11: #{tpu_custom_call.1} parent=1 // pred_check_branch
      %27 = sbr.rel (0) target = $region13
    $region12: #{tpu_custom_call.1} parent=1 // pred_region
      _
    $region13: #{tpu_custom_call.1} parent=1 // pred_fallthru
      _
    // Predicated region
    $region14: #{tpu_custom_call.1} parent=1 // pred_check
      _
    $region15: #{tpu_custom_call.1} parent=1 // pred_check_branch
      %29 = sbr.rel (0) target = $region17
    $region16: #{tpu_custom_call.1} parent=1 // pred_region
      _
    $region17: #{tpu_custom_call.1} parent=1 // pred_fallthru
      _
    // Predicated region
    $region18: #{tpu_custom_call.1} parent=1 // pred_check
      _
    $region19: #{tpu_custom_call.1} parent=1 // pred_check_branch
      %31 = sbr.rel (0) target = $region21
    $region20: #{tpu_custom_call.1} parent=1 // pred_region
      _
    $region21: #{tpu_custom_call.1} parent=1 // pred_fallthru
      _
    // Predicated region
    $region22: #{tpu_custom_call.1} parent=1 // pred_check
      _
    $region23: #{tpu_custom_call.1} parent=1 // pred_check_branch
      %33 = sbr.rel (0) target = $region25
    $region24: #{tpu_custom_call.1} parent=1 // pred_region
      _
    $region25: #{tpu_custom_call.1} parent=1 // pred_fallthru
      _
    // Predicated region
    $region26: #{tpu_custom_call.1} parent=1 // pred_check
      _
    $region27: #{tpu_custom_call.1} parent=1 // pred_check_branch
      %35 = sbr.rel (0) target = $region29
    $region28: #{tpu_custom_call.1} parent=1 // pred_region
      _
    $region29: #{tpu_custom_call.1} parent=1 // pred_fallthru
      _
    // Predicated region
    $region30: #{tpu_custom_call.1} parent=1 // pred_check
      _
    $region31: #{tpu_custom_call.1} parent=1 // pred_check_branch
      %37 = sbr.rel (0) target = $region33
    $region32: #{tpu_custom_call.1} parent=1 // pred_region
      _
    $region33: #{tpu_custom_call.1} parent=1 // pred_fallthru
      _
    // Predicated region
    $region34: #{tpu_custom_call.1} parent=1 // pred_check
      _
    $region35: #{tpu_custom_call.1} parent=1 // pred_check_branch
      %39 = sbr.rel (0) target = $region37
    $region36: #{tpu_custom_call.1} parent=1 // pred_region
      _
    $region37: #{tpu_custom_call.1} parent=1 // pred_fallthru
      _
    // Predicated region
    $region38: #{tpu_custom_call.1} parent=1 // pred_check
      _
    $region39: #{tpu_custom_call.1} parent=1 // pred_check_branch
      %41 = sbr.rel (0) target = $region41
    $region40: #{tpu_custom_call.1} parent=1 // pred_region
      _
    $region41: #{tpu_custom_call.1} parent=1 // pred_fallthru
      _
    // Predicated region
    $region42: #{tpu_custom_call.1} parent=1 // pred_check
      _
    $region43: #{tpu_custom_call.1} parent=1 // pred_check_branch
      %43 = sbr.rel (0) target = $region45
    $region44: #{tpu_custom_call.1} parent=1 // pred_region
      _
    $region45: #{tpu_custom_call.1} parent=1 // pred_fallthru
      _
    // Predicated region
    $region46: #{tpu_custom_call.1} parent=1 // pred_check
      _
    $region47: #{tpu_custom_call.1} parent=1 // pred_check_branch
      %45 = sbr.rel (0) target = $region49
    $region48: #{tpu_custom_call.1} parent=1 // pred_region
      _
    $region49: #{tpu_custom_call.1} parent=1 // pred_fallthru
      _
    // Predicated region
    $region50: #{tpu_custom_call.1} parent=1 // pred_check
      _
    $region51: #{tpu_custom_call.1} parent=1 // pred_check_branch
      %47 = sbr.rel (0) target = $region53
    $region52: #{tpu_custom_call.1} parent=1 // pred_region
      _
    $region53: #{tpu_custom_call.1} parent=1 // pred_fallthru
      _
    // Predicated region
    $region54: #{tpu_custom_call.1} parent=1 // pred_check
      _
    $region55: #{tpu_custom_call.1} parent=1 // pred_check_branch
      %49 = sbr.rel (0) target = $region57
    $region56: #{tpu_custom_call.1} parent=1 // pred_region
      _
    $region57: #{tpu_custom_call.1} parent=1 // pred_fallthru
      _
    // Predicated region
    $region58: #{tpu_custom_call.1} parent=1 // pred_check
      _
    $region59: #{tpu_custom_call.1} parent=1 // pred_check_branch
      %51 = sbr.rel (0) target = $region61
    $region60: #{tpu_custom_call.1} parent=1 // pred_region
      _
    $region61: #{tpu_custom_call.1} parent=1 // pred_fallthru
      _
    // Predicated region
    $region62: #{tpu_custom_call.1} parent=1 // pred_check
      _
    $region63: #{tpu_custom_call.1} parent=1 // pred_check_branch
      %53 = sbr.rel (0) target = $region65
    $region64: #{tpu_custom_call.1} parent=1 // pred_region
      _
    $region65: #{tpu_custom_call.1} parent=1 // pred_fallthru
      _
    %v54 = vld [vmem:[%s0] sm:$0xff]
    %v55 = vld [vmem:[%s0 + $0x8] sm:$0xff]
    %v56 = vld [vmem:[%s2] sm:$0xff]
    %v57 = vld [vmem:[%s2 + $0x8] sm:$0xff]
    %v58 = vld [vmem:[%s2 + $0x10] sm:$0xff]
    %v59 = vld [vmem:[%s2 + $0x18] sm:$0xff]
    %v60 = vld [vmem:[%s2 + $0x20] sm:$0xff]
    %v61 = vld [vmem:[%s2 + $0x28] sm:$0xff]
    %v62 = vld [vmem:[%s2 + $0x30] sm:$0xff]
    %v63 = vld [vmem:[%s2 + $0x38] sm:$0xff]
    %v64 = vld [vmem:[%s2 + $0x40] sm:$0xff]
    %v65 = vld [vmem:[%s2 + $0x48] sm:$0xff]
    %v66 = vld [vmem:[%s2 + $0x50] sm:$0xff]
    %v67 = vld [vmem:[%s2 + $0x58] sm:$0xff]
    %v68 = vld [vmem:[%s2 + $0x60] sm:$0xff]
    %v69 = vld [vmem:[%s2 + $0x68] sm:$0xff]
    %v70 = vld [vmem:[%s2 + $0x70] sm:$0xff]
    %v71 = vld [vmem:[%s2 + $0x78] sm:$0xff]
    %v72 = vld [vmem:[%s2 + $0x80] sm:$0xff]
    %v73 = vld [vmem:[%s2 + $0x88] sm:$0xff]
    %v74 = vld [vmem:[%s2 + $0x90] sm:$0xff]
    %v75 = vld [vmem:[%s2 + $0x98] sm:$0xff]
    %v76 = vld [vmem:[%s2 + $0xa0] sm:$0xff]
    %v77 = vld [vmem:[%s2 + $0xa8] sm:$0xff]
    %v78 = vld [vmem:[%s2 + $0xb0] sm:$0xff]
    %v79 = vld [vmem:[%s2 + $0xb8] sm:$0xff]
    %v80 = vld [vmem:[%s2 + $0xc0] sm:$0xff]
    %v81 = vld [vmem:[%s2 + $0xc8] sm:$0xff]
    %v82 = vld [vmem:[%s2 + $0xd0] sm:$0xff]
    %v83 = vld [vmem:[%s2 + $0xd8] sm:$0xff]
    %v84 = vld [vmem:[%s2 + $0xe0] sm:$0xff]
    %v85 = vld [vmem:[%s2 + $0xe8] sm:$0xff]
    %v86 = vld [vmem:[%s2 + $0xf0] sm:$0xff]
    %v87 = vld [vmem:[%s2 + $0xf8] sm:$0xff]
    %v88 = vld [vmem:[%s2 + $0x100] sm:$0xff]
    %v89 = vld [vmem:[%s2 + $0x108] sm:$0xff]
    %v90 = vld [vmem:[%s2 + $0x110] sm:$0xff]
    %v91 = vld [vmem:[%s2 + $0x118] sm:$0xff]
    %v92 = vld [vmem:[%s2 + $0x120] sm:$0xff]
    %v93 = vld [vmem:[%s2 + $0x128] sm:$0xff]
    %v94 = vld [vmem:[%s2 + $0x130] sm:$0xff]
    %v95 = vld [vmem:[%s2 + $0x138] sm:$0xff]
    %v96 = vld [vmem:[%s2 + $0x140] sm:$0xff]
    %v97 = vld [vmem:[%s2 + $0x148] sm:$0xff]
    %v98 = vld [vmem:[%s2 + $0x150] sm:$0xff]
    %v99 = vld [vmem:[%s2 + $0x158] sm:$0xff]
    %v100 = vld [vmem:[%s2 + $0x160] sm:$0xff]
    %v101 = vld [vmem:[%s2 + $0x168] sm:$0xff]
    %v102 = vld [vmem:[%s2 + $0x170] sm:$0xff]
    %v103 = vld [vmem:[%s2 + $0x178] sm:$0xff]
    %v104 = vld [vmem:[%s2 + $0x180] sm:$0xff]
    %v105 = vld [vmem:[%s2 + $0x188] sm:$0xff]
    %v106 = vld [vmem:[%s2 + $0x190] sm:$0xff]
    %v107 = vld [vmem:[%s2 + $0x198] sm:$0xff]
    %v108 = vld [vmem:[%s3] sm:$0xff]
    %v109 = vld [vmem:[%s3 + $0x8] sm:$0x1f]
    %v112 = vlaneseq
    %v113 = vshrl.u32 %v112, 7
    %v114 = vsub.s32 0, %v113
    %v115 = vrot.slane %v108, %v114
    %v116 = vlaneseq
    %v117 = vshrl.u32 %v116, 7
    %v118 = vsub.s32 1, %v117
    %v119 = vrot.slane %v108, %v118
    %v120 = vlaneseq
    %v121 = vshrl.u32 %v120, 7
    %v122 = vsub.s32 2, %v121
    %v123 = vrot.slane %v108, %v122
    %v124 = vlaneseq
    %v125 = vshrl.u32 %v124, 7
    %v126 = vsub.s32 3, %v125
    %v127 = vrot.slane %v108, %v126
    %v128 = vlaneseq
    %v129 = vshrl.u32 %v128, 7
    %v130 = vsub.s32 4, %v129
    %v131 = vrot.slane %v108, %v130
    %v132 = vlaneseq
    %v133 = vshrl.u32 %v132, 7
    %v134 = vsub.s32 5, %v133
    %v135 = vrot.slane %v108, %v134
    %v136 = vlaneseq
    %v137 = vshrl.u32 %v136, 7
    %v138 = vsub.s32 6, %v137
    %v139 = vrot.slane %v108, %v138
    %v140 = vlaneseq
    %v141 = vshrl.u32 %v140, 7
    %v142 = vsub.s32 7, %v141
    %v143 = vrot.slane %v108, %v142
    %v144 = vlaneseq
    %v145 = vshrl.u32 %v144, 7
    %v146 = vsub.s32 0, %v145
    %v147 = vrot.slane %v109, %v146
    %v148 = vlaneseq
    %v149 = vshrl.u32 %v148, 7
    %v150 = vsub.s32 1, %v149
    %v151 = vrot.slane %v109, %v150
    %v152 = vlaneseq
    %v153 = vshrl.u32 %v152, 7
    %v154 = vsub.s32 2, %v153
    %v155 = vrot.slane %v109, %v154
    %v156 = vlaneseq
    %v157 = vshrl.u32 %v156, 7
    %v158 = vsub.s32 3, %v157
    %v159 = vrot.slane %v109, %v158
    %v160 = vlaneseq
    %v161 = vshrl.u32 %v160, 7
    %v162 = vsub.s32 4, %v161
    %v163 = vrot.slane %v109, %v162
    %vm177 = vcmask 261120
    %v179 = vsel %vm177, %v54, 0
    %v182 = vsel %vm177, %v55, 0
    %184 = vmatprep.subr.mxu0 0.0
    %185 = vmatpush1.msra.mxu0 0.0
    %186 = vmatprep.subr.mxu0 0.0
    %187 = vmatpush1.msra.mxu0 0.0
    %188 = vmatprep.subr.mxu0 0.0
    %189 = vmatpush1.msra.mxu0 0.0
    %190 = vmatprep.subr.mxu0 0.0
    %191 = vmatpush1.msra.mxu0 0.0
    %192 = vmatprep.subr.mxu0 0.0
    %193 = vmatpush1.msra.mxu0 0.0
    %194 = vmatprep.subr.mxu0 0.0
    %195 = vmatpush1.msra.mxu0 0.0
    %196 = vmatprep.subr.mxu0 0.0
    %197 = vmatpush1.msra.mxu0 0.0
    %198 = vmatprep.subr.mxu0 0.0
    %199 = vmatpush1.msra.mxu0 0.0
    %200 = vmatprep.subr.mxu0 0.0
    %201 = vmatpush1.msra.mxu0 0.0
    %202 = vmatprep.subr.mxu0 0.0
    %203 = vmatpush1.msra.mxu0 0.0
    %204 = vmatprep.subr.mxu0 0.0
    %205 = vmatpush1.msra.mxu0 0.0
    %206 = vmatprep.subr.mxu0 0.0
    %207 = vmatpush1.msra.mxu0 0.0
    %208 = vmatprep.subr.mxu0 %v96
    %209 = vmatpush1.msra.mxu0 %v95
    %210 = vmatprep.subr.mxu0 %v83
    %211 = vmatpush1.msra.mxu0 %v82
    %212 = vmatprep.subr.mxu0 %v70
    %213 = vmatpush1.msra.mxu0 %v69
    %214 = vmatprep.subr.mxu0 %v57
    %215 = vmatpush1.msra.mxu0 %v56
    %216 = vmatprep.subr.mxu0 0.0
    %217 = vmatpush2.msra.mxu0 0.0
    %218 = vmatprep.subr.mxu0 0.0
    %219 = vmatpush2.msra.mxu0 0.0
    %220 = vmatprep.subr.mxu0 0.0
    %221 = vmatpush2.msra.mxu0 0.0
    %222 = vmatprep.subr.mxu0 0.0
    %223 = vmatpush2.msra.mxu0 0.0
    %224 = vmatprep.subr.mxu0 0.0
    %225 = vmatpush2.msra.mxu0 0.0
    %226 = vmatprep.subr.mxu0 0.0
    %227 = vmatpush2.msra.mxu0 0.0
    %228 = vmatprep.subr.mxu0 0.0
    %229 = vmatpush2.msra.mxu0 0.0
    %230 = vmatprep.subr.mxu0 0.0
    %231 = vmatpush2.msra.mxu0 0.0
    %232 = vmatprep.subr.mxu0 0.0
    %233 = vmatpush2.msra.mxu0 0.0
    %234 = vmatprep.subr.mxu0 0.0
    %235 = vmatpush2.msra.mxu0 0.0
    %236 = vmatprep.subr.mxu0 0.0
    %237 = vmatpush2.msra.mxu0 0.0
    %238 = vmatprep.subr.mxu0 0.0
    %239 = vmatpush2.msra.mxu0 0.0
    %240 = vmatprep.subr.mxu0 0.0
    %241 = vmatpush2.msra.mxu0 0.0
    %242 = vmatprep.subr.mxu0 0.0
    %243 = vmatpush2.msra.mxu0 0.0
    %244 = vmatprep.subr.mxu0 0.0
    %245 = vmatpush2.msra.mxu0 0.0
    %246 = vmatprep.subr.mxu0 0.0
    %247 = vmatpush2.msra.mxu0 0.0
    %248 = vmatprep.mubr.f32.mxu0 0.0
    %249 = vmatmul.mubr.f32.gmra.mxu0 %v179
    %v250 = vpop.f32.mrf.mxu0
    %v251 = vadd.f32 %v115, %v250
    %v252 = vpop.f32.mrf.mxu0
    %v253 = vadd.f32 %v119, %v252
    %254 = vmatprep.mubr.f32.mxu0 0.0
    %255 = vmatmul.mubr.f32.gmra.mxu0 %v182
    %v256 = vpop.f32.mrf.mxu0
    %v257 = vadd.f32 %v115, %v256
    %v258 = vpop.f32.mrf.mxu0
    %v259 = vadd.f32 %v119, %v258
    %260 = vdwg.mxu0
    %261 = vmatprep.subr.mxu0 0.0
    %262 = vmatpush1.msra.mxu0 0.0
    %263 = vmatprep.subr.mxu0 0.0
    %264 = vmatpush1.msra.mxu0 0.0
    %265 = vmatprep.subr.mxu0 0.0
    %266 = vmatpush1.msra.mxu0 0.0
    %267 = vmatprep.subr.mxu0 0.0
    %268 = vmatpush1.msra.mxu0 0.0
    %269 = vmatprep.subr.mxu0 0.0
    %270 = vmatpush1.msra.mxu0 0.0
    %271 = vmatprep.subr.mxu0 0.0
    %272 = vmatpush1.msra.mxu0 0.0
    %273 = vmatprep.subr.mxu0 0.0
    %274 = vmatpush1.msra.mxu0 0.0
    %275 = vmatprep.subr.mxu0 0.0
    %276 = vmatpush1.msra.mxu0 0.0
    %277 = vmatprep.subr.mxu0 0.0
    %278 = vmatpush1.msra.mxu0 0.0
    %279 = vmatprep.subr.mxu0 0.0
    %280 = vmatpush1.msra.mxu0 0.0
    %281 = vmatprep.subr.mxu0 0.0
    %282 = vmatpush1.msra.mxu0 0.0
    %283 = vmatprep.subr.mxu0 0.0
    %284 = vmatpush1.msra.mxu0 0.0
    %285 = vmatprep.subr.mxu0 %v98
    %286 = vmatpush1.msra.mxu0 %v97
    %287 = vmatprep.subr.mxu0 %v85
    %288 = vmatpush1.msra.mxu0 %v84
    %289 = vmatprep.subr.mxu0 %v72
    %290 = vmatpush1.msra.mxu0 %v71
    %291 = vmatprep.subr.mxu0 %v59
    %292 = vmatpush1.msra.mxu0 %v58
    %293 = vmatprep.subr.mxu0 0.0
    %294 = vmatpush2.msra.mxu0 0.0
    %295 = vmatprep.subr.mxu0 0.0
    %296 = vmatpush2.msra.mxu0 0.0
    %297 = vmatprep.subr.mxu0 0.0
    %298 = vmatpush2.msra.mxu0 0.0
    %299 = vmatprep.subr.mxu0 0.0
    %300 = vmatpush2.msra.mxu0 0.0
    %301 = vmatprep.subr.mxu0 0.0
    %302 = vmatpush2.msra.mxu0 0.0
    %303 = vmatprep.subr.mxu0 0.0
    %304 = vmatpush2.msra.mxu0 0.0
    %305 = vmatprep.subr.mxu0 0.0
    %306 = vmatpush2.msra.mxu0 0.0
    %307 = vmatprep.subr.mxu0 0.0
    %308 = vmatpush2.msra.mxu0 0.0
    %309 = vmatprep.subr.mxu0 0.0
    %310 = vmatpush2.msra.mxu0 0.0
    %311 = vmatprep.subr.mxu0 0.0
    %312 = vmatpush2.msra.mxu0 0.0
    %313 = vmatprep.subr.mxu0 0.0
    %314 = vmatpush2.msra.mxu0 0.0
    %315 = vmatprep.subr.mxu0 0.0
    %316 = vmatpush2.msra.mxu0 0.0
    %317 = vmatprep.subr.mxu0 0.0
    %318 = vmatpush2.msra.mxu0 0.0
    %319 = vmatprep.subr.mxu0 0.0
    %320 = vmatpush2.msra.mxu0 0.0
    %321 = vmatprep.subr.mxu0 0.0
    %322 = vmatpush2.msra.mxu0 0.0
    %323 = vmatprep.subr.mxu0 0.0
    %324 = vmatpush2.msra.mxu0 0.0
    %325 = vmatprep.mubr.f32.mxu0 0.0
    %326 = vmatmul.mubr.f32.gmra.mxu0 %v179
    %v327 = vpop.f32.mrf.mxu0
    %v328 = vadd.f32 %v123, %v327
    %v329 = vpop.f32.mrf.mxu0
    %v330 = vadd.f32 %v127, %v329
    %331 = vmatprep.mubr.f32.mxu0 0.0
    %332 = vmatmul.mubr.f32.gmra.mxu0 %v182
    %v333 = vpop.f32.mrf.mxu0
    %v334 = vadd.f32 %v123, %v333
    %v335 = vpop.f32.mrf.mxu0
    %v336 = vadd.f32 %v127, %v335
    %337 = vdwg.mxu0
    %338 = vmatprep.subr.mxu0 0.0
    %339 = vmatpush1.msra.mxu0 0.0
    %340 = vmatprep.subr.mxu0 0.0
    %341 = vmatpush1.msra.mxu0 0.0
    %342 = vmatprep.subr.mxu0 0.0
    %343 = vmatpush1.msra.mxu0 0.0
    %344 = vmatprep.subr.mxu0 0.0
    %345 = vmatpush1.msra.mxu0 0.0
    %346 = vmatprep.subr.mxu0 0.0
    %347 = vmatpush1.msra.mxu0 0.0
    %348 = vmatprep.subr.mxu0 0.0
    %349 = vmatpush1.msra.mxu0 0.0
    %350 = vmatprep.subr.mxu0 0.0
    %351 = vmatpush1.msra.mxu0 0.0
    %352 = vmatprep.subr.mxu0 0.0
    %353 = vmatpush1.msra.mxu0 0.0
    %354 = vmatprep.subr.mxu0 0.0
    %355 = vmatpush1.msra.mxu0 0.0
    %356 = vmatprep.subr.mxu0 0.0
    %357 = vmatpush1.msra.mxu0 0.0
    %358 = vmatprep.subr.mxu0 0.0
    %359 = vmatpush1.msra.mxu0 0.0
    %360 = vmatprep.subr.mxu0 0.0
    %361 = vmatpush1.msra.mxu0 0.0
    %362 = vmatprep.subr.mxu0 %v100
    %363 = vmatpush1.msra.mxu0 %v99
    %364 = vmatprep.subr.mxu0 %v87
    %365 = vmatpush1.msra.mxu0 %v86
    %366 = vmatprep.subr.mxu0 %v74
    %367 = vmatpush1.msra.mxu0 %v73
    %368 = vmatprep.subr.mxu0 %v61
    %369 = vmatpush1.msra.mxu0 %v60
    %370 = vmatprep.subr.mxu0 0.0
    %371 = vmatpush2.msra.mxu0 0.0
    %372 = vmatprep.subr.mxu0 0.0
    %373 = vmatpush2.msra.mxu0 0.0
    %374 = vmatprep.subr.mxu0 0.0
    %375 = vmatpush2.msra.mxu0 0.0
    %376 = vmatprep.subr.mxu0 0.0
    %377 = vmatpush2.msra.mxu0 0.0
    %378 = vmatprep.subr.mxu0 0.0
    %379 = vmatpush2.msra.mxu0 0.0
    %380 = vmatprep.subr.mxu0 0.0
    %381 = vmatpush2.msra.mxu0 0.0
    %382 = vmatprep.subr.mxu0 0.0
    %383 = vmatpush2.msra.mxu0 0.0
    %384 = vmatprep.subr.mxu0 0.0
    %385 = vmatpush2.msra.mxu0 0.0
    %386 = vmatprep.subr.mxu0 0.0
    %387 = vmatpush2.msra.mxu0 0.0
    %388 = vmatprep.subr.mxu0 0.0
    %389 = vmatpush2.msra.mxu0 0.0
    %390 = vmatprep.subr.mxu0 0.0
    %391 = vmatpush2.msra.mxu0 0.0
    %392 = vmatprep.subr.mxu0 0.0
    %393 = vmatpush2.msra.mxu0 0.0
    %394 = vmatprep.subr.mxu0 0.0
    %395 = vmatpush2.msra.mxu0 0.0
    %396 = vmatprep.subr.mxu0 0.0
    %397 = vmatpush2.msra.mxu0 0.0
    %398 = vmatprep.subr.mxu0 0.0
    %399 = vmatpush2.msra.mxu0 0.0
    %400 = vmatprep.subr.mxu0 0.0
    %401 = vmatpush2.msra.mxu0 0.0
    %402 = vmatprep.mubr.f32.mxu0 0.0
    %403 = vmatmul.mubr.f32.gmra.mxu0 %v179
    %v404 = vpop.f32.mrf.mxu0
    %v405 = vadd.f32 %v131, %v404
    %v406 = vpop.f32.mrf.mxu0
    %v407 = vadd.f32 %v135, %v406
    %408 = vmatprep.mubr.f32.mxu0 0.0
    %409 = vmatmul.mubr.f32.gmra.mxu0 %v182
    %v410 = vpop.f32.mrf.mxu0
    %v411 = vadd.f32 %v131, %v410
    %v412 = vpop.f32.mrf.mxu0
    %v413 = vadd.f32 %v135, %v412
    %414 = vdwg.mxu0
    %415 = vmatprep.subr.mxu0 0.0
    %416 = vmatpush1.msra.mxu0 0.0
    %417 = vmatprep.subr.mxu0 0.0
    %418 = vmatpush1.msra.mxu0 0.0
    %419 = vmatprep.subr.mxu0 0.0
    %420 = vmatpush1.msra.mxu0 0.0
    %421 = vmatprep.subr.mxu0 0.0
    %422 = vmatpush1.msra.mxu0 0.0
    %423 = vmatprep.subr.mxu0 0.0
    %424 = vmatpush1.msra.mxu0 0.0
    %425 = vmatprep.subr.mxu0 0.0
    %426 = vmatpush1.msra.mxu0 0.0
    %427 = vmatprep.subr.mxu0 0.0
    %428 = vmatpush1.msra.mxu0 0.0
    %429 = vmatprep.subr.mxu0 0.0
    %430 = vmatpush1.msra.mxu0 0.0
    %431 = vmatprep.subr.mxu0 0.0
    %432 = vmatpush1.msra.mxu0 0.0
    %433 = vmatprep.subr.mxu0 0.0
    %434 = vmatpush1.msra.mxu0 0.0
    %435 = vmatprep.subr.mxu0 0.0
    %436 = vmatpush1.msra.mxu0 0.0
    %437 = vmatprep.subr.mxu0 0.0
    %438 = vmatpush1.msra.mxu0 0.0
    %439 = vmatprep.subr.mxu0 %v102
    %440 = vmatpush1.msra.mxu0 %v101
    %441 = vmatprep.subr.mxu0 %v89
    %442 = vmatpush1.msra.mxu0 %v88
    %443 = vmatprep.subr.mxu0 %v76
    %444 = vmatpush1.msra.mxu0 %v75
    %445 = vmatprep.subr.mxu0 %v63
    %446 = vmatpush1.msra.mxu0 %v62
    %447 = vmatprep.subr.mxu0 0.0
    %448 = vmatpush2.msra.mxu0 0.0
    %449 = vmatprep.subr.mxu0 0.0
    %450 = vmatpush2.msra.mxu0 0.0
    %451 = vmatprep.subr.mxu0 0.0
    %452 = vmatpush2.msra.mxu0 0.0
    %453 = vmatprep.subr.mxu0 0.0
    %454 = vmatpush2.msra.mxu0 0.0
    %455 = vmatprep.subr.mxu0 0.0
    %456 = vmatpush2.msra.mxu0 0.0
    %457 = vmatprep.subr.mxu0 0.0
    %458 = vmatpush2.msra.mxu0 0.0
    %459 = vmatprep.subr.mxu0 0.0
    %460 = vmatpush2.msra.mxu0 0.0
    %461 = vmatprep.subr.mxu0 0.0
    %462 = vmatpush2.msra.mxu0 0.0
    %463 = vmatprep.subr.mxu0 0.0
    %464 = vmatpush2.msra.mxu0 0.0
    %465 = vmatprep.subr.mxu0 0.0
    %466 = vmatpush2.msra.mxu0 0.0
    %467 = vmatprep.subr.mxu0 0.0
    %468 = vmatpush2.msra.mxu0 0.0
    %469 = vmatprep.subr.mxu0 0.0
    %470 = vmatpush2.msra.mxu0 0.0
    %471 = vmatprep.subr.mxu0 0.0
    %472 = vmatpush2.msra.mxu0 0.0
    %473 = vmatprep.subr.mxu0 0.0
    %474 = vmatpush2.msra.mxu0 0.0
    %475 = vmatprep.subr.mxu0 0.0
    %476 = vmatpush2.msra.mxu0 0.0
    %477 = vmatprep.subr.mxu0 0.0
    %478 = vmatpush2.msra.mxu0 0.0
    %479 = vmatprep.mubr.f32.mxu0 0.0
    %480 = vmatmul.mubr.f32.gmra.mxu0 %v179
    %v481 = vpop.f32.mrf.mxu0
    %v482 = vadd.f32 %v139, %v481
    %v483 = vpop.f32.mrf.mxu0
    %v484 = vadd.f32 %v143, %v483
    %485 = vmatprep.mubr.f32.mxu0 0.0
    %486 = vmatmul.mubr.f32.gmra.mxu0 %v182
    %v487 = vpop.f32.mrf.mxu0
    %v488 = vadd.f32 %v139, %v487
    %v489 = vpop.f32.mrf.mxu0
    %v490 = vadd.f32 %v143, %v489
    %491 = vdwg.mxu0
    %492 = vmatprep.subr.mxu0 0.0
    %493 = vmatpush1.msra.mxu0 0.0
    %494 = vmatprep.subr.mxu0 0.0
    %495 = vmatpush1.msra.mxu0 0.0
    %496 = vmatprep.subr.mxu0 0.0
    %497 = vmatpush1.msra.mxu0 0.0
    %498 = vmatprep.subr.mxu0 0.0
    %499 = vmatpush1.msra.mxu0 0.0
    %500 = vmatprep.subr.mxu0 0.0
    %501 = vmatpush1.msra.mxu0 0.0
    %502 = vmatprep.subr.mxu0 0.0
    %503 = vmatpush1.msra.mxu0 0.0
    %504 = vmatprep.subr.mxu0 0.0
    %505 = vmatpush1.msra.mxu0 0.0
    %506 = vmatprep.subr.mxu0 0.0
    %507 = vmatpush1.msra.mxu0 0.0
    %508 = vmatprep.subr.mxu0 0.0
    %509 = vmatpush1.msra.mxu0 0.0
    %510 = vmatprep.subr.mxu0 0.0
    %511 = vmatpush1.msra.mxu0 0.0
    %512 = vmatprep.subr.mxu0 0.0
    %513 = vmatpush1.msra.mxu0 0.0
    %514 = vmatprep.subr.mxu0 0.0
    %515 = vmatpush1.msra.mxu0 0.0
    %516 = vmatprep.subr.mxu0 %v104
    %517 = vmatpush1.msra.mxu0 %v103
    %518 = vmatprep.subr.mxu0 %v91
    %519 = vmatpush1.msra.mxu0 %v90
    %520 = vmatprep.subr.mxu0 %v78
    %521 = vmatpush1.msra.mxu0 %v77
    %522 = vmatprep.subr.mxu0 %v65
    %523 = vmatpush1.msra.mxu0 %v64
    %524 = vmatprep.subr.mxu0 0.0
    %525 = vmatpush2.msra.mxu0 0.0
    %526 = vmatprep.subr.mxu0 0.0
    %527 = vmatpush2.msra.mxu0 0.0
    %528 = vmatprep.subr.mxu0 0.0
    %529 = vmatpush2.msra.mxu0 0.0
    %530 = vmatprep.subr.mxu0 0.0
    %531 = vmatpush2.msra.mxu0 0.0
    %532 = vmatprep.subr.mxu0 0.0
    %533 = vmatpush2.msra.mxu0 0.0
    %534 = vmatprep.subr.mxu0 0.0
    %535 = vmatpush2.msra.mxu0 0.0
    %536 = vmatprep.subr.mxu0 0.0
    %537 = vmatpush2.msra.mxu0 0.0
    %538 = vmatprep.subr.mxu0 0.0
    %539 = vmatpush2.msra.mxu0 0.0
    %540 = vmatprep.subr.mxu0 0.0
    %541 = vmatpush2.msra.mxu0 0.0
    %542 = vmatprep.subr.mxu0 0.0
    %543 = vmatpush2.msra.mxu0 0.0
    %544 = vmatprep.subr.mxu0 0.0
    %545 = vmatpush2.msra.mxu0 0.0
    %546 = vmatprep.subr.mxu0 0.0
    %547 = vmatpush2.msra.mxu0 0.0
    %548 = vmatprep.subr.mxu0 0.0
    %549 = vmatpush2.msra.mxu0 0.0
    %550 = vmatprep.subr.mxu0 0.0
    %551 = vmatpush2.msra.mxu0 0.0
    %552 = vmatprep.subr.mxu0 0.0
    %553 = vmatpush2.msra.mxu0 0.0
    %554 = vmatprep.subr.mxu0 0.0
    %555 = vmatpush2.msra.mxu0 0.0
    %556 = vmatprep.mubr.f32.mxu0 0.0
    %557 = vmatmul.mubr.f32.gmra.mxu0 %v179
    %v558 = vpop.f32.mrf.mxu0
    %v559 = vadd.f32 %v147, %v558
    %v560 = vpop.f32.mrf.mxu0
    %v561 = vadd.f32 %v151, %v560
    %562 = vmatprep.mubr.f32.mxu0 0.0
    %563 = vmatmul.mubr.f32.gmra.mxu0 %v182
    %v564 = vpop.f32.mrf.mxu0
    %v565 = vadd.f32 %v147, %v564
    %v566 = vpop.f32.mrf.mxu0
    %v567 = vadd.f32 %v151, %v566
    %568 = vdwg.mxu0
    %569 = vmatprep.subr.mxu0 0.0
    %570 = vmatpush1.msra.mxu0 0.0
    %571 = vmatprep.subr.mxu0 0.0
    %572 = vmatpush1.msra.mxu0 0.0
    %573 = vmatprep.subr.mxu0 0.0
    %574 = vmatpush1.msra.mxu0 0.0
    %575 = vmatprep.subr.mxu0 0.0
    %576 = vmatpush1.msra.mxu0 0.0
    %577 = vmatprep.subr.mxu0 0.0
    %578 = vmatpush1.msra.mxu0 0.0
    %579 = vmatprep.subr.mxu0 0.0
    %580 = vmatpush1.msra.mxu0 0.0
    %581 = vmatprep.subr.mxu0 0.0
    %582 = vmatpush1.msra.mxu0 0.0
    %583 = vmatprep.subr.mxu0 0.0
    %584 = vmatpush1.msra.mxu0 0.0
    %585 = vmatprep.subr.mxu0 0.0
    %586 = vmatpush1.msra.mxu0 0.0
    %587 = vmatprep.subr.mxu0 0.0
    %588 = vmatpush1.msra.mxu0 0.0
    %589 = vmatprep.subr.mxu0 0.0
    %590 = vmatpush1.msra.mxu0 0.0
    %591 = vmatprep.subr.mxu0 0.0
    %592 = vmatpush1.msra.mxu0 0.0
    %593 = vmatprep.subr.mxu0 %v106
    %594 = vmatpush1.msra.mxu0 %v105
    %595 = vmatprep.subr.mxu0 %v93
    %596 = vmatpush1.msra.mxu0 %v92
    %597 = vmatprep.subr.mxu0 %v80
    %598 = vmatpush1.msra.mxu0 %v79
    %599 = vmatprep.subr.mxu0 %v67
    %600 = vmatpush1.msra.mxu0 %v66
    %601 = vmatprep.subr.mxu0 0.0
    %602 = vmatpush2.msra.mxu0 0.0
    %603 = vmatprep.subr.mxu0 0.0
    %604 = vmatpush2.msra.mxu0 0.0
    %605 = vmatprep.subr.mxu0 0.0
    %606 = vmatpush2.msra.mxu0 0.0
    %607 = vmatprep.subr.mxu0 0.0
    %608 = vmatpush2.msra.mxu0 0.0
    %609 = vmatprep.subr.mxu0 0.0
    %610 = vmatpush2.msra.mxu0 0.0
    %611 = vmatprep.subr.mxu0 0.0
    %612 = vmatpush2.msra.mxu0 0.0
    %613 = vmatprep.subr.mxu0 0.0
    %614 = vmatpush2.msra.mxu0 0.0
    %615 = vmatprep.subr.mxu0 0.0
    %616 = vmatpush2.msra.mxu0 0.0
    %617 = vmatprep.subr.mxu0 0.0
    %618 = vmatpush2.msra.mxu0 0.0
    %619 = vmatprep.subr.mxu0 0.0
    %620 = vmatpush2.msra.mxu0 0.0
    %621 = vmatprep.subr.mxu0 0.0
    %622 = vmatpush2.msra.mxu0 0.0
    %623 = vmatprep.subr.mxu0 0.0
    %624 = vmatpush2.msra.mxu0 0.0
    %625 = vmatprep.subr.mxu0 0.0
    %626 = vmatpush2.msra.mxu0 0.0
    %627 = vmatprep.subr.mxu0 0.0
    %628 = vmatpush2.msra.mxu0 0.0
    %629 = vmatprep.subr.mxu0 0.0
    %630 = vmatpush2.msra.mxu0 0.0
    %631 = vmatprep.subr.mxu0 0.0
    %632 = vmatpush2.msra.mxu0 0.0
    %633 = vmatprep.mubr.f32.mxu0 0.0
    %634 = vmatmul.mubr.f32.gmra.mxu0 %v179
    %v635 = vpop.f32.mrf.mxu0
    %v636 = vadd.f32 %v155, %v635
    %v637 = vpop.f32.mrf.mxu0
    %v638 = vadd.f32 %v159, %v637
    %639 = vmatprep.mubr.f32.mxu0 0.0
    %640 = vmatmul.mubr.f32.gmra.mxu0 %v182
    %v641 = vpop.f32.mrf.mxu0
    %v642 = vadd.f32 %v155, %v641
    %v643 = vpop.f32.mrf.mxu0
    %v644 = vadd.f32 %v159, %v643
    %645 = vdwg.mxu0
    %646 = vmatprep.subr.mxu0 0.0
    %647 = vmatpush1.msra.mxu0 0.0
    %648 = vmatprep.subr.mxu0 0.0
    %649 = vmatpush1.msra.mxu0 0.0
    %650 = vmatprep.subr.mxu0 0.0
    %651 = vmatpush1.msra.mxu0 0.0
    %652 = vmatprep.subr.mxu0 0.0
    %653 = vmatpush1.msra.mxu0 0.0
    %654 = vmatprep.subr.mxu0 0.0
    %655 = vmatpush1.msra.mxu0 0.0
    %656 = vmatprep.subr.mxu0 0.0
    %657 = vmatpush1.msra.mxu0 0.0
    %658 = vmatprep.subr.mxu0 0.0
    %659 = vmatpush1.msra.mxu0 0.0
    %660 = vmatprep.subr.mxu0 0.0
    %661 = vmatpush1.msra.mxu0 0.0
    %662 = vmatprep.subr.mxu0 0.0
    %663 = vmatpush1.msra.mxu0 0.0
    %664 = vmatprep.subr.mxu0 0.0
    %665 = vmatpush1.msra.mxu0 0.0
    %666 = vmatprep.subr.mxu0 0.0
    %667 = vmatpush1.msra.mxu0 0.0
    %668 = vmatprep.subr.mxu0 0.0
    %669 = vmatpush1.msra.mxu0 0.0
    %670 = vmatprep.subr.mxu0 0.0
    %671 = vmatpush1.msra.mxu0 %v107
    %672 = vmatprep.subr.mxu0 0.0
    %673 = vmatpush1.msra.mxu0 %v94
    %674 = vmatprep.subr.mxu0 0.0
    %675 = vmatpush1.msra.mxu0 %v81
    %676 = vmatprep.subr.mxu0 0.0
    %677 = vmatpush1.msra.mxu0 %v68
    %678 = vmatprep.subr.mxu0 0.0
    %679 = vmatpush2.msra.mxu0 0.0
    %680 = vmatprep.subr.mxu0 0.0
    %681 = vmatpush2.msra.mxu0 0.0
    %682 = vmatprep.subr.mxu0 0.0
    %683 = vmatpush2.msra.mxu0 0.0
    %684 = vmatprep.subr.mxu0 0.0
    %685 = vmatpush2.msra.mxu0 0.0
    %686 = vmatprep.subr.mxu0 0.0
    %687 = vmatpush2.msra.mxu0 0.0
    %688 = vmatprep.subr.mxu0 0.0
    %689 = vmatpush2.msra.mxu0 0.0
    %690 = vmatprep.subr.mxu0 0.0
    %691 = vmatpush2.msra.mxu0 0.0
    %692 = vmatprep.subr.mxu0 0.0
    %693 = vmatpush2.msra.mxu0 0.0
    %694 = vmatprep.subr.mxu0 0.0
    %695 = vmatpush2.msra.mxu0 0.0
    %696 = vmatprep.subr.mxu0 0.0
    %697 = vmatpush2.msra.mxu0 0.0
    %698 = vmatprep.subr.mxu0 0.0
    %699 = vmatpush2.msra.mxu0 0.0
    %700 = vmatprep.subr.mxu0 0.0
    %701 = vmatpush2.msra.mxu0 0.0
    %702 = vmatprep.subr.mxu0 0.0
    %703 = vmatpush2.msra.mxu0 0.0
    %704 = vmatprep.subr.mxu0 0.0
    %705 = vmatpush2.msra.mxu0 0.0
    %706 = vmatprep.subr.mxu0 0.0
    %707 = vmatpush2.msra.mxu0 0.0
    %708 = vmatprep.subr.mxu0 0.0
    %709 = vmatpush2.msra.mxu0 0.0
    %710 = vmatprep.mubr.f32.mxu0 0.0
    %711 = vmatmul.mubr.f32.gmra.mxu0 %v179
    %v712 = vpop.f32.mrf.mxu0
    %v713 = vadd.f32 %v163, %v712
    %v714 = vpop.f32.mrf.mxu0
    %715 = vmatprep.mubr.f32.mxu0 0.0
    %716 = vmatmul.mubr.f32.gmra.mxu0 %v182
    %v717 = vpop.f32.mrf.mxu0
    %v718 = vadd.f32 %v163, %v717
    %v719 = vpop.f32.mrf.mxu0
    %720 = vdwg.mxu0
    %v721 = vmax.f32 %v713, 0.0
    %v722 = vmax.f32 %v718, 0.0
    %v723 = vld [vmem:[%s4] sm:$0xff]
    %v724 = vld [vmem:[%s4 + $0x8] sm:$0xff]
    %v725 = vld [vmem:[%s4 + $0x10] sm:$0xff]
    %v726 = vld [vmem:[%s4 + $0x18] sm:$0xff]
    %v727 = vld [vmem:[%s4 + $0x20] sm:$0xff]
    %v728 = vld [vmem:[%s4 + $0x28] sm:$0xff]
    %v729 = vld [vmem:[%s4 + $0x30] sm:$0xff]
    %v730 = vld [vmem:[%s4 + $0x38] sm:$0xff]
    %v731 = vld [vmem:[%s4 + $0x40] sm:$0xff]
    %v732 = vld [vmem:[%s4 + $0x48] sm:$0xff]
    %v733 = vld [vmem:[%s4 + $0x50] sm:$0xff]
    %v734 = vld [vmem:[%s4 + $0x58] sm:$0xff]
    %v735 = vld [vmem:[%s4 + $0x60] sm:$0xff]
    %v736 = vld [vmem:[%s4 + $0x68] sm:$0xff]
    %v737 = vld [vmem:[%s4 + $0x70] sm:$0xff]
    %v738 = vld [vmem:[%s4 + $0x78] sm:$0xff]
    %v739 = vld [vmem:[%s5] sm:$0xff]
    %v741 = vlaneseq
    %v742 = vshrl.u32 %v741, 7
    %v743 = vsub.s32 0, %v742
    %v744 = vrot.slane %v739, %v743
    %v745 = vlaneseq
    %v746 = vshrl.u32 %v745, 7
    %v747 = vsub.s32 1, %v746
    %v748 = vrot.slane %v739, %v747
    %v749 = vlaneseq
    %v750 = vshrl.u32 %v749, 7
    %v751 = vsub.s32 2, %v750
    %v752 = vrot.slane %v739, %v751
    %v753 = vlaneseq
    %v754 = vshrl.u32 %v753, 7
    %v755 = vsub.s32 3, %v754
    %v756 = vrot.slane %v739, %v755
    %v757 = vlaneseq
    %v758 = vshrl.u32 %v757, 7
    %v759 = vsub.s32 4, %v758
    %v760 = vrot.slane %v739, %v759
    %v761 = vlaneseq
    %v762 = vshrl.u32 %v761, 7
    %v763 = vsub.s32 5, %v762
    %v764 = vrot.slane %v739, %v763
    %v765 = vlaneseq
    %v766 = vshrl.u32 %v765, 7
    %v767 = vsub.s32 6, %v766
    %v768 = vrot.slane %v739, %v767
    %v769 = vlaneseq
    %v770 = vshrl.u32 %v769, 7
    %v771 = vsub.s32 7, %v770
    %v772 = vrot.slane %v739, %v771
    %vm781 = vcmask 130048
    %v783 = vsel %vm781, %v721, 0
    %v786 = vsel %vm781, %v722, 0
    %788 = vmatprep.subr.mxu0 0.0
    %789 = vmatpush1.msra.mxu0 0.0
    %790 = vmatprep.subr.mxu0 0.0
    %791 = vmatpush1.msra.mxu0 0.0
    %792 = vmatprep.subr.mxu0 0.0
    %793 = vmatpush1.msra.mxu0 0.0
    %794 = vmatprep.subr.mxu0 0.0
    %795 = vmatpush1.msra.mxu0 0.0
    %796 = vmatprep.subr.mxu0 0.0
    %797 = vmatpush1.msra.mxu0 0.0
    %798 = vmatprep.subr.mxu0 0.0
    %799 = vmatpush1.msra.mxu0 0.0
    %800 = vmatprep.subr.mxu0 0.0
    %801 = vmatpush1.msra.mxu0 0.0
    %802 = vmatprep.subr.mxu0 0.0
    %803 = vmatpush1.msra.mxu0 0.0
    %804 = vmatprep.subr.mxu0 0.0
    %805 = vmatpush1.msra.mxu0 0.0
    %806 = vmatprep.subr.mxu0 0.0
    %807 = vmatpush1.msra.mxu0 0.0
    %808 = vmatprep.subr.mxu0 0.0
    %809 = vmatpush1.msra.mxu0 0.0
    %810 = vmatprep.subr.mxu0 0.0
    %811 = vmatpush1.msra.mxu0 0.0
    %812 = vmatprep.subr.mxu0 0.0
    %813 = vmatpush1.msra.mxu0 0.0
    %814 = vmatprep.subr.mxu0 0.0
    %815 = vmatpush1.msra.mxu0 0.0
    %816 = vmatprep.subr.mxu0 %v732
    %817 = vmatpush1.msra.mxu0 %v731
    %818 = vmatprep.subr.mxu0 %v724
    %819 = vmatpush1.msra.mxu0 %v723
    %820 = vmatprep.subr.mxu0 0.0
    %821 = vmatpush2.msra.mxu0 0.0
    %822 = vmatprep.subr.mxu0 0.0
    %823 = vmatpush2.msra.mxu0 0.0
    %824 = vmatprep.subr.mxu0 0.0
    %825 = vmatpush2.msra.mxu0 0.0
    %826 = vmatprep.subr.mxu0 0.0
    %827 = vmatpush2.msra.mxu0 0.0
    %828 = vmatprep.subr.mxu0 0.0
    %829 = vmatpush2.msra.mxu0 0.0
    %830 = vmatprep.subr.mxu0 0.0
    %831 = vmatpush2.msra.mxu0 0.0
    %832 = vmatprep.subr.mxu0 0.0
    %833 = vmatpush2.msra.mxu0 0.0
    %834 = vmatprep.subr.mxu0 0.0
    %835 = vmatpush2.msra.mxu0 0.0
    %836 = vmatprep.subr.mxu0 0.0
    %837 = vmatpush2.msra.mxu0 0.0
    %838 = vmatprep.subr.mxu0 0.0
    %839 = vmatpush2.msra.mxu0 0.0
    %840 = vmatprep.subr.mxu0 0.0
    %841 = vmatpush2.msra.mxu0 0.0
    %842 = vmatprep.subr.mxu0 0.0
    %843 = vmatpush2.msra.mxu0 0.0
    %844 = vmatprep.subr.mxu0 0.0
    %845 = vmatpush2.msra.mxu0 0.0
    %846 = vmatprep.subr.mxu0 0.0
    %847 = vmatpush2.msra.mxu0 0.0
    %848 = vmatprep.subr.mxu0 0.0
    %849 = vmatpush2.msra.mxu0 0.0
    %850 = vmatprep.subr.mxu0 0.0
    %851 = vmatpush2.msra.mxu0 0.0
    %852 = vmatprep.mubr.f32.mxu0 0.0
    %853 = vmatmul.mubr.f32.gmra.mxu0 %v783
    %v854 = vpop.f32.mrf.mxu0
    %v855 = vadd.f32 %v744, %v854
    %v856 = vpop.f32.mrf.mxu0
    %v857 = vadd.f32 %v748, %v856
    %858 = vmatprep.mubr.f32.mxu0 0.0
    %859 = vmatmul.mubr.f32.gmra.mxu0 %v786
    %v860 = vpop.f32.mrf.mxu0
    %v861 = vadd.f32 %v744, %v860
    %v862 = vpop.f32.mrf.mxu0
    %v863 = vadd.f32 %v748, %v862
    %864 = vdwg.mxu0
    %865 = vmatprep.subr.mxu0 0.0
    %866 = vmatpush1.msra.mxu0 0.0
    %867 = vmatprep.subr.mxu0 0.0
    %868 = vmatpush1.msra.mxu0 0.0
    %869 = vmatprep.subr.mxu0 0.0
    %870 = vmatpush1.msra.mxu0 0.0
    %871 = vmatprep.subr.mxu0 0.0
    %872 = vmatpush1.msra.mxu0 0.0
    %873 = vmatprep.subr.mxu0 0.0
    %874 = vmatpush1.msra.mxu0 0.0
    %875 = vmatprep.subr.mxu0 0.0
    %876 = vmatpush1.msra.mxu0 0.0
    %877 = vmatprep.subr.mxu0 0.0
    %878 = vmatpush1.msra.mxu0 0.0
    %879 = vmatprep.subr.mxu0 0.0
    %880 = vmatpush1.msra.mxu0 0.0
    %881 = vmatprep.subr.mxu0 0.0
    %882 = vmatpush1.msra.mxu0 0.0
    %883 = vmatprep.subr.mxu0 0.0
    %884 = vmatpush1.msra.mxu0 0.0
    %885 = vmatprep.subr.mxu0 0.0
    %886 = vmatpush1.msra.mxu0 0.0
    %887 = vmatprep.subr.mxu0 0.0
    %888 = vmatpush1.msra.mxu0 0.0
    %889 = vmatprep.subr.mxu0 0.0
    %890 = vmatpush1.msra.mxu0 0.0
    %891 = vmatprep.subr.mxu0 0.0
    %892 = vmatpush1.msra.mxu0 0.0
    %893 = vmatprep.subr.mxu0 %v734
    %894 = vmatpush1.msra.mxu0 %v733
    %895 = vmatprep.subr.mxu0 %v726
    %896 = vmatpush1.msra.mxu0 %v725
    %897 = vmatprep.subr.mxu0 0.0
    %898 = vmatpush2.msra.mxu0 0.0
    %899 = vmatprep.subr.mxu0 0.0
    %900 = vmatpush2.msra.mxu0 0.0
    %901 = vmatprep.subr.mxu0 0.0
    %902 = vmatpush2.msra.mxu0 0.0
    %903 = vmatprep.subr.mxu0 0.0
    %904 = vmatpush2.msra.mxu0 0.0
    %905 = vmatprep.subr.mxu0 0.0
    %906 = vmatpush2.msra.mxu0 0.0
    %907 = vmatprep.subr.mxu0 0.0
    %908 = vmatpush2.msra.mxu0 0.0
    %909 = vmatprep.subr.mxu0 0.0
    %910 = vmatpush2.msra.mxu0 0.0
    %911 = vmatprep.subr.mxu0 0.0
    %912 = vmatpush2.msra.mxu0 0.0
    %913 = vmatprep.subr.mxu0 0.0
    %914 = vmatpush2.msra.mxu0 0.0
    %915 = vmatprep.subr.mxu0 0.0
    %916 = vmatpush2.msra.mxu0 0.0
    %917 = vmatprep.subr.mxu0 0.0
    %918 = vmatpush2.msra.mxu0 0.0
    %919 = vmatprep.subr.mxu0 0.0
    %920 = vmatpush2.msra.mxu0 0.0
    %921 = vmatprep.subr.mxu0 0.0
    %922 = vmatpush2.msra.mxu0 0.0
    %923 = vmatprep.subr.mxu0 0.0
    %924 = vmatpush2.msra.mxu0 0.0
    %925 = vmatprep.subr.mxu0 0.0
    %926 = vmatpush2.msra.mxu0 0.0
    %927 = vmatprep.subr.mxu0 0.0
    %928 = vmatpush2.msra.mxu0 0.0
    %929 = vmatprep.mubr.f32.mxu0 0.0
    %930 = vmatmul.mubr.f32.gmra.mxu0 %v783
    %v931 = vpop.f32.mrf.mxu0
    %v932 = vadd.f32 %v752, %v931
    %v933 = vpop.f32.mrf.mxu0
    %v934 = vadd.f32 %v756, %v933
    %935 = vmatprep.mubr.f32.mxu0 0.0
    %936 = vmatmul.mubr.f32.gmra.mxu0 %v786
    %v937 = vpop.f32.mrf.mxu0
    %v938 = vadd.f32 %v752, %v937
    %v939 = vpop.f32.mrf.mxu0
    %v940 = vadd.f32 %v756, %v939
    %941 = vdwg.mxu0
    %942 = vmatprep.subr.mxu0 0.0
    %943 = vmatpush1.msra.mxu0 0.0
    %944 = vmatprep.subr.mxu0 0.0
    %945 = vmatpush1.msra.mxu0 0.0
    %946 = vmatprep.subr.mxu0 0.0
    %947 = vmatpush1.msra.mxu0 0.0
    %948 = vmatprep.subr.mxu0 0.0
    %949 = vmatpush1.msra.mxu0 0.0
    %950 = vmatprep.subr.mxu0 0.0
    %951 = vmatpush1.msra.mxu0 0.0
    %952 = vmatprep.subr.mxu0 0.0
    %953 = vmatpush1.msra.mxu0 0.0
    %954 = vmatprep.subr.mxu0 0.0
    %955 = vmatpush1.msra.mxu0 0.0
    %956 = vmatprep.subr.mxu0 0.0
    %957 = vmatpush1.msra.mxu0 0.0
    %958 = vmatprep.subr.mxu0 0.0
    %959 = vmatpush1.msra.mxu0 0.0
    %960 = vmatprep.subr.mxu0 0.0
    %961 = vmatpush1.msra.mxu0 0.0
    %962 = vmatprep.subr.mxu0 0.0
    %963 = vmatpush1.msra.mxu0 0.0
    %964 = vmatprep.subr.mxu0 0.0
    %965 = vmatpush1.msra.mxu0 0.0
    %966 = vmatprep.subr.mxu0 0.0
    %967 = vmatpush1.msra.mxu0 0.0
    %968 = vmatprep.subr.mxu0 0.0
    %969 = vmatpush1.msra.mxu0 0.0
    %970 = vmatprep.subr.mxu0 %v736
    %971 = vmatpush1.msra.mxu0 %v735
    %972 = vmatprep.subr.mxu0 %v728
    %973 = vmatpush1.msra.mxu0 %v727
    %974 = vmatprep.subr.mxu0 0.0
    %975 = vmatpush2.msra.mxu0 0.0
    %976 = vmatprep.subr.mxu0 0.0
    %977 = vmatpush2.msra.mxu0 0.0
    %978 = vmatprep.subr.mxu0 0.0
    %979 = vmatpush2.msra.mxu0 0.0
    %980 = vmatprep.subr.mxu0 0.0
    %981 = vmatpush2.msra.mxu0 0.0
    %982 = vmatprep.subr.mxu0 0.0
    %983 = vmatpush2.msra.mxu0 0.0
    %984 = vmatprep.subr.mxu0 0.0
    %985 = vmatpush2.msra.mxu0 0.0
    %986 = vmatprep.subr.mxu0 0.0
    %987 = vmatpush2.msra.mxu0 0.0
    %988 = vmatprep.subr.mxu0 0.0
    %989 = vmatpush2.msra.mxu0 0.0
    %990 = vmatprep.subr.mxu0 0.0
    %991 = vmatpush2.msra.mxu0 0.0
    %992 = vmatprep.subr.mxu0 0.0
    %993 = vmatpush2.msra.mxu0 0.0
    %994 = vmatprep.subr.mxu0 0.0
    %995 = vmatpush2.msra.mxu0 0.0
    %996 = vmatprep.subr.mxu0 0.0
    %997 = vmatpush2.msra.mxu0 0.0
    %998 = vmatprep.subr.mxu0 0.0
    %999 = vmatpush2.msra.mxu0 0.0
    %1000 = vmatprep.subr.mxu0 0.0
    %1001 = vmatpush2.msra.mxu0 0.0
    %1002 = vmatprep.subr.mxu0 0.0
    %1003 = vmatpush2.msra.mxu0 0.0
    %1004 = vmatprep.subr.mxu0 0.0
    %1005 = vmatpush2.msra.mxu0 0.0
    %1006 = vmatprep.mubr.f32.mxu0 0.0
    %1007 = vmatmul.mubr.f32.gmra.mxu0 %v783
    %v1008 = vpop.f32.mrf.mxu0
    %v1009 = vadd.f32 %v760, %v1008
    %v1010 = vpop.f32.mrf.mxu0
    %v1011 = vadd.f32 %v764, %v1010
    %1012 = vmatprep.mubr.f32.mxu0 0.0
    %1013 = vmatmul.mubr.f32.gmra.mxu0 %v786
    %v1014 = vpop.f32.mrf.mxu0
    %v1015 = vadd.f32 %v760, %v1014
    %v1016 = vpop.f32.mrf.mxu0
    %v1017 = vadd.f32 %v764, %v1016
    %1018 = vdwg.mxu0
    %1019 = vmatprep.subr.mxu0 0.0
    %1020 = vmatpush1.msra.mxu0 0.0
    %1021 = vmatprep.subr.mxu0 0.0
    %1022 = vmatpush1.msra.mxu0 0.0
    %1023 = vmatprep.subr.mxu0 0.0
    %1024 = vmatpush1.msra.mxu0 0.0
    %1025 = vmatprep.subr.mxu0 0.0
    %1026 = vmatpush1.msra.mxu0 0.0
    %1027 = vmatprep.subr.mxu0 0.0
    %1028 = vmatpush1.msra.mxu0 0.0
    %1029 = vmatprep.subr.mxu0 0.0
    %1030 = vmatpush1.msra.mxu0 0.0
    %1031 = vmatprep.subr.mxu0 0.0
    %1032 = vmatpush1.msra.mxu0 0.0
    %1033 = vmatprep.subr.mxu0 0.0
    %1034 = vmatpush1.msra.mxu0 0.0
    %1035 = vmatprep.subr.mxu0 0.0
    %1036 = vmatpush1.msra.mxu0 0.0
    %1037 = vmatprep.subr.mxu0 0.0
    %1038 = vmatpush1.msra.mxu0 0.0
    %1039 = vmatprep.subr.mxu0 0.0
    %1040 = vmatpush1.msra.mxu0 0.0
    %1041 = vmatprep.subr.mxu0 0.0
    %1042 = vmatpush1.msra.mxu0 0.0
    %1043 = vmatprep.subr.mxu0 0.0
    %1044 = vmatpush1.msra.mxu0 0.0
    %1045 = vmatprep.subr.mxu0 0.0
    %1046 = vmatpush1.msra.mxu0 0.0
    %1047 = vmatprep.subr.mxu0 %v738
    %1048 = vmatpush1.msra.mxu0 %v737
    %1049 = vmatprep.subr.mxu0 %v730
    %1050 = vmatpush1.msra.mxu0 %v729
    %1051 = vmatprep.subr.mxu0 0.0
    %1052 = vmatpush2.msra.mxu0 0.0
    %1053 = vmatprep.subr.mxu0 0.0
    %1054 = vmatpush2.msra.mxu0 0.0
    %1055 = vmatprep.subr.mxu0 0.0
    %1056 = vmatpush2.msra.mxu0 0.0
    %1057 = vmatprep.subr.mxu0 0.0
    %1058 = vmatpush2.msra.mxu0 0.0
    %1059 = vmatprep.subr.mxu0 0.0
    %1060 = vmatpush2.msra.mxu0 0.0
    %1061 = vmatprep.subr.mxu0 0.0
    %1062 = vmatpush2.msra.mxu0 0.0
    %1063 = vmatprep.subr.mxu0 0.0
    %1064 = vmatpush2.msra.mxu0 0.0
    %1065 = vmatprep.subr.mxu0 0.0
    %1066 = vmatpush2.msra.mxu0 0.0
    %1067 = vmatprep.subr.mxu0 0.0
    %1068 = vmatpush2.msra.mxu0 0.0
    %1069 = vmatprep.subr.mxu0 0.0
    %1070 = vmatpush2.msra.mxu0 0.0
    %1071 = vmatprep.subr.mxu0 0.0
    %1072 = vmatpush2.msra.mxu0 0.0
    %1073 = vmatprep.subr.mxu0 0.0
    %1074 = vmatpush2.msra.mxu0 0.0
    %1075 = vmatprep.subr.mxu0 0.0
    %1076 = vmatpush2.msra.mxu0 0.0
    %1077 = vmatprep.subr.mxu0 0.0
    %1078 = vmatpush2.msra.mxu0 0.0
    %1079 = vmatprep.subr.mxu0 0.0
    %1080 = vmatpush2.msra.mxu0 0.0
    %1081 = vmatprep.subr.mxu0 0.0
    %1082 = vmatpush2.msra.mxu0 0.0
    %1083 = vmatprep.mubr.f32.mxu0 0.0
    %1084 = vmatmul.mubr.f32.gmra.mxu0 %v783
    %v1085 = vpop.f32.mrf.mxu0
    %v1086 = vadd.f32 %v768, %v1085
    %v1087 = vpop.f32.mrf.mxu0
    %v1088 = vadd.f32 %v772, %v1087
    %1089 = vmatprep.mubr.f32.mxu0 0.0
    %1090 = vmatmul.mubr.f32.gmra.mxu0 %v786
    %v1091 = vpop.f32.mrf.mxu0
    %v1092 = vadd.f32 %v768, %v1091
    %v1093 = vpop.f32.mrf.mxu0
    %v1094 = vadd.f32 %v772, %v1093
    %1095 = vdwg.mxu0
    %v1096 = vsub.f32 0.0, %v855
    %v1097 = vsub.f32 0.0, %v857
    %v1098 = vsub.f32 0.0, %v932
    %v1099 = vsub.f32 0.0, %v934
    %v1100 = vsub.f32 0.0, %v1009
    %v1101 = vsub.f32 0.0, %v1011
    %v1102 = vsub.f32 0.0, %v1086
    %v1103 = vsub.f32 0.0, %v1088
    %v1104 = vsub.f32 0.0, %v861
    %v1105 = vsub.f32 0.0, %v863
    %v1106 = vsub.f32 0.0, %v938
    %v1107 = vsub.f32 0.0, %v940
    %v1108 = vsub.f32 0.0, %v1015
    %v1109 = vsub.f32 0.0, %v1017
    %v1110 = vsub.f32 0.0, %v1092
    %v1111 = vsub.f32 0.0, %v1094
    %v1112 = vmul.f32 %v1096, 1.442695
    %v1113 = vpow.pop %v1112
    %v1114 = vmul.f32 %v1097, 1.442695
    %v1115 = vpow.pop %v1114
    %v1116 = vmul.f32 %v1098, 1.442695
    %v1117 = vpow.pop %v1116
    %v1118 = vmul.f32 %v1099, 1.442695
    %v1119 = vpow.pop %v1118
    %v1120 = vmul.f32 %v1100, 1.442695
    %v1121 = vpow.pop %v1120
    %v1122 = vmul.f32 %v1101, 1.442695
    %v1123 = vpow.pop %v1122
    %v1124 = vmul.f32 %v1102, 1.442695
    %v1125 = vpow.pop %v1124
    %v1126 = vmul.f32 %v1103, 1.442695
    %v1127 = vpow.pop %v1126
    %v1128 = vmul.f32 %v1104, 1.442695
    %v1129 = vpow.pop %v1128
    %v1130 = vmul.f32 %v1105, 1.442695
    %v1131 = vpow.pop %v1130
    %v1132 = vmul.f32 %v1106, 1.442695
    %v1133 = vpow.pop %v1132
    %v1134 = vmul.f32 %v1107, 1.442695
    %v1135 = vpow.pop %v1134
    %v1136 = vmul.f32 %v1108, 1.442695
    %v1137 = vpow.pop %v1136
    %v1138 = vmul.f32 %v1109, 1.442695
    %v1139 = vpow.pop %v1138
    %v1140 = vmul.f32 %v1110, 1.442695
    %v1141 = vpow.pop %v1140
    %v1142 = vmul.f32 %v1111, 1.442695
    %v1143 = vpow.pop %v1142
    %v1144 = vadd.f32 %v1113, 1.0
    %v1145 = vadd.f32 %v1115, 1.0
    %v1146 = vadd.f32 %v1117, 1.0
    %v1147 = vadd.f32 %v1119, 1.0
    %v1148 = vadd.f32 %v1121, 1.0
    %v1149 = vadd.f32 %v1123, 1.0
    %v1150 = vadd.f32 %v1125, 1.0
    %v1151 = vadd.f32 %v1127, 1.0
    %v1152 = vadd.f32 %v1129, 1.0
    %v1153 = vadd.f32 %v1131, 1.0
    %v1154 = vadd.f32 %v1133, 1.0
    %v1155 = vadd.f32 %v1135, 1.0
    %v1156 = vadd.f32 %v1137, 1.0
    %v1157 = vadd.f32 %v1139, 1.0
    %v1158 = vadd.f32 %v1141, 1.0
    %v1159 = vadd.f32 %v1143, 1.0
    %v1160 = vrcp.pop %v1144
    %v1161 = vmul.f32 1.0, %v1160
    %v1162 = vrcp.pop %v1145
    %v1163 = vmul.f32 1.0, %v1162
    %v1164 = vrcp.pop %v1146
    %v1165 = vmul.f32 1.0, %v1164
    %v1166 = vrcp.pop %v1147
    %v1167 = vmul.f32 1.0, %v1166
    %v1168 = vrcp.pop %v1148
    %v1169 = vmul.f32 1.0, %v1168
    %v1170 = vrcp.pop %v1149
    %v1171 = vmul.f32 1.0, %v1170
    %v1172 = vrcp.pop %v1150
    %v1173 = vmul.f32 1.0, %v1172
    %v1174 = vrcp.pop %v1151
    %v1175 = vmul.f32 1.0, %v1174
    %v1176 = vrcp.pop %v1152
    %v1177 = vmul.f32 1.0, %v1176
    %v1178 = vrcp.pop %v1153
    %v1179 = vmul.f32 1.0, %v1178
    %v1180 = vrcp.pop %v1154
    %v1181 = vmul.f32 1.0, %v1180
    %v1182 = vrcp.pop %v1155
    %v1183 = vmul.f32 1.0, %v1182
    %v1184 = vrcp.pop %v1156
    %v1185 = vmul.f32 1.0, %v1184
    %v1186 = vrcp.pop %v1157
    %v1187 = vmul.f32 1.0, %v1186
    %v1188 = vrcp.pop %v1158
    %v1189 = vmul.f32 1.0, %v1188
    %v1190 = vrcp.pop %v1159
    %v1191 = vmul.f32 1.0, %v1190
    %v1192 = vmul.f32 %v251, %v1161
    %v1193 = vmul.f32 %v253, %v1163
    %v1194 = vmul.f32 %v328, %v1165
    %v1195 = vmul.f32 %v330, %v1167
    %v1196 = vmul.f32 %v257, %v1177
    %v1197 = vmul.f32 %v259, %v1179
    %v1198 = vmul.f32 %v334, %v1181
    %v1199 = vmul.f32 %v336, %v1183
    %v1200 = vmul.f32 %v1192, 0.35355338
    %v1201 = vmul.f32 %v1193, 0.35355338
    %v1202 = vmul.f32 %v1194, 0.35355338
    %v1203 = vmul.f32 %v1195, 0.35355338
    %v1204 = vmul.f32 %v1196, 0.35355338
    %v1205 = vmul.f32 %v1197, 0.35355338
    %v1206 = vmul.f32 %v1198, 0.35355338
    %v1207 = vmul.f32 %v1199, 0.35355338
    %v1208 = vmul.f32 %v405, %v1169
    %v1209 = vmul.f32 %v407, %v1171
    %v1210 = vmul.f32 %v482, %v1173
    %v1211 = vmul.f32 %v484, %v1175
    %v1212 = vmul.f32 %v411, %v1185
    %v1213 = vmul.f32 %v413, %v1187
    %v1214 = vmul.f32 %v488, %v1189
    %v1215 = vmul.f32 %v490, %v1191
    %v1216 = vld [vmem:[%s1] sm:$0xff]
    %v1217 = vld [vmem:[%s1 + $0x8] sm:$0xff]
    %1218 = vmatprep.subr.mxu0 0.0
    %1219 = vmatpush1.xpose.msra.mxu0 0.0
    %1220 = vmatprep.subr.mxu0 0.0
    %1221 = vmatpush1.xpose.msra.mxu0 0.0
    %1222 = vmatprep.subr.mxu0 0.0
    %1223 = vmatpush1.xpose.msra.mxu0 0.0
    %1224 = vmatprep.subr.mxu0 0.0
    %1225 = vmatpush1.xpose.msra.mxu0 0.0
    %1226 = vmatprep.subr.mxu0 0.0
    %1227 = vmatpush1.xpose.msra.mxu0 0.0
    %1228 = vmatprep.subr.mxu0 0.0
    %1229 = vmatpush1.xpose.msra.mxu0 0.0
    %1230 = vmatprep.subr.mxu0 0.0
    %1231 = vmatpush1.xpose.msra.mxu0 0.0
    %1232 = vmatprep.subr.mxu0 0.0
    %1233 = vmatpush1.xpose.msra.mxu0 0.0
    %1234 = vmatprep.subr.mxu0 0.0
    %1235 = vmatpush1.xpose.msra.mxu0 0.0
    %1236 = vmatprep.subr.mxu0 0.0
    %1237 = vmatpush1.xpose.msra.mxu0 0.0
    %1238 = vmatprep.subr.mxu0 0.0
    %1239 = vmatpush1.xpose.msra.mxu0 0.0
    %1240 = vmatprep.subr.mxu0 0.0
    %1241 = vmatpush1.xpose.msra.mxu0 0.0
    %1242 = vmatprep.subr.mxu0 0.0
    %1243 = vmatpush1.xpose.msra.mxu0 0.0
    %1244 = vmatprep.subr.mxu0 0.0
    %1245 = vmatpush1.xpose.msra.mxu0 0.0
    %1246 = vmatprep.subr.mxu0 0.0
    %1247 = vmatpush1.xpose.msra.mxu0 %v1212
    %1248 = vmatprep.subr.mxu0 0.0
    %1249 = vmatpush1.xpose.msra.mxu0 %v1208
    %1250 = vmatprep.subr.mxu0 0.0
    %1251 = vmatpush2.xpose.msra.mxu0 0.0
    %1252 = vmatprep.subr.mxu0 0.0
    %1253 = vmatpush2.xpose.msra.mxu0 0.0
    %1254 = vmatprep.subr.mxu0 0.0
    %1255 = vmatpush2.xpose.msra.mxu0 0.0
    %1256 = vmatprep.subr.mxu0 0.0
    %1257 = vmatpush2.xpose.msra.mxu0 0.0
    %1258 = vmatprep.subr.mxu0 0.0
    %1259 = vmatpush2.xpose.msra.mxu0 0.0
    %1260 = vmatprep.subr.mxu0 0.0
    %1261 = vmatpush2.xpose.msra.mxu0 0.0
    %1262 = vmatprep.subr.mxu0 0.0
    %1263 = vmatpush2.xpose.msra.mxu0 0.0
    %1264 = vmatprep.subr.mxu0 0.0
    %1265 = vmatpush2.xpose.msra.mxu0 0.0
    %1266 = vmatprep.subr.mxu0 0.0
    %1267 = vmatpush2.xpose.msra.mxu0 0.0
    %1268 = vmatprep.subr.mxu0 0.0
    %1269 = vmatpush2.xpose.msra.mxu0 0.0
    %1270 = vmatprep.subr.mxu0 0.0
    %1271 = vmatpush2.xpose.msra.mxu0 0.0
    %1272 = vmatprep.subr.mxu0 0.0
    %1273 = vmatpush2.xpose.msra.mxu0 0.0
    %1274 = vmatprep.subr.mxu0 0.0
    %1275 = vmatpush2.xpose.msra.mxu0 0.0
    %1276 = vmatprep.subr.mxu0 0.0
    %1277 = vmatpush2.xpose.msra.mxu0 0.0
    %1278 = vmatprep.subr.mxu0 0.0
    %1279 = vmatpush2.xpose.msra.mxu0 0.0
    %1280 = vmatprep.subr.mxu0 0.0
    %1281 = vmatpush2.xpose.msra.mxu0 0.0
    %1282 = vmatprep.mubr.f32.mxu0 0.0
    %1283 = vmatmul.mubr.f32.gmra.mxu0 %v1200
    %v1284 = vpop.f32.mrf.mxu0
    %v1285 = vadd.f32 %v1216, %v1284
    %v1286 = vpop.f32.mrf.mxu0
    %1287 = vmatprep.mubr.f32.mxu0 0.0
    %1288 = vmatmul.mubr.f32.gmra.mxu0 %v1204
    %v1289 = vpop.f32.mrf.mxu0
    %v1290 = vadd.f32 %v1217, %v1289
    %v1291 = vpop.f32.mrf.mxu0
    %1292 = vdwg.mxu0
    %v1293 = vsel %vm781, %v1285, -inf
    %1294 = vmax.xlane.f32.xlu0 %v1293
    %v1295 = vpop.xlane.xlu0 %1294
    %v1296 = vsel %vm781, %v1290, -inf
    %1297 = vmax.xlane.f32.xlu0 %v1296
    %v1298 = vpop.xlane.xlu0 %1297
    %v1299 = vsub.f32 %v1285, %v1295
    %v1300 = vsub.f32 %v1290, %v1298
    %v1301 = vmul.f32 %v1299, 1.442695
    %v1302 = vpow.pop %v1301
    %v1303 = vmul.f32 %v1300, 1.442695
    %v1304 = vpow.pop %v1303
    %v1305 = vsel %vm781, %v1302, 0.0
    %1306 = vadd.xlane.f32.xlu0 %v1305
    %v1307 = vpop.xlane.xlu0 %1306
    %v1308 = vsel %vm781, %v1304, 0.0
    %1309 = vadd.xlane.f32.xlu0 %v1308
    %v1310 = vpop.xlane.xlu0 %1309
    %v1311 = vrcp.pop %v1307
    %v1312 = vmul.f32 %v1302, %v1311
    %v1313 = vrcp.pop %v1310
    %v1314 = vmul.f32 %v1304, %v1313
    %v1316 = vsel %vm781, %v1312, 0
    %v1319 = vsel %vm781, %v1314, 0
    %1321 = vmatprep.subr.mxu0 0.0
    %1322 = vmatpush1.msra.mxu0 0.0
    %1323 = vmatprep.subr.mxu0 0.0
    %1324 = vmatpush1.msra.mxu0 0.0
    %1325 = vmatprep.subr.mxu0 0.0
    %1326 = vmatpush1.msra.mxu0 0.0
    %1327 = vmatprep.subr.mxu0 0.0
    %1328 = vmatpush1.msra.mxu0 0.0
    %1329 = vmatprep.subr.mxu0 0.0
    %1330 = vmatpush1.msra.mxu0 0.0
    %1331 = vmatprep.subr.mxu0 0.0
    %1332 = vmatpush1.msra.mxu0 0.0
    %1333 = vmatprep.subr.mxu0 0.0
    %1334 = vmatpush1.msra.mxu0 0.0
    %1335 = vmatprep.subr.mxu0 0.0
    %1336 = vmatpush1.msra.mxu0 0.0
    %1337 = vmatprep.subr.mxu0 0.0
    %1338 = vmatpush1.msra.mxu0 0.0
    %1339 = vmatprep.subr.mxu0 0.0
    %1340 = vmatpush1.msra.mxu0 0.0
    %1341 = vmatprep.subr.mxu0 0.0
    %1342 = vmatpush1.msra.mxu0 0.0
    %1343 = vmatprep.subr.mxu0 0.0
    %1344 = vmatpush1.msra.mxu0 0.0
    %1345 = vmatprep.subr.mxu0 0.0
    %1346 = vmatpush1.msra.mxu0 0.0
    %1347 = vmatprep.subr.mxu0 0.0
    %1348 = vmatpush1.msra.mxu0 0.0
    %1349 = vmatprep.subr.mxu0 0.0
    %1350 = vmatpush1.msra.mxu0 %v565
    %1351 = vmatprep.subr.mxu0 0.0
    %1352 = vmatpush1.msra.mxu0 %v559
    %1353 = vmatprep.subr.mxu0 0.0
    %1354 = vmatpush2.msra.mxu0 0.0
    %1355 = vmatprep.subr.mxu0 0.0
    %1356 = vmatpush2.msra.mxu0 0.0
    %1357 = vmatprep.subr.mxu0 0.0
    %1358 = vmatpush2.msra.mxu0 0.0
    %1359 = vmatprep.subr.mxu0 0.0
    %1360 = vmatpush2.msra.mxu0 0.0
    %1361 = vmatprep.subr.mxu0 0.0
    %1362 = vmatpush2.msra.mxu0 0.0
    %1363 = vmatprep.subr.mxu0 0.0
    %1364 = vmatpush2.msra.mxu0 0.0
    %1365 = vmatprep.subr.mxu0 0.0
    %1366 = vmatpush2.msra.mxu0 0.0
    %1367 = vmatprep.subr.mxu0 0.0
    %1368 = vmatpush2.msra.mxu0 0.0
    %1369 = vmatprep.subr.mxu0 0.0
    %1370 = vmatpush2.msra.mxu0 0.0
    %1371 = vmatprep.subr.mxu0 0.0
    %1372 = vmatpush2.msra.mxu0 0.0
    %1373 = vmatprep.subr.mxu0 0.0
    %1374 = vmatpush2.msra.mxu0 0.0
    %1375 = vmatprep.subr.mxu0 0.0
    %1376 = vmatpush2.msra.mxu0 0.0
    %1377 = vmatprep.subr.mxu0 0.0
    %1378 = vmatpush2.msra.mxu0 0.0
    %1379 = vmatprep.subr.mxu0 0.0
    %1380 = vmatpush2.msra.mxu0 0.0
    %1381 = vmatprep.subr.mxu0 0.0
    %1382 = vmatpush2.msra.mxu0 0.0
    %1383 = vmatprep.subr.mxu0 0.0
    %1384 = vmatpush2.msra.mxu0 0.0
    %1385 = vmatprep.mubr.f32.mxu0 0.0
    %1386 = vmatmul.mubr.f32.gmra.mxu0 %v1316
    %v1387 = vpop.f32.mrf.mxu0
    %v1388 = vadd.f32 0.0, %v1387
    %v1389 = vpop.f32.mrf.mxu0
    %1390 = vmatprep.mubr.f32.mxu0 0.0
    %1391 = vmatmul.mubr.f32.gmra.mxu0 %v1319
    %v1392 = vpop.f32.mrf.mxu0
    %v1393 = vadd.f32 0.0, %v1392
    %v1394 = vpop.f32.mrf.mxu0
    %1395 = vdwg.mxu0
    %1396 = vmatprep.subr.mxu0 0.0
    %1397 = vmatpush1.xpose.msra.mxu0 0.0
    %1398 = vmatprep.subr.mxu0 0.0
    %1399 = vmatpush1.xpose.msra.mxu0 0.0
    %1400 = vmatprep.subr.mxu0 0.0
    %1401 = vmatpush1.xpose.msra.mxu0 0.0
    %1402 = vmatprep.subr.mxu0 0.0
    %1403 = vmatpush1.xpose.msra.mxu0 0.0
    %1404 = vmatprep.subr.mxu0 0.0
    %1405 = vmatpush1.xpose.msra.mxu0 0.0
    %1406 = vmatprep.subr.mxu0 0.0
    %1407 = vmatpush1.xpose.msra.mxu0 0.0
    %1408 = vmatprep.subr.mxu0 0.0
    %1409 = vmatpush1.xpose.msra.mxu0 0.0
    %1410 = vmatprep.subr.mxu0 0.0
    %1411 = vmatpush1.xpose.msra.mxu0 0.0
    %1412 = vmatprep.subr.mxu0 0.0
    %1413 = vmatpush1.xpose.msra.mxu0 0.0
    %1414 = vmatprep.subr.mxu0 0.0
    %1415 = vmatpush1.xpose.msra.mxu0 0.0
    %1416 = vmatprep.subr.mxu0 0.0
    %1417 = vmatpush1.xpose.msra.mxu0 0.0
    %1418 = vmatprep.subr.mxu0 0.0
    %1419 = vmatpush1.xpose.msra.mxu0 0.0
    %1420 = vmatprep.subr.mxu0 0.0
    %1421 = vmatpush1.xpose.msra.mxu0 0.0
    %1422 = vmatprep.subr.mxu0 0.0
    %1423 = vmatpush1.xpose.msra.mxu0 0.0
    %1424 = vmatprep.subr.mxu0 0.0
    %1425 = vmatpush1.xpose.msra.mxu0 %v1213
    %1426 = vmatprep.subr.mxu0 0.0
    %1427 = vmatpush1.xpose.msra.mxu0 %v1209
    %1428 = vmatprep.subr.mxu0 0.0
    %1429 = vmatpush2.xpose.msra.mxu0 0.0
    %1430 = vmatprep.subr.mxu0 0.0
    %1431 = vmatpush2.xpose.msra.mxu0 0.0
    %1432 = vmatprep.subr.mxu0 0.0
    %1433 = vmatpush2.xpose.msra.mxu0 0.0
    %1434 = vmatprep.subr.mxu0 0.0
    %1435 = vmatpush2.xpose.msra.mxu0 0.0
    %1436 = vmatprep.subr.mxu0 0.0
    %1437 = vmatpush2.xpose.msra.mxu0 0.0
    %1438 = vmatprep.subr.mxu0 0.0
    %1439 = vmatpush2.xpose.msra.mxu0 0.0
    %1440 = vmatprep.subr.mxu0 0.0
    %1441 = vmatpush2.xpose.msra.mxu0 0.0
    %1442 = vmatprep.subr.mxu0 0.0
    %1443 = vmatpush2.xpose.msra.mxu0 0.0
    %1444 = vmatprep.subr.mxu0 0.0
    %1445 = vmatpush2.xpose.msra.mxu0 0.0
    %1446 = vmatprep.subr.mxu0 0.0
    %1447 = vmatpush2.xpose.msra.mxu0 0.0
    %1448 = vmatprep.subr.mxu0 0.0
    %1449 = vmatpush2.xpose.msra.mxu0 0.0
    %1450 = vmatprep.subr.mxu0 0.0
    %1451 = vmatpush2.xpose.msra.mxu0 0.0
    %1452 = vmatprep.subr.mxu0 0.0
    %1453 = vmatpush2.xpose.msra.mxu0 0.0
    %1454 = vmatprep.subr.mxu0 0.0
    %1455 = vmatpush2.xpose.msra.mxu0 0.0
    %1456 = vmatprep.subr.mxu0 0.0
    %1457 = vmatpush2.xpose.msra.mxu0 0.0
    %1458 = vmatprep.subr.mxu0 0.0
    %1459 = vmatpush2.xpose.msra.mxu0 0.0
    %1460 = vmatprep.mubr.f32.mxu0 0.0
    %1461 = vmatmul.mubr.f32.gmra.mxu0 %v1201
    %v1462 = vpop.f32.mrf.mxu0
    %v1463 = vadd.f32 %v1216, %v1462
    %v1464 = vpop.f32.mrf.mxu0
    %1465 = vmatprep.mubr.f32.mxu0 0.0
    %1466 = vmatmul.mubr.f32.gmra.mxu0 %v1205
    %v1467 = vpop.f32.mrf.mxu0
    %v1468 = vadd.f32 %v1217, %v1467
    %v1469 = vpop.f32.mrf.mxu0
    %1470 = vdwg.mxu0
    %v1471 = vsel %vm781, %v1463, -inf
    %1472 = vmax.xlane.f32.xlu0 %v1471
    %v1473 = vpop.xlane.xlu0 %1472
    %v1474 = vsel %vm781, %v1468, -inf
    %1475 = vmax.xlane.f32.xlu0 %v1474
    %v1476 = vpop.xlane.xlu0 %1475
    %v1477 = vsub.f32 %v1463, %v1473
    %v1478 = vsub.f32 %v1468, %v1476
    %v1479 = vmul.f32 %v1477, 1.442695
    %v1480 = vpow.pop %v1479
    %v1481 = vmul.f32 %v1478, 1.442695
    %v1482 = vpow.pop %v1481
    %v1483 = vsel %vm781, %v1480, 0.0
    %1484 = vadd.xlane.f32.xlu0 %v1483
    %v1485 = vpop.xlane.xlu0 %1484
    %v1486 = vsel %vm781, %v1482, 0.0
    %1487 = vadd.xlane.f32.xlu0 %v1486
    %v1488 = vpop.xlane.xlu0 %1487
    %v1489 = vrcp.pop %v1485
    %v1490 = vmul.f32 %v1480, %v1489
    %v1491 = vrcp.pop %v1488
    %v1492 = vmul.f32 %v1482, %v1491
    %v1494 = vsel %vm781, %v1490, 0
    %v1497 = vsel %vm781, %v1492, 0
    %1499 = vmatprep.subr.mxu0 0.0
    %1500 = vmatpush1.msra.mxu0 0.0
    %1501 = vmatprep.subr.mxu0 0.0
    %1502 = vmatpush1.msra.mxu0 0.0
    %1503 = vmatprep.subr.mxu0 0.0
    %1504 = vmatpush1.msra.mxu0 0.0
    %1505 = vmatprep.subr.mxu0 0.0
    %1506 = vmatpush1.msra.mxu0 0.0
    %1507 = vmatprep.subr.mxu0 0.0
    %1508 = vmatpush1.msra.mxu0 0.0
    %1509 = vmatprep.subr.mxu0 0.0
    %1510 = vmatpush1.msra.mxu0 0.0
    %1511 = vmatprep.subr.mxu0 0.0
    %1512 = vmatpush1.msra.mxu0 0.0
    %1513 = vmatprep.subr.mxu0 0.0
    %1514 = vmatpush1.msra.mxu0 0.0
    %1515 = vmatprep.subr.mxu0 0.0
    %1516 = vmatpush1.msra.mxu0 0.0
    %1517 = vmatprep.subr.mxu0 0.0
    %1518 = vmatpush1.msra.mxu0 0.0
    %1519 = vmatprep.subr.mxu0 0.0
    %1520 = vmatpush1.msra.mxu0 0.0
    %1521 = vmatprep.subr.mxu0 0.0
    %1522 = vmatpush1.msra.mxu0 0.0
    %1523 = vmatprep.subr.mxu0 0.0
    %1524 = vmatpush1.msra.mxu0 0.0
    %1525 = vmatprep.subr.mxu0 0.0
    %1526 = vmatpush1.msra.mxu0 0.0
    %1527 = vmatprep.subr.mxu0 0.0
    %1528 = vmatpush1.msra.mxu0 %v567
    %1529 = vmatprep.subr.mxu0 0.0
    %1530 = vmatpush1.msra.mxu0 %v561
    %1531 = vmatprep.subr.mxu0 0.0
    %1532 = vmatpush2.msra.mxu0 0.0
    %1533 = vmatprep.subr.mxu0 0.0
    %1534 = vmatpush2.msra.mxu0 0.0
    %1535 = vmatprep.subr.mxu0 0.0
    %1536 = vmatpush2.msra.mxu0 0.0
    %1537 = vmatprep.subr.mxu0 0.0
    %1538 = vmatpush2.msra.mxu0 0.0
    %1539 = vmatprep.subr.mxu0 0.0
    %1540 = vmatpush2.msra.mxu0 0.0
    %1541 = vmatprep.subr.mxu0 0.0
    %1542 = vmatpush2.msra.mxu0 0.0
    %1543 = vmatprep.subr.mxu0 0.0
    %1544 = vmatpush2.msra.mxu0 0.0
    %1545 = vmatprep.subr.mxu0 0.0
    %1546 = vmatpush2.msra.mxu0 0.0
    %1547 = vmatprep.subr.mxu0 0.0
    %1548 = vmatpush2.msra.mxu0 0.0
    %1549 = vmatprep.subr.mxu0 0.0
    %1550 = vmatpush2.msra.mxu0 0.0
    %1551 = vmatprep.subr.mxu0 0.0
    %1552 = vmatpush2.msra.mxu0 0.0
    %1553 = vmatprep.subr.mxu0 0.0
    %1554 = vmatpush2.msra.mxu0 0.0
    %1555 = vmatprep.subr.mxu0 0.0
    %1556 = vmatpush2.msra.mxu0 0.0
    %1557 = vmatprep.subr.mxu0 0.0
    %1558 = vmatpush2.msra.mxu0 0.0
    %1559 = vmatprep.subr.mxu0 0.0
    %1560 = vmatpush2.msra.mxu0 0.0
    %1561 = vmatprep.subr.mxu0 0.0
    %1562 = vmatpush2.msra.mxu0 0.0
    %1563 = vmatprep.mubr.f32.mxu0 0.0
    %1564 = vmatmul.mubr.f32.gmra.mxu0 %v1494
    %v1565 = vpop.f32.mrf.mxu0
    %v1566 = vadd.f32 0.0, %v1565
    %v1567 = vpop.f32.mrf.mxu0
    %1568 = vmatprep.mubr.f32.mxu0 0.0
    %1569 = vmatmul.mubr.f32.gmra.mxu0 %v1497
    %v1570 = vpop.f32.mrf.mxu0
    %v1571 = vadd.f32 0.0, %v1570
    %v1572 = vpop.f32.mrf.mxu0
    %1573 = vdwg.mxu0
    %1574 = vmatprep.subr.mxu0 0.0
    %1575 = vmatpush1.xpose.msra.mxu0 0.0
    %1576 = vmatprep.subr.mxu0 0.0
    %1577 = vmatpush1.xpose.msra.mxu0 0.0
    %1578 = vmatprep.subr.mxu0 0.0
    %1579 = vmatpush1.xpose.msra.mxu0 0.0
    %1580 = vmatprep.subr.mxu0 0.0
    %1581 = vmatpush1.xpose.msra.mxu0 0.0
    %1582 = vmatprep.subr.mxu0 0.0
    %1583 = vmatpush1.xpose.msra.mxu0 0.0
    %1584 = vmatprep.subr.mxu0 0.0
    %1585 = vmatpush1.xpose.msra.mxu0 0.0
    %1586 = vmatprep.subr.mxu0 0.0
    %1587 = vmatpush1.xpose.msra.mxu0 0.0
    %1588 = vmatprep.subr.mxu0 0.0
    %1589 = vmatpush1.xpose.msra.mxu0 0.0
    %1590 = vmatprep.subr.mxu0 0.0
    %1591 = vmatpush1.xpose.msra.mxu0 0.0
    %1592 = vmatprep.subr.mxu0 0.0
    %1593 = vmatpush1.xpose.msra.mxu0 0.0
    %1594 = vmatprep.subr.mxu0 0.0
    %1595 = vmatpush1.xpose.msra.mxu0 0.0
    %1596 = vmatprep.subr.mxu0 0.0
    %1597 = vmatpush1.xpose.msra.mxu0 0.0
    %1598 = vmatprep.subr.mxu0 0.0
    %1599 = vmatpush1.xpose.msra.mxu0 0.0
    %1600 = vmatprep.subr.mxu0 0.0
    %1601 = vmatpush1.xpose.msra.mxu0 0.0
    %1602 = vmatprep.subr.mxu0 0.0
    %1603 = vmatpush1.xpose.msra.mxu0 %v1214
    %1604 = vmatprep.subr.mxu0 0.0
    %1605 = vmatpush1.xpose.msra.mxu0 %v1210
    %1606 = vmatprep.subr.mxu0 0.0
    %1607 = vmatpush2.xpose.msra.mxu0 0.0
    %1608 = vmatprep.subr.mxu0 0.0
    %1609 = vmatpush2.xpose.msra.mxu0 0.0
    %1610 = vmatprep.subr.mxu0 0.0
    %1611 = vmatpush2.xpose.msra.mxu0 0.0
    %1612 = vmatprep.subr.mxu0 0.0
    %1613 = vmatpush2.xpose.msra.mxu0 0.0
    %1614 = vmatprep.subr.mxu0 0.0
    %1615 = vmatpush2.xpose.msra.mxu0 0.0
    %1616 = vmatprep.subr.mxu0 0.0
    %1617 = vmatpush2.xpose.msra.mxu0 0.0
    %1618 = vmatprep.subr.mxu0 0.0
    %1619 = vmatpush2.xpose.msra.mxu0 0.0
    %1620 = vmatprep.subr.mxu0 0.0
    %1621 = vmatpush2.xpose.msra.mxu0 0.0
    %1622 = vmatprep.subr.mxu0 0.0
    %1623 = vmatpush2.xpose.msra.mxu0 0.0
    %1624 = vmatprep.subr.mxu0 0.0
    %1625 = vmatpush2.xpose.msra.mxu0 0.0
    %1626 = vmatprep.subr.mxu0 0.0
    %1627 = vmatpush2.xpose.msra.mxu0 0.0
    %1628 = vmatprep.subr.mxu0 0.0
    %1629 = vmatpush2.xpose.msra.mxu0 0.0
    %1630 = vmatprep.subr.mxu0 0.0
    %1631 = vmatpush2.xpose.msra.mxu0 0.0
    %1632 = vmatprep.subr.mxu0 0.0
    %1633 = vmatpush2.xpose.msra.mxu0 0.0
    %1634 = vmatprep.subr.mxu0 0.0
    %1635 = vmatpush2.xpose.msra.mxu0 0.0
    %1636 = vmatprep.subr.mxu0 0.0
    %1637 = vmatpush2.xpose.msra.mxu0 0.0
    %1638 = vmatprep.mubr.f32.mxu0 0.0
    %1639 = vmatmul.mubr.f32.gmra.mxu0 %v1202
    %v1640 = vpop.f32.mrf.mxu0
    %v1641 = vadd.f32 %v1216, %v1640
    %v1642 = vpop.f32.mrf.mxu0
    %1643 = vmatprep.mubr.f32.mxu0 0.0
    %1644 = vmatmul.mubr.f32.gmra.mxu0 %v1206
    %v1645 = vpop.f32.mrf.mxu0
    %v1646 = vadd.f32 %v1217, %v1645
    %v1647 = vpop.f32.mrf.mxu0
    %1648 = vdwg.mxu0
    %v1649 = vsel %vm781, %v1641, -inf
    %1650 = vmax.xlane.f32.xlu0 %v1649
    %v1651 = vpop.xlane.xlu0 %1650
    %v1652 = vsel %vm781, %v1646, -inf
    %1653 = vmax.xlane.f32.xlu0 %v1652
    %v1654 = vpop.xlane.xlu0 %1653
    %v1655 = vsub.f32 %v1641, %v1651
    %v1656 = vsub.f32 %v1646, %v1654
    %v1657 = vmul.f32 %v1655, 1.442695
    %v1658 = vpow.pop %v1657
    %v1659 = vmul.f32 %v1656, 1.442695
    %v1660 = vpow.pop %v1659
    %v1661 = vsel %vm781, %v1658, 0.0
    %1662 = vadd.xlane.f32.xlu0 %v1661
    %v1663 = vpop.xlane.xlu0 %1662
    %v1664 = vsel %vm781, %v1660, 0.0
    %1665 = vadd.xlane.f32.xlu0 %v1664
    %v1666 = vpop.xlane.xlu0 %1665
    %v1667 = vrcp.pop %v1663
    %v1668 = vmul.f32 %v1658, %v1667
    %v1669 = vrcp.pop %v1666
    %v1670 = vmul.f32 %v1660, %v1669
    %v1672 = vsel %vm781, %v1668, 0
    %v1675 = vsel %vm781, %v1670, 0
    %1677 = vmatprep.subr.mxu0 0.0
    %1678 = vmatpush1.msra.mxu0 0.0
    %1679 = vmatprep.subr.mxu0 0.0
    %1680 = vmatpush1.msra.mxu0 0.0
    %1681 = vmatprep.subr.mxu0 0.0
    %1682 = vmatpush1.msra.mxu0 0.0
    %1683 = vmatprep.subr.mxu0 0.0
    %1684 = vmatpush1.msra.mxu0 0.0
    %1685 = vmatprep.subr.mxu0 0.0
    %1686 = vmatpush1.msra.mxu0 0.0
    %1687 = vmatprep.subr.mxu0 0.0
    %1688 = vmatpush1.msra.mxu0 0.0
    %1689 = vmatprep.subr.mxu0 0.0
    %1690 = vmatpush1.msra.mxu0 0.0
    %1691 = vmatprep.subr.mxu0 0.0
    %1692 = vmatpush1.msra.mxu0 0.0
    %1693 = vmatprep.subr.mxu0 0.0
    %1694 = vmatpush1.msra.mxu0 0.0
    %1695 = vmatprep.subr.mxu0 0.0
    %1696 = vmatpush1.msra.mxu0 0.0
    %1697 = vmatprep.subr.mxu0 0.0
    %1698 = vmatpush1.msra.mxu0 0.0
    %1699 = vmatprep.subr.mxu0 0.0
    %1700 = vmatpush1.msra.mxu0 0.0
    %1701 = vmatprep.subr.mxu0 0.0
    %1702 = vmatpush1.msra.mxu0 0.0
    %1703 = vmatprep.subr.mxu0 0.0
    %1704 = vmatpush1.msra.mxu0 0.0
    %1705 = vmatprep.subr.mxu0 0.0
    %1706 = vmatpush1.msra.mxu0 %v642
    %1707 = vmatprep.subr.mxu0 0.0
    %1708 = vmatpush1.msra.mxu0 %v636
    %1709 = vmatprep.subr.mxu0 0.0
    %1710 = vmatpush2.msra.mxu0 0.0
    %1711 = vmatprep.subr.mxu0 0.0
    %1712 = vmatpush2.msra.mxu0 0.0
    %1713 = vmatprep.subr.mxu0 0.0
    %1714 = vmatpush2.msra.mxu0 0.0
    %1715 = vmatprep.subr.mxu0 0.0
    %1716 = vmatpush2.msra.mxu0 0.0
    %1717 = vmatprep.subr.mxu0 0.0
    %1718 = vmatpush2.msra.mxu0 0.0
    %1719 = vmatprep.subr.mxu0 0.0
    %1720 = vmatpush2.msra.mxu0 0.0
    %1721 = vmatprep.subr.mxu0 0.0
    %1722 = vmatpush2.msra.mxu0 0.0
    %1723 = vmatprep.subr.mxu0 0.0
    %1724 = vmatpush2.msra.mxu0 0.0
    %1725 = vmatprep.subr.mxu0 0.0
    %1726 = vmatpush2.msra.mxu0 0.0
    %1727 = vmatprep.subr.mxu0 0.0
    %1728 = vmatpush2.msra.mxu0 0.0
    %1729 = vmatprep.subr.mxu0 0.0
    %1730 = vmatpush2.msra.mxu0 0.0
    %1731 = vmatprep.subr.mxu0 0.0
    %1732 = vmatpush2.msra.mxu0 0.0
    %1733 = vmatprep.subr.mxu0 0.0
    %1734 = vmatpush2.msra.mxu0 0.0
    %1735 = vmatprep.subr.mxu0 0.0
    %1736 = vmatpush2.msra.mxu0 0.0
    %1737 = vmatprep.subr.mxu0 0.0
    %1738 = vmatpush2.msra.mxu0 0.0
    %1739 = vmatprep.subr.mxu0 0.0
    %1740 = vmatpush2.msra.mxu0 0.0
    %1741 = vmatprep.mubr.f32.mxu0 0.0
    %1742 = vmatmul.mubr.f32.gmra.mxu0 %v1672
    %v1743 = vpop.f32.mrf.mxu0
    %v1744 = vadd.f32 0.0, %v1743
    %v1745 = vpop.f32.mrf.mxu0
    %1746 = vmatprep.mubr.f32.mxu0 0.0
    %1747 = vmatmul.mubr.f32.gmra.mxu0 %v1675
    %v1748 = vpop.f32.mrf.mxu0
    %v1749 = vadd.f32 0.0, %v1748
    %v1750 = vpop.f32.mrf.mxu0
    %1751 = vdwg.mxu0
    %1752 = vmatprep.subr.mxu0 0.0
    %1753 = vmatpush1.xpose.msra.mxu0 0.0
    %1754 = vmatprep.subr.mxu0 0.0
    %1755 = vmatpush1.xpose.msra.mxu0 0.0
    %1756 = vmatprep.subr.mxu0 0.0
    %1757 = vmatpush1.xpose.msra.mxu0 0.0
    %1758 = vmatprep.subr.mxu0 0.0
    %1759 = vmatpush1.xpose.msra.mxu0 0.0
    %1760 = vmatprep.subr.mxu0 0.0
    %1761 = vmatpush1.xpose.msra.mxu0 0.0
    %1762 = vmatprep.subr.mxu0 0.0
    %1763 = vmatpush1.xpose.msra.mxu0 0.0
    %1764 = vmatprep.subr.mxu0 0.0
    %1765 = vmatpush1.xpose.msra.mxu0 0.0
    %1766 = vmatprep.subr.mxu0 0.0
    %1767 = vmatpush1.xpose.msra.mxu0 0.0
    %1768 = vmatprep.subr.mxu0 0.0
    %1769 = vmatpush1.xpose.msra.mxu0 0.0
    %1770 = vmatprep.subr.mxu0 0.0
    %1771 = vmatpush1.xpose.msra.mxu0 0.0
    %1772 = vmatprep.subr.mxu0 0.0
    %1773 = vmatpush1.xpose.msra.mxu0 0.0
    %1774 = vmatprep.subr.mxu0 0.0
    %1775 = vmatpush1.xpose.msra.mxu0 0.0
    %1776 = vmatprep.subr.mxu0 0.0
    %1777 = vmatpush1.xpose.msra.mxu0 0.0
    %1778 = vmatprep.subr.mxu0 0.0
    %1779 = vmatpush1.xpose.msra.mxu0 0.0
    %1780 = vmatprep.subr.mxu0 0.0
    %1781 = vmatpush1.xpose.msra.mxu0 %v1215
    %1782 = vmatprep.subr.mxu0 0.0
    %1783 = vmatpush1.xpose.msra.mxu0 %v1211
    %1784 = vmatprep.subr.mxu0 0.0
    %1785 = vmatpush2.xpose.msra.mxu0 0.0
    %1786 = vmatprep.subr.mxu0 0.0
    %1787 = vmatpush2.xpose.msra.mxu0 0.0
    %1788 = vmatprep.subr.mxu0 0.0
    %1789 = vmatpush2.xpose.msra.mxu0 0.0
    %1790 = vmatprep.subr.mxu0 0.0
    %1791 = vmatpush2.xpose.msra.mxu0 0.0
    %1792 = vmatprep.subr.mxu0 0.0
    %1793 = vmatpush2.xpose.msra.mxu0 0.0
    %1794 = vmatprep.subr.mxu0 0.0
    %1795 = vmatpush2.xpose.msra.mxu0 0.0
    %1796 = vmatprep.subr.mxu0 0.0
    %1797 = vmatpush2.xpose.msra.mxu0 0.0
    %1798 = vmatprep.subr.mxu0 0.0
    %1799 = vmatpush2.xpose.msra.mxu0 0.0
    %1800 = vmatprep.subr.mxu0 0.0
    %1801 = vmatpush2.xpose.msra.mxu0 0.0
    %1802 = vmatprep.subr.mxu0 0.0
    %1803 = vmatpush2.xpose.msra.mxu0 0.0
    %1804 = vmatprep.subr.mxu0 0.0
    %1805 = vmatpush2.xpose.msra.mxu0 0.0
    %1806 = vmatprep.subr.mxu0 0.0
    %1807 = vmatpush2.xpose.msra.mxu0 0.0
    %1808 = vmatprep.subr.mxu0 0.0
    %1809 = vmatpush2.xpose.msra.mxu0 0.0
    %1810 = vmatprep.subr.mxu0 0.0
    %1811 = vmatpush2.xpose.msra.mxu0 0.0
    %1812 = vmatprep.subr.mxu0 0.0
    %1813 = vmatpush2.xpose.msra.mxu0 0.0
    %1814 = vmatprep.subr.mxu0 0.0
    %1815 = vmatpush2.xpose.msra.mxu0 0.0
    %1816 = vmatprep.mubr.f32.mxu0 0.0
    %1817 = vmatmul.mubr.f32.gmra.mxu0 %v1203
    %v1818 = vpop.f32.mrf.mxu0
    %v1819 = vadd.f32 %v1216, %v1818
    %v1820 = vpop.f32.mrf.mxu0
    %1821 = vmatprep.mubr.f32.mxu0 0.0
    %1822 = vmatmul.mubr.f32.gmra.mxu0 %v1207
    %v1823 = vpop.f32.mrf.mxu0
    %v1824 = vadd.f32 %v1217, %v1823
    %v1825 = vpop.f32.mrf.mxu0
    %1826 = vdwg.mxu0
    %v1827 = vsel %vm781, %v1819, -inf
    %1828 = vmax.xlane.f32.xlu0 %v1827
    %v1829 = vpop.xlane.xlu0 %1828
    %v1830 = vsel %vm781, %v1824, -inf
    %1831 = vmax.xlane.f32.xlu0 %v1830
    %v1832 = vpop.xlane.xlu0 %1831
    %v1833 = vsub.f32 %v1819, %v1829
    %v1834 = vsub.f32 %v1824, %v1832
    %v1835 = vmul.f32 %v1833, 1.442695
    %v1836 = vpow.pop %v1835
    %v1837 = vmul.f32 %v1834, 1.442695
    %v1838 = vpow.pop %v1837
    %v1839 = vsel %vm781, %v1836, 0.0
    %1840 = vadd.xlane.f32.xlu0 %v1839
    %v1841 = vpop.xlane.xlu0 %1840
    %v1842 = vsel %vm781, %v1838, 0.0
    %1843 = vadd.xlane.f32.xlu0 %v1842
    %v1844 = vpop.xlane.xlu0 %1843
    %v1845 = vrcp.pop %v1841
    %v1846 = vmul.f32 %v1836, %v1845
    %v1847 = vrcp.pop %v1844
    %v1848 = vmul.f32 %v1838, %v1847
    %v1850 = vsel %vm781, %v1846, 0
    %v1853 = vsel %vm781, %v1848, 0
    %1855 = vmatprep.subr.mxu0 0.0
    %1856 = vmatpush1.msra.mxu0 0.0
    %1857 = vmatprep.subr.mxu0 0.0
    %1858 = vmatpush1.msra.mxu0 0.0
    %1859 = vmatprep.subr.mxu0 0.0
    %1860 = vmatpush1.msra.mxu0 0.0
    %1861 = vmatprep.subr.mxu0 0.0
    %1862 = vmatpush1.msra.mxu0 0.0
    %1863 = vmatprep.subr.mxu0 0.0
    %1864 = vmatpush1.msra.mxu0 0.0
    %1865 = vmatprep.subr.mxu0 0.0
    %1866 = vmatpush1.msra.mxu0 0.0
    %1867 = vmatprep.subr.mxu0 0.0
    %1868 = vmatpush1.msra.mxu0 0.0
    %1869 = vmatprep.subr.mxu0 0.0
    %1870 = vmatpush1.msra.mxu0 0.0
    %1871 = vmatprep.subr.mxu0 0.0
    %1872 = vmatpush1.msra.mxu0 0.0
    %1873 = vmatprep.subr.mxu0 0.0
    %1874 = vmatpush1.msra.mxu0 0.0
    %1875 = vmatprep.subr.mxu0 0.0
    %1876 = vmatpush1.msra.mxu0 0.0
    %1877 = vmatprep.subr.mxu0 0.0
    %1878 = vmatpush1.msra.mxu0 0.0
    %1879 = vmatprep.subr.mxu0 0.0
    %1880 = vmatpush1.msra.mxu0 0.0
    %1881 = vmatprep.subr.mxu0 0.0
    %1882 = vmatpush1.msra.mxu0 0.0
    %1883 = vmatprep.subr.mxu0 0.0
    %1884 = vmatpush1.msra.mxu0 %v644
    %1885 = vmatprep.subr.mxu0 0.0
    %1886 = vmatpush1.msra.mxu0 %v638
    %1887 = vmatprep.subr.mxu0 0.0
    %1888 = vmatpush2.msra.mxu0 0.0
    %1889 = vmatprep.subr.mxu0 0.0
    %1890 = vmatpush2.msra.mxu0 0.0
    %1891 = vmatprep.subr.mxu0 0.0
    %1892 = vmatpush2.msra.mxu0 0.0
    %1893 = vmatprep.subr.mxu0 0.0
    %1894 = vmatpush2.msra.mxu0 0.0
    %1895 = vmatprep.subr.mxu0 0.0
    %1896 = vmatpush2.msra.mxu0 0.0
    %1897 = vmatprep.subr.mxu0 0.0
    %1898 = vmatpush2.msra.mxu0 0.0
    %1899 = vmatprep.subr.mxu0 0.0
    %1900 = vmatpush2.msra.mxu0 0.0
    %1901 = vmatprep.subr.mxu0 0.0
    %1902 = vmatpush2.msra.mxu0 0.0
    %1903 = vmatprep.subr.mxu0 0.0
    %1904 = vmatpush2.msra.mxu0 0.0
    %1905 = vmatprep.subr.mxu0 0.0
    %1906 = vmatpush2.msra.mxu0 0.0
    %1907 = vmatprep.subr.mxu0 0.0
    %1908 = vmatpush2.msra.mxu0 0.0
    %1909 = vmatprep.subr.mxu0 0.0
    %1910 = vmatpush2.msra.mxu0 0.0
    %1911 = vmatprep.subr.mxu0 0.0
    %1912 = vmatpush2.msra.mxu0 0.0
    %1913 = vmatprep.subr.mxu0 0.0
    %1914 = vmatpush2.msra.mxu0 0.0
    %1915 = vmatprep.subr.mxu0 0.0
    %1916 = vmatpush2.msra.mxu0 0.0
    %1917 = vmatprep.subr.mxu0 0.0
    %1918 = vmatpush2.msra.mxu0 0.0
    %1919 = vmatprep.mubr.f32.mxu0 0.0
    %1920 = vmatmul.mubr.f32.gmra.mxu0 %v1850
    %v1921 = vpop.f32.mrf.mxu0
    %v1922 = vadd.f32 0.0, %v1921
    %v1923 = vpop.f32.mrf.mxu0
    %1924 = vmatprep.mubr.f32.mxu0 0.0
    %1925 = vmatmul.mubr.f32.gmra.mxu0 %v1853
    %v1926 = vpop.f32.mrf.mxu0
    %v1927 = vadd.f32 0.0, %v1926
    %v1928 = vpop.f32.mrf.mxu0
    %1929 = vdwg.mxu0
    %v1930 = vld [vmem:[%s6] sm:$0xff]
    %v1931 = vld [vmem:[%s6 + $0x8] sm:$0xff]
    %v1932 = vld [vmem:[%s6 + $0x10] sm:$0xff]
    %v1933 = vld [vmem:[%s6 + $0x18] sm:$0xff]
    %v1934 = vld [vmem:[%s6 + $0x20] sm:$0xff]
    %v1935 = vld [vmem:[%s6 + $0x28] sm:$0xff]
    %v1936 = vld [vmem:[%s6 + $0x30] sm:$0xff]
    %v1937 = vld [vmem:[%s6 + $0x38] sm:$0xff]
    %v1938 = vld [vmem:[%s6 + $0x40] sm:$0xff]
    %v1939 = vld [vmem:[%s6 + $0x48] sm:$0xff]
    %v1940 = vld [vmem:[%s6 + $0x50] sm:$0xff]
    %v1941 = vld [vmem:[%s6 + $0x58] sm:$0xff]
    %v1942 = vld [vmem:[%s6 + $0x60] sm:$0xff]
    %v1943 = vld [vmem:[%s6 + $0x68] sm:$0xff]
    %v1944 = vld [vmem:[%s6 + $0x70] sm:$0xff]
    %v1945 = vld [vmem:[%s6 + $0x78] sm:$0xff]
    %v1946 = vld [vmem:[%s6 + $0x80] sm:$0xff]
    %v1947 = vld [vmem:[%s6 + $0x88] sm:$0xff]
    %v1948 = vld [vmem:[%s6 + $0x90] sm:$0xff]
    %v1949 = vld [vmem:[%s6 + $0x98] sm:$0xff]
    %v1950 = vld [vmem:[%s6 + $0xa0] sm:$0xff]
    %v1951 = vld [vmem:[%s6 + $0xa8] sm:$0xff]
    %v1952 = vld [vmem:[%s6 + $0xb0] sm:$0xff]
    %v1953 = vld [vmem:[%s6 + $0xb8] sm:$0xff]
    %v1954 = vld [vmem:[%s6 + $0xc0] sm:$0xff]
    %v1955 = vld [vmem:[%s6 + $0xc8] sm:$0xff]
    %v1956 = vld [vmem:[%s6 + $0xd0] sm:$0xff]
    %v1957 = vld [vmem:[%s6 + $0xd8] sm:$0xff]
    %v1958 = vld [vmem:[%s6 + $0xe0] sm:$0xff]
    %v1959 = vld [vmem:[%s6 + $0xe8] sm:$0xff]
    %v1960 = vld [vmem:[%s6 + $0xf0] sm:$0xff]
    %v1961 = vld [vmem:[%s6 + $0xf8] sm:$0xff]
    %v1962 = vld [vmem:[%s6 + $0x100] sm:$0xff]
    %v1963 = vld [vmem:[%s6 + $0x108] sm:$0xff]
    %v1964 = vld [vmem:[%s6 + $0x110] sm:$0xff]
    %v1965 = vld [vmem:[%s6 + $0x118] sm:$0xff]
    %v1966 = vld [vmem:[%s6 + $0x120] sm:$0xff]
    %v1967 = vld [vmem:[%s6 + $0x128] sm:$0xff]
    %v1968 = vld [vmem:[%s6 + $0x130] sm:$0xff]
    %v1969 = vld [vmem:[%s6 + $0x138] sm:$0xff]
    %v1970 = vld [vmem:[%s6 + $0x140] sm:$0xff]
    %v1971 = vld [vmem:[%s6 + $0x148] sm:$0xff]
    %v1972 = vld [vmem:[%s6 + $0x150] sm:$0xff]
    %v1973 = vld [vmem:[%s6 + $0x158] sm:$0xff]
    %v1974 = vld [vmem:[%s6 + $0x160] sm:$0xff]
    %v1975 = vld [vmem:[%s6 + $0x168] sm:$0xff]
    %v1976 = vld [vmem:[%s6 + $0x170] sm:$0xff]
    %v1977 = vld [vmem:[%s6 + $0x178] sm:$0xff]
    %v1978 = vld [vmem:[%s6 + $0x180] sm:$0xff]
    %v1979 = vld [vmem:[%s6 + $0x188] sm:$0xff]
    %v1980 = vld [vmem:[%s6 + $0x190] sm:$0xff]
    %v1981 = vld [vmem:[%s6 + $0x198] sm:$0xff]
    %v1982 = vld [vmem:[%s6 + $0x1a0] sm:$0xff]
    %v1983 = vld [vmem:[%s6 + $0x1a8] sm:$0xff]
    %v1984 = vld [vmem:[%s6 + $0x1b0] sm:$0xff]
    %v1985 = vld [vmem:[%s6 + $0x1b8] sm:$0xff]
    %v1986 = vld [vmem:[%s6 + $0x1c0] sm:$0xff]
    %v1987 = vld [vmem:[%s6 + $0x1c8] sm:$0xff]
    %v1988 = vld [vmem:[%s6 + $0x1d0] sm:$0xff]
    %v1989 = vld [vmem:[%s6 + $0x1d8] sm:$0xff]
    %v1990 = vld [vmem:[%s6 + $0x1e0] sm:$0xff]
    %v1991 = vld [vmem:[%s6 + $0x1e8] sm:$0xff]
    %v1992 = vld [vmem:[%s6 + $0x1f0] sm:$0xff]
    %v1993 = vld [vmem:[%s6 + $0x1f8] sm:$0xff]
    %v1994 = vld [vmem:[%s7] sm:$0x1]
    %v1996 = vlaneseq
    %v1997 = vshrl.u32 %v1996, 7
    %v1998 = vsub.s32 0, %v1997
    %v1999 = vrot.slane %v1994, %v1998
    %2001 = vmatprep.subr.mxu0 0.0
    %2002 = vmatpush1.msra.mxu0 %v1945
    %2003 = vmatprep.subr.mxu0 0.0
    %2004 = vmatpush1.msra.mxu0 %v1944
    %2005 = vmatprep.subr.mxu0 0.0
    %2006 = vmatpush1.msra.mxu0 %v1943
    %2007 = vmatprep.subr.mxu0 0.0
    %2008 = vmatpush1.msra.mxu0 %v1942
    %2009 = vmatprep.subr.mxu0 0.0
    %2010 = vmatpush1.msra.mxu0 %v1941
    %2011 = vmatprep.subr.mxu0 0.0
    %2012 = vmatpush1.msra.mxu0 %v1940
    %2013 = vmatprep.subr.mxu0 0.0
    %2014 = vmatpush1.msra.mxu0 %v1939
    %2015 = vmatprep.subr.mxu0 0.0
    %2016 = vmatpush1.msra.mxu0 %v1938
    %2017 = vmatprep.subr.mxu0 0.0
    %2018 = vmatpush1.msra.mxu0 %v1937
    %2019 = vmatprep.subr.mxu0 0.0
    %2020 = vmatpush1.msra.mxu0 %v1936
    %2021 = vmatprep.subr.mxu0 0.0
    %2022 = vmatpush1.msra.mxu0 %v1935
    %2023 = vmatprep.subr.mxu0 0.0
    %2024 = vmatpush1.msra.mxu0 %v1934
    %2025 = vmatprep.subr.mxu0 0.0
    %2026 = vmatpush1.msra.mxu0 %v1933
    %2027 = vmatprep.subr.mxu0 0.0
    %2028 = vmatpush1.msra.mxu0 %v1932
    %2029 = vmatprep.subr.mxu0 0.0
    %2030 = vmatpush1.msra.mxu0 %v1931
    %2031 = vmatprep.subr.mxu0 0.0
    %2032 = vmatpush1.msra.mxu0 %v1930
    %2033 = vmatprep.subr.mxu0 0.0
    %2034 = vmatpush2.msra.mxu0 %v1961
    %2035 = vmatprep.subr.mxu0 0.0
    %2036 = vmatpush2.msra.mxu0 %v1960
    %2037 = vmatprep.subr.mxu0 0.0
    %2038 = vmatpush2.msra.mxu0 %v1959
    %2039 = vmatprep.subr.mxu0 0.0
    %2040 = vmatpush2.msra.mxu0 %v1958
    %2041 = vmatprep.subr.mxu0 0.0
    %2042 = vmatpush2.msra.mxu0 %v1957
    %2043 = vmatprep.subr.mxu0 0.0
    %2044 = vmatpush2.msra.mxu0 %v1956
    %2045 = vmatprep.subr.mxu0 0.0
    %2046 = vmatpush2.msra.mxu0 %v1955
    %2047 = vmatprep.subr.mxu0 0.0
    %2048 = vmatpush2.msra.mxu0 %v1954
    %2049 = vmatprep.subr.mxu0 0.0
    %2050 = vmatpush2.msra.mxu0 %v1953
    %2051 = vmatprep.subr.mxu0 0.0
    %2052 = vmatpush2.msra.mxu0 %v1952
    %2053 = vmatprep.subr.mxu0 0.0
    %2054 = vmatpush2.msra.mxu0 %v1951
    %2055 = vmatprep.subr.mxu0 0.0
    %2056 = vmatpush2.msra.mxu0 %v1950
    %2057 = vmatprep.subr.mxu0 0.0
    %2058 = vmatpush2.msra.mxu0 %v1949
    %2059 = vmatprep.subr.mxu0 0.0
    %2060 = vmatpush2.msra.mxu0 %v1948
    %2061 = vmatprep.subr.mxu0 0.0
    %2062 = vmatpush2.msra.mxu0 %v1947
    %2063 = vmatprep.subr.mxu0 0.0
    %2064 = vmatpush2.msra.mxu0 %v1946
    %2065 = vmatprep.mubr.f32.mxu0 %v1566
    %2066 = vmatmul.mubr.f32.gmra.mxu0 %v1388
    %v2067 = vpop.f32.mrf.mxu0
    %v2068 = vadd.f32 %v1999, %v2067
    %v2069 = vpop.f32.mrf.mxu0
    %2070 = vmatprep.mubr.f32.mxu0 %v1571
    %2071 = vmatmul.mubr.f32.gmra.mxu0 %v1393
    %v2072 = vpop.f32.mrf.mxu0
    %v2073 = vadd.f32 %v1999, %v2072
    %v2074 = vpop.f32.mrf.mxu0
    %2075 = vdwg.mxu0
    %2076 = vmatprep.subr.mxu0 0.0
    %2077 = vmatpush1.msra.mxu0 %v1977
    %2078 = vmatprep.subr.mxu0 0.0
    %2079 = vmatpush1.msra.mxu0 %v1976
    %2080 = vmatprep.subr.mxu0 0.0
    %2081 = vmatpush1.msra.mxu0 %v1975
    %2082 = vmatprep.subr.mxu0 0.0
    %2083 = vmatpush1.msra.mxu0 %v1974
    %2084 = vmatprep.subr.mxu0 0.0
    %2085 = vmatpush1.msra.mxu0 %v1973
    %2086 = vmatprep.subr.mxu0 0.0
    %2087 = vmatpush1.msra.mxu0 %v1972
    %2088 = vmatprep.subr.mxu0 0.0
    %2089 = vmatpush1.msra.mxu0 %v1971
    %2090 = vmatprep.subr.mxu0 0.0
    %2091 = vmatpush1.msra.mxu0 %v1970
    %2092 = vmatprep.subr.mxu0 0.0
    %2093 = vmatpush1.msra.mxu0 %v1969
    %2094 = vmatprep.subr.mxu0 0.0
    %2095 = vmatpush1.msra.mxu0 %v1968
    %2096 = vmatprep.subr.mxu0 0.0
    %2097 = vmatpush1.msra.mxu0 %v1967
    %2098 = vmatprep.subr.mxu0 0.0
    %2099 = vmatpush1.msra.mxu0 %v1966
    %2100 = vmatprep.subr.mxu0 0.0
    %2101 = vmatpush1.msra.mxu0 %v1965
    %2102 = vmatprep.subr.mxu0 0.0
    %2103 = vmatpush1.msra.mxu0 %v1964
    %2104 = vmatprep.subr.mxu0 0.0
    %2105 = vmatpush1.msra.mxu0 %v1963
    %2106 = vmatprep.subr.mxu0 0.0
    %2107 = vmatpush1.msra.mxu0 %v1962
    %2108 = vmatprep.subr.mxu0 0.0
    %2109 = vmatpush2.msra.mxu0 %v1993
    %2110 = vmatprep.subr.mxu0 0.0
    %2111 = vmatpush2.msra.mxu0 %v1992
    %2112 = vmatprep.subr.mxu0 0.0
    %2113 = vmatpush2.msra.mxu0 %v1991
    %2114 = vmatprep.subr.mxu0 0.0
    %2115 = vmatpush2.msra.mxu0 %v1990
    %2116 = vmatprep.subr.mxu0 0.0
    %2117 = vmatpush2.msra.mxu0 %v1989
    %2118 = vmatprep.subr.mxu0 0.0
    %2119 = vmatpush2.msra.mxu0 %v1988
    %2120 = vmatprep.subr.mxu0 0.0
    %2121 = vmatpush2.msra.mxu0 %v1987
    %2122 = vmatprep.subr.mxu0 0.0
    %2123 = vmatpush2.msra.mxu0 %v1986
    %2124 = vmatprep.subr.mxu0 0.0
    %2125 = vmatpush2.msra.mxu0 %v1985
    %2126 = vmatprep.subr.mxu0 0.0
    %2127 = vmatpush2.msra.mxu0 %v1984
    %2128 = vmatprep.subr.mxu0 0.0
    %2129 = vmatpush2.msra.mxu0 %v1983
    %2130 = vmatprep.subr.mxu0 0.0
    %2131 = vmatpush2.msra.mxu0 %v1982
    %2132 = vmatprep.subr.mxu0 0.0
    %2133 = vmatpush2.msra.mxu0 %v1981
    %2134 = vmatprep.subr.mxu0 0.0
    %2135 = vmatpush2.msra.mxu0 %v1980
    %2136 = vmatprep.subr.mxu0 0.0
    %2137 = vmatpush2.msra.mxu0 %v1979
    %2138 = vmatprep.subr.mxu0 0.0
    %2139 = vmatpush2.msra.mxu0 %v1978
    %2140 = vmatprep.mubr.f32.mxu0 %v1922
    %2141 = vmatmul.mubr.f32.gmra.mxu0 %v1744
    %v2142 = vpop.f32.mrf.mxu0
    %v2143 = vadd.f32 %v2068, %v2142
    %v2144 = vpop.f32.mrf.mxu0
    %2145 = vmatprep.mubr.f32.mxu0 %v1927
    %2146 = vmatmul.mubr.f32.gmra.mxu0 %v1749
    %v2147 = vpop.f32.mrf.mxu0
    %v2148 = vadd.f32 %v2073, %v2147
    %v2149 = vpop.f32.mrf.mxu0
    %2150 = vdwg.mxu0
    %v2151 = vadd.f32 %v54, %v2143
    %v2152 = vadd.f32 %v55, %v2148
    %v2153 = vld [vmem:[%s12] sm:$0x1]
    %v2154 = vld [vmem:[%s13] sm:$0x1]
    %v2155 = vsel %vm177, %v2151, 0.0
    %2156 = vadd.xlane.f32.xlu0 %v2155
    %v2157 = vpop.xlane.xlu0 %2156
    %v2158 = vsel %vm177, %v2152, 0.0
    %2159 = vadd.xlane.f32.xlu0 %v2158
    %v2160 = vpop.xlane.xlu0 %2159
    %v2161 = vrcp.pop 32.0
    %v2162 = vmul.f32 %v2157, %v2161
    %v2163 = vmul.f32 %v2160, %v2161
    %v2164 = vsub.f32 %v2151, %v2162
    %v2165 = vsub.f32 %v2152, %v2163
    %v2166 = vmul.f32 %v2164, %v2164
    %v2167 = vmul.f32 %v2165, %v2165
    %v2168 = vsel %vm177, %v2166, 0.0
    %2169 = vadd.xlane.f32.xlu0 %v2168
    %v2170 = vpop.xlane.xlu0 %2169
    %v2171 = vsel %vm177, %v2167, 0.0
    %2172 = vadd.xlane.f32.xlu0 %v2171
    %v2173 = vpop.xlane.xlu0 %2172
    %v2174 = vmul.f32 %v2170, %v2161
    %v2175 = vmul.f32 %v2173, %v2161
    %v2176 = vadd.f32 %v2174, 1e-05
    %v2177 = vadd.f32 %v2175, 1e-05
    %v2178 = vrsqrt.pop %v2176
    %v2179 = vmul.f32 %v2176, %v2178
    %vm2180 = vcmp.eq.f32.partialorder %v2176, inf
    %v2181 = vsel %vm2180, %v2176, %v2179
    %vm2182 = vcmp.eq.f32.partialorder %v2176, 0.0
    %v2183 = vand.u32 %v2176, 2147483648
    %v2184 = vsel %vm2182, %v2183, %v2181
    %v2185 = vrsqrt.pop %v2177
    %v2186 = vmul.f32 %v2177, %v2185
    %vm2187 = vcmp.eq.f32.partialorder %v2177, inf
    %v2188 = vsel %vm2187, %v2177, %v2186
    %vm2189 = vcmp.eq.f32.partialorder %v2177, 0.0
    %v2190 = vand.u32 %v2177, 2147483648
    %v2191 = vsel %vm2189, %v2190, %v2188
    %v2192 = vrcp.pop %v2184
    %v2193 = vmul.f32 %v2164, %v2192
    %v2194 = vrcp.pop %v2191
    %v2195 = vmul.f32 %v2165, %v2194
    %v2197 = vlaneseq
    %v2198 = vshrl.u32 %v2197, 7
    %v2199 = vsub.s32 0, %v2198
    %v2200 = vrot.slane %v2153, %v2199
    %v2202 = vmul.f32 %v2193, %v2200
    %v2203 = vmul.f32 %v2195, %v2200
    %v2205 = vlaneseq
    %v2206 = vshrl.u32 %v2205, 7
    %v2207 = vsub.s32 0, %v2206
    %v2208 = vrot.slane %v2154, %v2207
    %v2210 = vadd.f32 %v2202, %v2208
    %v2211 = vadd.f32 %v2203, %v2208
    %v2212 = vld [vmem:[%s8] sm:$0xff]
    %v2213 = vld [vmem:[%s8 + $0x8] sm:$0xff]
    %v2214 = vld [vmem:[%s8 + $0x10] sm:$0xff]
    %v2215 = vld [vmem:[%s8 + $0x18] sm:$0xff]
    %v2216 = vld [vmem:[%s8 + $0x20] sm:$0xff]
    %v2217 = vld [vmem:[%s8 + $0x28] sm:$0xff]
    %v2218 = vld [vmem:[%s8 + $0x30] sm:$0xff]
    %v2219 = vld [vmem:[%s8 + $0x38] sm:$0xff]
    %v2220 = vld [vmem:[%s8 + $0x40] sm:$0xff]
    %v2221 = vld [vmem:[%s8 + $0x48] sm:$0xff]
    %v2222 = vld [vmem:[%s8 + $0x50] sm:$0xff]
    %v2223 = vld [vmem:[%s8 + $0x58] sm:$0xff]
    %v2224 = vld [vmem:[%s8 + $0x60] sm:$0xff]
    %v2225 = vld [vmem:[%s8 + $0x68] sm:$0xff]
    %v2226 = vld [vmem:[%s8 + $0x70] sm:$0xff]
    %v2227 = vld [vmem:[%s8 + $0x78] sm:$0xff]
    %v2228 = vld [vmem:[%s9] sm:$0xf]
    %v2230 = vlaneseq
    %v2231 = vshrl.u32 %v2230, 7
    %v2232 = vsub.s32 0, %v2231
    %v2233 = vrot.slane %v2228, %v2232
    %v2234 = vlaneseq
    %v2235 = vshrl.u32 %v2234, 7
    %v2236 = vsub.s32 1, %v2235
    %v2237 = vrot.slane %v2228, %v2236
    %v2238 = vlaneseq
    %v2239 = vshrl.u32 %v2238, 7
    %v2240 = vsub.s32 2, %v2239
    %v2241 = vrot.slane %v2228, %v2240
    %v2242 = vlaneseq
    %v2243 = vshrl.u32 %v2242, 7
    %v2244 = vsub.s32 3, %v2243
    %v2245 = vrot.slane %v2228, %v2244
    %v2251 = vsel %vm177, %v2210, 0
    %v2254 = vsel %vm177, %v2211, 0
    %2256 = vmatprep.subr.mxu0 0.0
    %2257 = vmatpush1.msra.mxu0 0.0
    %2258 = vmatprep.subr.mxu0 0.0
    %2259 = vmatpush1.msra.mxu0 0.0
    %2260 = vmatprep.subr.mxu0 0.0
    %2261 = vmatpush1.msra.mxu0 0.0
    %2262 = vmatprep.subr.mxu0 0.0
    %2263 = vmatpush1.msra.mxu0 0.0
    %2264 = vmatprep.subr.mxu0 0.0
    %2265 = vmatpush1.msra.mxu0 0.0
    %2266 = vmatprep.subr.mxu0 0.0
    %2267 = vmatpush1.msra.mxu0 0.0
    %2268 = vmatprep.subr.mxu0 0.0
    %2269 = vmatpush1.msra.mxu0 0.0
    %2270 = vmatprep.subr.mxu0 0.0
    %2271 = vmatpush1.msra.mxu0 0.0
    %2272 = vmatprep.subr.mxu0 0.0
    %2273 = vmatpush1.msra.mxu0 0.0
    %2274 = vmatprep.subr.mxu0 0.0
    %2275 = vmatpush1.msra.mxu0 0.0
    %2276 = vmatprep.subr.mxu0 0.0
    %2277 = vmatpush1.msra.mxu0 0.0
    %2278 = vmatprep.subr.mxu0 0.0
    %2279 = vmatpush1.msra.mxu0 0.0
    %2280 = vmatprep.subr.mxu0 %v2225
    %2281 = vmatpush1.msra.mxu0 %v2224
    %2282 = vmatprep.subr.mxu0 %v2221
    %2283 = vmatpush1.msra.mxu0 %v2220
    %2284 = vmatprep.subr.mxu0 %v2217
    %2285 = vmatpush1.msra.mxu0 %v2216
    %2286 = vmatprep.subr.mxu0 %v2213
    %2287 = vmatpush1.msra.mxu0 %v2212
    %2288 = vmatprep.subr.mxu0 0.0
    %2289 = vmatpush2.msra.mxu0 0.0
    %2290 = vmatprep.subr.mxu0 0.0
    %2291 = vmatpush2.msra.mxu0 0.0
    %2292 = vmatprep.subr.mxu0 0.0
    %2293 = vmatpush2.msra.mxu0 0.0
    %2294 = vmatprep.subr.mxu0 0.0
    %2295 = vmatpush2.msra.mxu0 0.0
    %2296 = vmatprep.subr.mxu0 0.0
    %2297 = vmatpush2.msra.mxu0 0.0
    %2298 = vmatprep.subr.mxu0 0.0
    %2299 = vmatpush2.msra.mxu0 0.0
    %2300 = vmatprep.subr.mxu0 0.0
    %2301 = vmatpush2.msra.mxu0 0.0
    %2302 = vmatprep.subr.mxu0 0.0
    %2303 = vmatpush2.msra.mxu0 0.0
    %2304 = vmatprep.subr.mxu0 0.0
    %2305 = vmatpush2.msra.mxu0 0.0
    %2306 = vmatprep.subr.mxu0 0.0
    %2307 = vmatpush2.msra.mxu0 0.0
    %2308 = vmatprep.subr.mxu0 0.0
    %2309 = vmatpush2.msra.mxu0 0.0
    %2310 = vmatprep.subr.mxu0 0.0
    %2311 = vmatpush2.msra.mxu0 0.0
    %2312 = vmatprep.subr.mxu0 0.0
    %2313 = vmatpush2.msra.mxu0 0.0
    %2314 = vmatprep.subr.mxu0 0.0
    %2315 = vmatpush2.msra.mxu0 0.0
    %2316 = vmatprep.subr.mxu0 0.0
    %2317 = vmatpush2.msra.mxu0 0.0
    %2318 = vmatprep.subr.mxu0 0.0
    %2319 = vmatpush2.msra.mxu0 0.0
    %2320 = vmatprep.mubr.f32.mxu0 0.0
    %2321 = vmatmul.mubr.f32.gmra.mxu0 %v2251
    %v2322 = vpop.f32.mrf.mxu0
    %v2323 = vadd.f32 %v2233, %v2322
    %v2324 = vpop.f32.mrf.mxu0
    %v2325 = vadd.f32 %v2237, %v2324
    %2326 = vmatprep.mubr.f32.mxu0 0.0
    %2327 = vmatmul.mubr.f32.gmra.mxu0 %v2254
    %v2328 = vpop.f32.mrf.mxu0
    %v2329 = vadd.f32 %v2233, %v2328
    %v2330 = vpop.f32.mrf.mxu0
    %v2331 = vadd.f32 %v2237, %v2330
    %2332 = vdwg.mxu0
    %2333 = vmatprep.subr.mxu0 0.0
    %2334 = vmatpush1.msra.mxu0 0.0
    %2335 = vmatprep.subr.mxu0 0.0
    %2336 = vmatpush1.msra.mxu0 0.0
    %2337 = vmatprep.subr.mxu0 0.0
    %2338 = vmatpush1.msra.mxu0 0.0
    %2339 = vmatprep.subr.mxu0 0.0
    %2340 = vmatpush1.msra.mxu0 0.0
    %2341 = vmatprep.subr.mxu0 0.0
    %2342 = vmatpush1.msra.mxu0 0.0
    %2343 = vmatprep.subr.mxu0 0.0
    %2344 = vmatpush1.msra.mxu0 0.0
    %2345 = vmatprep.subr.mxu0 0.0
    %2346 = vmatpush1.msra.mxu0 0.0
    %2347 = vmatprep.subr.mxu0 0.0
    %2348 = vmatpush1.msra.mxu0 0.0
    %2349 = vmatprep.subr.mxu0 0.0
    %2350 = vmatpush1.msra.mxu0 0.0
    %2351 = vmatprep.subr.mxu0 0.0
    %2352 = vmatpush1.msra.mxu0 0.0
    %2353 = vmatprep.subr.mxu0 0.0
    %2354 = vmatpush1.msra.mxu0 0.0
    %2355 = vmatprep.subr.mxu0 0.0
    %2356 = vmatpush1.msra.mxu0 0.0
    %2357 = vmatprep.subr.mxu0 %v2227
    %2358 = vmatpush1.msra.mxu0 %v2226
    %2359 = vmatprep.subr.mxu0 %v2223
    %2360 = vmatpush1.msra.mxu0 %v2222
    %2361 = vmatprep.subr.mxu0 %v2219
    %2362 = vmatpush1.msra.mxu0 %v2218
    %2363 = vmatprep.subr.mxu0 %v2215
    %2364 = vmatpush1.msra.mxu0 %v2214
    %2365 = vmatprep.subr.mxu0 0.0
    %2366 = vmatpush2.msra.mxu0 0.0
    %2367 = vmatprep.subr.mxu0 0.0
    %2368 = vmatpush2.msra.mxu0 0.0
    %2369 = vmatprep.subr.mxu0 0.0
    %2370 = vmatpush2.msra.mxu0 0.0
    %2371 = vmatprep.subr.mxu0 0.0
    %2372 = vmatpush2.msra.mxu0 0.0
    %2373 = vmatprep.subr.mxu0 0.0
    %2374 = vmatpush2.msra.mxu0 0.0
    %2375 = vmatprep.subr.mxu0 0.0
    %2376 = vmatpush2.msra.mxu0 0.0
    %2377 = vmatprep.subr.mxu0 0.0
    %2378 = vmatpush2.msra.mxu0 0.0
    %2379 = vmatprep.subr.mxu0 0.0
    %2380 = vmatpush2.msra.mxu0 0.0
    %2381 = vmatprep.subr.mxu0 0.0
    %2382 = vmatpush2.msra.mxu0 0.0
    %2383 = vmatprep.subr.mxu0 0.0
    %2384 = vmatpush2.msra.mxu0 0.0
    %2385 = vmatprep.subr.mxu0 0.0
    %2386 = vmatpush2.msra.mxu0 0.0
    %2387 = vmatprep.subr.mxu0 0.0
    %2388 = vmatpush2.msra.mxu0 0.0
    %2389 = vmatprep.subr.mxu0 0.0
    %2390 = vmatpush2.msra.mxu0 0.0
    %2391 = vmatprep.subr.mxu0 0.0
    %2392 = vmatpush2.msra.mxu0 0.0
    %2393 = vmatprep.subr.mxu0 0.0
    %2394 = vmatpush2.msra.mxu0 0.0
    %2395 = vmatprep.subr.mxu0 0.0
    %2396 = vmatpush2.msra.mxu0 0.0
    %2397 = vmatprep.mubr.f32.mxu0 0.0
    %2398 = vmatmul.mubr.f32.gmra.mxu0 %v2251
    %v2399 = vpop.f32.mrf.mxu0
    %v2400 = vadd.f32 %v2241, %v2399
    %v2401 = vpop.f32.mrf.mxu0
    %v2402 = vadd.f32 %v2245, %v2401
    %2403 = vmatprep.mubr.f32.mxu0 0.0
    %2404 = vmatmul.mubr.f32.gmra.mxu0 %v2254
    %v2405 = vpop.f32.mrf.mxu0
    %v2406 = vadd.f32 %v2241, %v2405
    %v2407 = vpop.f32.mrf.mxu0
    %v2408 = vadd.f32 %v2245, %v2407
    %2409 = vdwg.mxu0
    %v2410 = vmul.f32 %v2323, 0.5
    %v2411 = vmul.f32 %v2325, 0.5
    %v2412 = vmul.f32 %v2400, 0.5
    %v2413 = vmul.f32 %v2402, 0.5
    %v2414 = vmul.f32 %v2329, 0.5
    %v2415 = vmul.f32 %v2331, 0.5
    %v2416 = vmul.f32 %v2406, 0.5
    %v2417 = vmul.f32 %v2408, 0.5
    %v2418 = vmul.f32 %v2323, 0.70710677
    %v2419 = vmul.f32 %v2325, 0.70710677
    %v2420 = vmul.f32 %v2400, 0.70710677
    %v2421 = vmul.f32 %v2402, 0.70710677
    %v2422 = vmul.f32 %v2329, 0.70710677
    %v2423 = vmul.f32 %v2331, 0.70710677
    %v2424 = vmul.f32 %v2406, 0.70710677
    %v2425 = vmul.f32 %v2408, 0.70710677
    %v2426 = vand.u32 2147483647, %v2418
    %v2427 = vand.u32 2147483647, %v2419
    %v2428 = vand.u32 2147483647, %v2420
    %v2429 = vand.u32 2147483647, %v2421
    %v2430 = vand.u32 2147483647, %v2422
    %v2431 = vand.u32 2147483647, %v2423
    %v2432 = vand.u32 2147483647, %v2424
    %v2433 = vand.u32 2147483647, %v2425
    %v2434 = vmul.f32 %v2426, 0.3275911
    %v2435 = vmul.f32 %v2427, 0.3275911
    %v2436 = vmul.f32 %v2428, 0.3275911
    %v2437 = vmul.f32 %v2429, 0.3275911
    %v2438 = vmul.f32 %v2430, 0.3275911
    %v2439 = vmul.f32 %v2431, 0.3275911
    %v2440 = vmul.f32 %v2432, 0.3275911
    %v2441 = vmul.f32 %v2433, 0.3275911
    %v2442 = vadd.f32 %v2434, 1.0
    %v2443 = vadd.f32 %v2435, 1.0
    %v2444 = vadd.f32 %v2436, 1.0
    %v2445 = vadd.f32 %v2437, 1.0
    %v2446 = vadd.f32 %v2438, 1.0
    %v2447 = vadd.f32 %v2439, 1.0
    %v2448 = vadd.f32 %v2440, 1.0
    %v2449 = vadd.f32 %v2441, 1.0
    %v2450 = vrcp.pop %v2442
    %v2451 = vmul.f32 1.0, %v2450
    %v2452 = vrcp.pop %v2443
    %v2453 = vmul.f32 1.0, %v2452
    %v2454 = vrcp.pop %v2444
    %v2455 = vmul.f32 1.0, %v2454
    %v2456 = vrcp.pop %v2445
    %v2457 = vmul.f32 1.0, %v2456
    %v2458 = vrcp.pop %v2446
    %v2459 = vmul.f32 1.0, %v2458
    %v2460 = vrcp.pop %v2447
    %v2461 = vmul.f32 1.0, %v2460
    %v2462 = vrcp.pop %v2448
    %v2463 = vmul.f32 1.0, %v2462
    %v2464 = vrcp.pop %v2449
    %v2465 = vmul.f32 1.0, %v2464
    %v2466 = vmul.f32 %v2451, 1.0614054
    %v2467 = vmul.f32 %v2453, 1.0614054
    %v2468 = vmul.f32 %v2455, 1.0614054
    %v2469 = vmul.f32 %v2457, 1.0614054
    %v2470 = vmul.f32 %v2459, 1.0614054
    %v2471 = vmul.f32 %v2461, 1.0614054
    %v2472 = vmul.f32 %v2463, 1.0614054
    %v2473 = vmul.f32 %v2465, 1.0614054
    %v2474 = vadd.f32 %v2466, -1.4531521
    %v2475 = vadd.f32 %v2467, -1.4531521
    %v2476 = vadd.f32 %v2468, -1.4531521
    %v2477 = vadd.f32 %v2469, -1.4531521
    %v2478 = vadd.f32 %v2470, -1.4531521
    %v2479 = vadd.f32 %v2471, -1.4531521
    %v2480 = vadd.f32 %v2472, -1.4531521
    %v2481 = vadd.f32 %v2473, -1.4531521
    %v2482 = vmul.f32 %v2451, %v2474
    %v2483 = vmul.f32 %v2453, %v2475
    %v2484 = vmul.f32 %v2455, %v2476
    %v2485 = vmul.f32 %v2457, %v2477
    %v2486 = vmul.f32 %v2459, %v2478
    %v2487 = vmul.f32 %v2461, %v2479
    %v2488 = vmul.f32 %v2463, %v2480
    %v2489 = vmul.f32 %v2465, %v2481
    %v2490 = vadd.f32 %v2482, 1.4214138
    %v2491 = vadd.f32 %v2483, 1.4214138
    %v2492 = vadd.f32 %v2484, 1.4214138
    %v2493 = vadd.f32 %v2485, 1.4214138
    %v2494 = vadd.f32 %v2486, 1.4214138
    %v2495 = vadd.f32 %v2487, 1.4214138
    %v2496 = vadd.f32 %v2488, 1.4214138
    %v2497 = vadd.f32 %v2489, 1.4214138
    %v2498 = vmul.f32 %v2451, %v2490
    %v2499 = vmul.f32 %v2453, %v2491
    %v2500 = vmul.f32 %v2455, %v2492
    %v2501 = vmul.f32 %v2457, %v2493
    %v2502 = vmul.f32 %v2459, %v2494
    %v2503 = vmul.f32 %v2461, %v2495
    %v2504 = vmul.f32 %v2463, %v2496
    %v2505 = vmul.f32 %v2465, %v2497
    %v2506 = vadd.f32 %v2498, -0.28449672
    %v2507 = vadd.f32 %v2499, -0.28449672
    %v2508 = vadd.f32 %v2500, -0.28449672
    %v2509 = vadd.f32 %v2501, -0.28449672
    %v2510 = vadd.f32 %v2502, -0.28449672
    %v2511 = vadd.f32 %v2503, -0.28449672
    %v2512 = vadd.f32 %v2504, -0.28449672
    %v2513 = vadd.f32 %v2505, -0.28449672
    %v2514 = vmul.f32 %v2451, %v2506
    %v2515 = vmul.f32 %v2453, %v2507
    %v2516 = vmul.f32 %v2455, %v2508
    %v2517 = vmul.f32 %v2457, %v2509
    %v2518 = vmul.f32 %v2459, %v2510
    %v2519 = vmul.f32 %v2461, %v2511
    %v2520 = vmul.f32 %v2463, %v2512
    %v2521 = vmul.f32 %v2465, %v2513
    %v2522 = vadd.f32 %v2514, 0.2548296
    %v2523 = vadd.f32 %v2515, 0.2548296
    %v2524 = vadd.f32 %v2516, 0.2548296
    %v2525 = vadd.f32 %v2517, 0.2548296
    %v2526 = vadd.f32 %v2518, 0.2548296
    %v2527 = vadd.f32 %v2519, 0.2548296
    %v2528 = vadd.f32 %v2520, 0.2548296
    %v2529 = vadd.f32 %v2521, 0.2548296
    %v2530 = vmul.f32 %v2451, %v2522
    %v2531 = vmul.f32 %v2453, %v2523
    %v2532 = vmul.f32 %v2455, %v2524
    %v2533 = vmul.f32 %v2457, %v2525
    %v2534 = vmul.f32 %v2459, %v2526
    %v2535 = vmul.f32 %v2461, %v2527
    %v2536 = vmul.f32 %v2463, %v2528
    %v2537 = vmul.f32 %v2465, %v2529
    %v2538 = vsub.f32 0.0, %v2426
    %v2539 = vsub.f32 0.0, %v2427
    %v2540 = vsub.f32 0.0, %v2428
    %v2541 = vsub.f32 0.0, %v2429
    %v2542 = vsub.f32 0.0, %v2430
    %v2543 = vsub.f32 0.0, %v2431
    %v2544 = vsub.f32 0.0, %v2432
    %v2545 = vsub.f32 0.0, %v2433
    %v2546 = vmul.f32 %v2538, %v2426
    %v2547 = vmul.f32 %v2539, %v2427
    %v2548 = vmul.f32 %v2540, %v2428
    %v2549 = vmul.f32 %v2541, %v2429
    %v2550 = vmul.f32 %v2542, %v2430
    %v2551 = vmul.f32 %v2543, %v2431
    %v2552 = vmul.f32 %v2544, %v2432
    %v2553 = vmul.f32 %v2545, %v2433
    %v2554 = vmul.f32 %v2546, 1.442695
    %v2555 = vpow.pop %v2554
    %v2556 = vmul.f32 %v2547, 1.442695
    %v2557 = vpow.pop %v2556
    %v2558 = vmul.f32 %v2548, 1.442695
    %v2559 = vpow.pop %v2558
    %v2560 = vmul.f32 %v2549, 1.442695
    %v2561 = vpow.pop %v2560
    %v2562 = vmul.f32 %v2550, 1.442695
    %v2563 = vpow.pop %v2562
    %v2564 = vmul.f32 %v2551, 1.442695
    %v2565 = vpow.pop %v2564
    %v2566 = vmul.f32 %v2552, 1.442695
    %v2567 = vpow.pop %v2566
    %v2568 = vmul.f32 %v2553, 1.442695
    %v2569 = vpow.pop %v2568
    %v2570 = vmul.f32 %v2530, %v2555
    %v2571 = vmul.f32 %v2531, %v2557
    %v2572 = vmul.f32 %v2532, %v2559
    %v2573 = vmul.f32 %v2533, %v2561
    %v2574 = vmul.f32 %v2534, %v2563
    %v2575 = vmul.f32 %v2535, %v2565
    %v2576 = vmul.f32 %v2536, %v2567
    %v2577 = vmul.f32 %v2537, %v2569
    %v2578 = vsub.f32 1.0, %v2570
    %v2579 = vsub.f32 1.0, %v2571
    %v2580 = vsub.f32 1.0, %v2572
    %v2581 = vsub.f32 1.0, %v2573
    %v2582 = vsub.f32 1.0, %v2574
    %v2583 = vsub.f32 1.0, %v2575
    %v2584 = vsub.f32 1.0, %v2576
    %v2585 = vsub.f32 1.0, %v2577
    %vm2586 = vcmp.ge.f32.partialorder %v2418, 0.0
    %vm2587 = vcmp.ge.f32.partialorder %v2419, 0.0
    %vm2588 = vcmp.ge.f32.partialorder %v2420, 0.0
    %vm2589 = vcmp.ge.f32.partialorder %v2421, 0.0
    %vm2590 = vcmp.ge.f32.partialorder %v2422, 0.0
    %vm2591 = vcmp.ge.f32.partialorder %v2423, 0.0
    %vm2592 = vcmp.ge.f32.partialorder %v2424, 0.0
    %vm2593 = vcmp.ge.f32.partialorder %v2425, 0.0
    %v2594 = vsub.f32 0.0, %v2578
    %v2595 = vsub.f32 0.0, %v2579
    %v2596 = vsub.f32 0.0, %v2580
    %v2597 = vsub.f32 0.0, %v2581
    %v2598 = vsub.f32 0.0, %v2582
    %v2599 = vsub.f32 0.0, %v2583
    %v2600 = vsub.f32 0.0, %v2584
    %v2601 = vsub.f32 0.0, %v2585
    %v2602 = vsel %vm2586, %v2578, %v2594
    %v2603 = vsel %vm2587, %v2579, %v2595
    %v2604 = vsel %vm2588, %v2580, %v2596
    %v2605 = vsel %vm2589, %v2581, %v2597
    %v2606 = vsel %vm2590, %v2582, %v2598
    %v2607 = vsel %vm2591, %v2583, %v2599
    %v2608 = vsel %vm2592, %v2584, %v2600
    %v2609 = vsel %vm2593, %v2585, %v2601
    %v2610 = vadd.f32 %v2602, 1.0
    %v2611 = vadd.f32 %v2603, 1.0
    %v2612 = vadd.f32 %v2604, 1.0
    %v2613 = vadd.f32 %v2605, 1.0
    %v2614 = vadd.f32 %v2606, 1.0
    %v2615 = vadd.f32 %v2607, 1.0
    %v2616 = vadd.f32 %v2608, 1.0
    %v2617 = vadd.f32 %v2609, 1.0
    %v2618 = vmul.f32 %v2410, %v2610
    %v2619 = vmul.f32 %v2411, %v2611
    %v2620 = vmul.f32 %v2412, %v2612
    %v2621 = vmul.f32 %v2413, %v2613
    %v2622 = vmul.f32 %v2414, %v2614
    %v2623 = vmul.f32 %v2415, %v2615
    %v2624 = vmul.f32 %v2416, %v2616
    %v2625 = vmul.f32 %v2417, %v2617
    %v2626 = vld [vmem:[%s10] sm:$0xff]
    %v2627 = vld [vmem:[%s10 + $0x8] sm:$0xff]
    %v2628 = vld [vmem:[%s10 + $0x10] sm:$0xff]
    %v2629 = vld [vmem:[%s10 + $0x18] sm:$0xff]
    %v2630 = vld [vmem:[%s10 + $0x20] sm:$0xff]
    %v2631 = vld [vmem:[%s10 + $0x28] sm:$0xff]
    %v2632 = vld [vmem:[%s10 + $0x30] sm:$0xff]
    %v2633 = vld [vmem:[%s10 + $0x38] sm:$0xff]
    %v2634 = vld [vmem:[%s10 + $0x40] sm:$0xff]
    %v2635 = vld [vmem:[%s10 + $0x48] sm:$0xff]
    %v2636 = vld [vmem:[%s10 + $0x50] sm:$0xff]
    %v2637 = vld [vmem:[%s10 + $0x58] sm:$0xff]
    %v2638 = vld [vmem:[%s10 + $0x60] sm:$0xff]
    %v2639 = vld [vmem:[%s10 + $0x68] sm:$0xff]
    %v2640 = vld [vmem:[%s10 + $0x70] sm:$0xff]
    %v2641 = vld [vmem:[%s10 + $0x78] sm:$0xff]
    %v2642 = vld [vmem:[%s10 + $0x80] sm:$0xff]
    %v2643 = vld [vmem:[%s10 + $0x88] sm:$0xff]
    %v2644 = vld [vmem:[%s10 + $0x90] sm:$0xff]
    %v2645 = vld [vmem:[%s10 + $0x98] sm:$0xff]
    %v2646 = vld [vmem:[%s10 + $0xa0] sm:$0xff]
    %v2647 = vld [vmem:[%s10 + $0xa8] sm:$0xff]
    %v2648 = vld [vmem:[%s10 + $0xb0] sm:$0xff]
    %v2649 = vld [vmem:[%s10 + $0xb8] sm:$0xff]
    %v2650 = vld [vmem:[%s10 + $0xc0] sm:$0xff]
    %v2651 = vld [vmem:[%s10 + $0xc8] sm:$0xff]
    %v2652 = vld [vmem:[%s10 + $0xd0] sm:$0xff]
    %v2653 = vld [vmem:[%s10 + $0xd8] sm:$0xff]
    %v2654 = vld [vmem:[%s10 + $0xe0] sm:$0xff]
    %v2655 = vld [vmem:[%s10 + $0xe8] sm:$0xff]
    %v2656 = vld [vmem:[%s10 + $0xf0] sm:$0xff]
    %v2657 = vld [vmem:[%s10 + $0xf8] sm:$0xff]
    %v2658 = vld [vmem:[%s10 + $0x100] sm:$0xff]
    %v2659 = vld [vmem:[%s10 + $0x108] sm:$0xff]
    %v2660 = vld [vmem:[%s10 + $0x110] sm:$0xff]
    %v2661 = vld [vmem:[%s10 + $0x118] sm:$0xff]
    %v2662 = vld [vmem:[%s10 + $0x120] sm:$0xff]
    %v2663 = vld [vmem:[%s10 + $0x128] sm:$0xff]
    %v2664 = vld [vmem:[%s10 + $0x130] sm:$0xff]
    %v2665 = vld [vmem:[%s10 + $0x138] sm:$0xff]
    %v2666 = vld [vmem:[%s10 + $0x140] sm:$0xff]
    %v2667 = vld [vmem:[%s10 + $0x148] sm:$0xff]
    %v2668 = vld [vmem:[%s10 + $0x150] sm:$0xff]
    %v2669 = vld [vmem:[%s10 + $0x158] sm:$0xff]
    %v2670 = vld [vmem:[%s10 + $0x160] sm:$0xff]
    %v2671 = vld [vmem:[%s10 + $0x168] sm:$0xff]
    %v2672 = vld [vmem:[%s10 + $0x170] sm:$0xff]
    %v2673 = vld [vmem:[%s10 + $0x178] sm:$0xff]
    %v2674 = vld [vmem:[%s10 + $0x180] sm:$0xff]
    %v2675 = vld [vmem:[%s10 + $0x188] sm:$0xff]
    %v2676 = vld [vmem:[%s10 + $0x190] sm:$0xff]
    %v2677 = vld [vmem:[%s10 + $0x198] sm:$0xff]
    %v2678 = vld [vmem:[%s10 + $0x1a0] sm:$0xff]
    %v2679 = vld [vmem:[%s10 + $0x1a8] sm:$0xff]
    %v2680 = vld [vmem:[%s10 + $0x1b0] sm:$0xff]
    %v2681 = vld [vmem:[%s10 + $0x1b8] sm:$0xff]
    %v2682 = vld [vmem:[%s10 + $0x1c0] sm:$0xff]
    %v2683 = vld [vmem:[%s10 + $0x1c8] sm:$0xff]
    %v2684 = vld [vmem:[%s10 + $0x1d0] sm:$0xff]
    %v2685 = vld [vmem:[%s10 + $0x1d8] sm:$0xff]
    %v2686 = vld [vmem:[%s10 + $0x1e0] sm:$0xff]
    %v2687 = vld [vmem:[%s10 + $0x1e8] sm:$0xff]
    %v2688 = vld [vmem:[%s10 + $0x1f0] sm:$0xff]
    %v2689 = vld [vmem:[%s10 + $0x1f8] sm:$0xff]
    %v2690 = vld [vmem:[%s11] sm:$0x1]
    %v2692 = vlaneseq
    %v2693 = vshrl.u32 %v2692, 7
    %v2694 = vsub.s32 0, %v2693
    %v2695 = vrot.slane %v2690, %v2694
    %2697 = vmatprep.subr.mxu0 0.0
    %2698 = vmatpush1.msra.mxu0 %v2641
    %2699 = vmatprep.subr.mxu0 0.0
    %2700 = vmatpush1.msra.mxu0 %v2640
    %2701 = vmatprep.subr.mxu0 0.0
    %2702 = vmatpush1.msra.mxu0 %v2639
    %2703 = vmatprep.subr.mxu0 0.0
    %2704 = vmatpush1.msra.mxu0 %v2638
    %2705 = vmatprep.subr.mxu0 0.0
    %2706 = vmatpush1.msra.mxu0 %v2637
    %2707 = vmatprep.subr.mxu0 0.0
    %2708 = vmatpush1.msra.mxu0 %v2636
    %2709 = vmatprep.subr.mxu0 0.0
    %2710 = vmatpush1.msra.mxu0 %v2635
    %2711 = vmatprep.subr.mxu0 0.0
    %2712 = vmatpush1.msra.mxu0 %v2634
    %2713 = vmatprep.subr.mxu0 0.0
    %2714 = vmatpush1.msra.mxu0 %v2633
    %2715 = vmatprep.subr.mxu0 0.0
    %2716 = vmatpush1.msra.mxu0 %v2632
    %2717 = vmatprep.subr.mxu0 0.0
    %2718 = vmatpush1.msra.mxu0 %v2631
    %2719 = vmatprep.subr.mxu0 0.0
    %2720 = vmatpush1.msra.mxu0 %v2630
    %2721 = vmatprep.subr.mxu0 0.0
    %2722 = vmatpush1.msra.mxu0 %v2629
    %2723 = vmatprep.subr.mxu0 0.0
    %2724 = vmatpush1.msra.mxu0 %v2628
    %2725 = vmatprep.subr.mxu0 0.0
    %2726 = vmatpush1.msra.mxu0 %v2627
    %2727 = vmatprep.subr.mxu0 0.0
    %2728 = vmatpush1.msra.mxu0 %v2626
    %2729 = vmatprep.subr.mxu0 0.0
    %2730 = vmatpush2.msra.mxu0 %v2657
    %2731 = vmatprep.subr.mxu0 0.0
    %2732 = vmatpush2.msra.mxu0 %v2656
    %2733 = vmatprep.subr.mxu0 0.0
    %2734 = vmatpush2.msra.mxu0 %v2655
    %2735 = vmatprep.subr.mxu0 0.0
    %2736 = vmatpush2.msra.mxu0 %v2654
    %2737 = vmatprep.subr.mxu0 0.0
    %2738 = vmatpush2.msra.mxu0 %v2653
    %2739 = vmatprep.subr.mxu0 0.0
    %2740 = vmatpush2.msra.mxu0 %v2652
    %2741 = vmatprep.subr.mxu0 0.0
    %2742 = vmatpush2.msra.mxu0 %v2651
    %2743 = vmatprep.subr.mxu0 0.0
    %2744 = vmatpush2.msra.mxu0 %v2650
    %2745 = vmatprep.subr.mxu0 0.0
    %2746 = vmatpush2.msra.mxu0 %v2649
    %2747 = vmatprep.subr.mxu0 0.0
    %2748 = vmatpush2.msra.mxu0 %v2648
    %2749 = vmatprep.subr.mxu0 0.0
    %2750 = vmatpush2.msra.mxu0 %v2647
    %2751 = vmatprep.subr.mxu0 0.0
    %2752 = vmatpush2.msra.mxu0 %v2646
    %2753 = vmatprep.subr.mxu0 0.0
    %2754 = vmatpush2.msra.mxu0 %v2645
    %2755 = vmatprep.subr.mxu0 0.0
    %2756 = vmatpush2.msra.mxu0 %v2644
    %2757 = vmatprep.subr.mxu0 0.0
    %2758 = vmatpush2.msra.mxu0 %v2643
    %2759 = vmatprep.subr.mxu0 0.0
    %2760 = vmatpush2.msra.mxu0 %v2642
    %2761 = vmatprep.mubr.f32.mxu0 %v2619
    %2762 = vmatmul.mubr.f32.gmra.mxu0 %v2618
    %v2763 = vpop.f32.mrf.mxu0
    %v2764 = vadd.f32 %v2695, %v2763
    %v2765 = vpop.f32.mrf.mxu0
    %2766 = vmatprep.mubr.f32.mxu0 %v2623
    %2767 = vmatmul.mubr.f32.gmra.mxu0 %v2622
    %v2768 = vpop.f32.mrf.mxu0
    %v2769 = vadd.f32 %v2695, %v2768
    %v2770 = vpop.f32.mrf.mxu0
    %2771 = vdwg.mxu0
    %2772 = vmatprep.subr.mxu0 0.0
    %2773 = vmatpush1.msra.mxu0 %v2673
    %2774 = vmatprep.subr.mxu0 0.0
    %2775 = vmatpush1.msra.mxu0 %v2672
    %2776 = vmatprep.subr.mxu0 0.0
    %2777 = vmatpush1.msra.mxu0 %v2671
    %2778 = vmatprep.subr.mxu0 0.0
    %2779 = vmatpush1.msra.mxu0 %v2670
    %2780 = vmatprep.subr.mxu0 0.0
    %2781 = vmatpush1.msra.mxu0 %v2669
    %2782 = vmatprep.subr.mxu0 0.0
    %2783 = vmatpush1.msra.mxu0 %v2668
    %2784 = vmatprep.subr.mxu0 0.0
    %2785 = vmatpush1.msra.mxu0 %v2667
    %2786 = vmatprep.subr.mxu0 0.0
    %2787 = vmatpush1.msra.mxu0 %v2666
    %2788 = vmatprep.subr.mxu0 0.0
    %2789 = vmatpush1.msra.mxu0 %v2665
    %2790 = vmatprep.subr.mxu0 0.0
    %2791 = vmatpush1.msra.mxu0 %v2664
    %2792 = vmatprep.subr.mxu0 0.0
    %2793 = vmatpush1.msra.mxu0 %v2663
    %2794 = vmatprep.subr.mxu0 0.0
    %2795 = vmatpush1.msra.mxu0 %v2662
    %2796 = vmatprep.subr.mxu0 0.0
    %2797 = vmatpush1.msra.mxu0 %v2661
    %2798 = vmatprep.subr.mxu0 0.0
    %2799 = vmatpush1.msra.mxu0 %v2660
    %2800 = vmatprep.subr.mxu0 0.0
    %2801 = vmatpush1.msra.mxu0 %v2659
    %2802 = vmatprep.subr.mxu0 0.0
    %2803 = vmatpush1.msra.mxu0 %v2658
    %2804 = vmatprep.subr.mxu0 0.0
    %2805 = vmatpush2.msra.mxu0 %v2689
    %2806 = vmatprep.subr.mxu0 0.0
    %2807 = vmatpush2.msra.mxu0 %v2688
    %2808 = vmatprep.subr.mxu0 0.0
    %2809 = vmatpush2.msra.mxu0 %v2687
    %2810 = vmatprep.subr.mxu0 0.0
    %2811 = vmatpush2.msra.mxu0 %v2686
    %2812 = vmatprep.subr.mxu0 0.0
    %2813 = vmatpush2.msra.mxu0 %v2685
    %2814 = vmatprep.subr.mxu0 0.0
    %2815 = vmatpush2.msra.mxu0 %v2684
    %2816 = vmatprep.subr.mxu0 0.0
    %2817 = vmatpush2.msra.mxu0 %v2683
    %2818 = vmatprep.subr.mxu0 0.0
    %2819 = vmatpush2.msra.mxu0 %v2682
    %2820 = vmatprep.subr.mxu0 0.0
    %2821 = vmatpush2.msra.mxu0 %v2681
    %2822 = vmatprep.subr.mxu0 0.0
    %2823 = vmatpush2.msra.mxu0 %v2680
    %2824 = vmatprep.subr.mxu0 0.0
    %2825 = vmatpush2.msra.mxu0 %v2679
    %2826 = vmatprep.subr.mxu0 0.0
    %2827 = vmatpush2.msra.mxu0 %v2678
    %2828 = vmatprep.subr.mxu0 0.0
    %2829 = vmatpush2.msra.mxu0 %v2677
    %2830 = vmatprep.subr.mxu0 0.0
    %2831 = vmatpush2.msra.mxu0 %v2676
    %2832 = vmatprep.subr.mxu0 0.0
    %2833 = vmatpush2.msra.mxu0 %v2675
    %2834 = vmatprep.subr.mxu0 0.0
    %2835 = vmatpush2.msra.mxu0 %v2674
    %2836 = vmatprep.mubr.f32.mxu0 %v2621
    %2837 = vmatmul.mubr.f32.gmra.mxu0 %v2620
    %v2838 = vpop.f32.mrf.mxu0
    %v2839 = vadd.f32 %v2764, %v2838
    %v2840 = vpop.f32.mrf.mxu0
    %2841 = vmatprep.mubr.f32.mxu0 %v2625
    %2842 = vmatmul.mubr.f32.gmra.mxu0 %v2624
    %v2843 = vpop.f32.mrf.mxu0
    %v2844 = vadd.f32 %v2769, %v2843
    %v2845 = vpop.f32.mrf.mxu0
    %2846 = vdwg.mxu0
    %v2847 = vadd.f32 %v2210, %v2839
    %v2848 = vadd.f32 %v2211, %v2844
    %v2849 = vld [vmem:[%s14] sm:$0x1]
    %v2850 = vld [vmem:[%s15] sm:$0x1]
    %v2851 = vsel %vm177, %v2847, 0.0
    %2852 = vadd.xlane.f32.xlu0 %v2851
    %v2853 = vpop.xlane.xlu0 %2852
    %v2854 = vsel %vm177, %v2848, 0.0
    %2855 = vadd.xlane.f32.xlu0 %v2854
    %v2856 = vpop.xlane.xlu0 %2855
    %v2857 = vmul.f32 %v2853, %v2161
    %v2858 = vmul.f32 %v2856, %v2161
    %v2859 = vsub.f32 %v2847, %v2857
    %v2860 = vsub.f32 %v2848, %v2858
    %v2861 = vmul.f32 %v2859, %v2859
    %v2862 = vmul.f32 %v2860, %v2860
    %v2863 = vsel %vm177, %v2861, 0.0
    %2864 = vadd.xlane.f32.xlu0 %v2863
    %v2865 = vpop.xlane.xlu0 %2864
    %v2866 = vsel %vm177, %v2862, 0.0
    %2867 = vadd.xlane.f32.xlu0 %v2866
    %v2868 = vpop.xlane.xlu0 %2867
    %v2869 = vmul.f32 %v2865, %v2161
    %v2870 = vmul.f32 %v2868, %v2161
    %v2871 = vadd.f32 %v2869, 1e-05
    %v2872 = vadd.f32 %v2870, 1e-05
    %v2873 = vrsqrt.pop %v2871
    %v2874 = vmul.f32 %v2871, %v2873
    %vm2875 = vcmp.eq.f32.partialorder %v2871, inf
    %v2876 = vsel %vm2875, %v2871, %v2874
    %vm2877 = vcmp.eq.f32.partialorder %v2871, 0.0
    %v2878 = vand.u32 %v2871, 2147483648
    %v2879 = vsel %vm2877, %v2878, %v2876
    %v2880 = vrsqrt.pop %v2872
    %v2881 = vmul.f32 %v2872, %v2880
    %vm2882 = vcmp.eq.f32.partialorder %v2872, inf
    %v2883 = vsel %vm2882, %v2872, %v2881
    %vm2884 = vcmp.eq.f32.partialorder %v2872, 0.0
    %v2885 = vand.u32 %v2872, 2147483648
    %v2886 = vsel %vm2884, %v2885, %v2883
    %v2887 = vrcp.pop %v2879
    %v2888 = vmul.f32 %v2859, %v2887
    %v2889 = vrcp.pop %v2886
    %v2890 = vmul.f32 %v2860, %v2889
    %v2892 = vlaneseq
    %v2893 = vshrl.u32 %v2892, 7
    %v2894 = vsub.s32 0, %v2893
    %v2895 = vrot.slane %v2849, %v2894
    %v2897 = vmul.f32 %v2888, %v2895
    %v2898 = vmul.f32 %v2890, %v2895
    %v2900 = vlaneseq
    %v2901 = vshrl.u32 %v2900, 7
    %v2902 = vsub.s32 0, %v2901
    %v2903 = vrot.slane %v2850, %v2902
    %v2905 = vadd.f32 %v2897, %v2903
    %v2906 = vadd.f32 %v2898, %v2903
    %2907 = vst.msk [vmem:[#allocation2] sm:$0xff] %vm177, %v2905
    %2908 = vst.msk [vmem:[#allocation2 + $0x8] sm:$0xff] %vm177, %v2906
    // Predicated region
    $region66: #{tpu_custom_call.1} parent=1 // pred_check
      _
    $region67: #{tpu_custom_call.1} parent=1 // pred_check_branch
      %2910 = sbr.rel (0) target = $region69
    $region68: #{tpu_custom_call.1} parent=1 // pred_region
      %s2912 = ssub.s32 256, 256
      %2913 = vsyncadd [#allocation3], %s2912
      %s2914 = sshll.u32 [#allocation2], 4
      %s2915 = int_to_ptr.vmem [resolvable:$true] %s2914
      %2920 = dma.vmem_to_hbm [thread:$0]  %s2915, 256, %s16, [#allocation3], 128, 128, 8
    $region69: #{tpu_custom_call.1} parent=1 // pred_fallthru
      _
    // Predicated region
    $region70: #{tpu_custom_call.1} parent=1 // pred_check
      _
    $region71: #{tpu_custom_call.1} parent=1 // pred_check_branch
      %2922 = sbr.rel (0) target = $region73
    $region72: #{tpu_custom_call.1} parent=1 // pred_region
      %2923 = dma.done [#allocation3], 256
    $region73: #{tpu_custom_call.1} parent=1 // pred_fallthru
      _
    %2924 = vsyncpa [#allocation3], 1

</llo_original>
